<compile_context>
chip_gen: v7x
topology: tpu7x:2x2x1
jax: 0.10.0
libtpu: 0.0.40
codegen_flags: <defaults>
</compile_context>

<pallas_src>
import functools

import jax
import jax.numpy as jnp
from jax.experimental import pallas as pl
from jax.experimental.pallas import tpu as pltpu


# ----------------------------------------------------------------------------
# Pallas kernels
# ----------------------------------------------------------------------------

def _linear_kernel(x_ref, w_ref, b_ref, o_ref, *, relu):
    # y = x @ w + b  (optionally ReLU).  Whole tiles live in VMEM; matmul on MXU.
    y = jnp.dot(x_ref[...], w_ref[...], preferred_element_type=jnp.float32)
    y = y + b_ref[...]
    if relu:
        y = jnp.maximum(y, 0.0)
    o_ref[...] = y.astype(o_ref.dtype)


def linear_pallas(x, w, b, relu=False):
    """x: (M, K), w: (K, N), b: (N,) -> (M, N) float32.  bf16 weights => x cast bf16."""
    if w.dtype == jnp.bfloat16 and x.dtype != jnp.bfloat16:
        x = x.astype(jnp.bfloat16)
    M, K = x.shape
    N = w.shape[1]
    # Shard M across the grid for the big im2col GEMMs (uses both v7x TensorCores).
    if M >= 256 and M % 16 == 0:
        gm, tm = 2, M // 2
    else:
        gm, tm = 1, M
    cost = pl.CostEstimate(
        flops=2 * M * K * N,
        transcendentals=0,
        bytes_accessed=(x.size * x.dtype.itemsize + w.size * w.dtype.itemsize
                        + b.size * 4 + M * N * 4))
    return pl.pallas_call(
        functools.partial(_linear_kernel, relu=relu),
        out_shape=jax.ShapeDtypeStruct((M, N), jnp.float32),
        grid=(gm,),
        in_specs=[
            pl.BlockSpec((tm, K), lambda i: (i, 0)),
            pl.BlockSpec((K, N), lambda i: (0, 0)),
            pl.BlockSpec((1, N), lambda i: (0, 0)),
        ],
        out_specs=pl.BlockSpec((tm, N), lambda i: (i, 0)),
        compiler_params=pltpu.CompilerParams(
            dimension_semantics=("parallel",)),
        cost_estimate=cost,
    )(x, w, b.reshape(1, N))


def _fc_gates_kernel(x_ref, lar_ref, fcw_ref, fcb_ref, wfc_ref, wlar_ref, b_ref,
                     o_ref):
    # gates_x = [relu(x @ fc_w + fc_b), last_action_reward] @ W_ih + (b_ih + b_hh),
    # hoisted out of the LSTM recurrence as one batched GEMM (W_ih split in two so no
    # concat / pad glue is needed between kernels).
    fc = jnp.dot(x_ref[...], fcw_ref[...], preferred_element_type=jnp.float32)
    fc = jnp.maximum(fc + fcb_ref[...], 0.0)
    gx = jnp.dot(fc.astype(wfc_ref.dtype), wfc_ref[...],
                 preferred_element_type=jnp.float32)
    gx = gx + jnp.dot(lar_ref[...], wlar_ref[...],
                      preferred_element_type=jnp.float32)
    o_ref[...] = gx + b_ref[...]


def fc_lstm_gates_pallas(x_flat, lar, fc_w, fc_b, wih_fc, wih_lar, lstm_b):
    """x_flat: (T, 2592) conv features (NHWC flatten), lar: (T, A+1) -> (T, 4H)."""
    T, K = x_flat.shape
    A1 = lar.shape[1]
    Hf = fc_w.shape[1]
    G = wih_fc.shape[1]
    x_flat = x_flat.astype(fc_w.dtype)
    lar = lar.astype(wih_lar.dtype)
    return pl.pallas_call(
        _fc_gates_kernel,
        out_shape=jax.ShapeDtypeStruct((T, G), jnp.float32),
        grid=(1,),
        in_specs=[
            pl.BlockSpec((T, K), lambda i: (0, 0)),
            pl.BlockSpec((T, A1), lambda i: (0, 0)),
            pl.BlockSpec((K, Hf), lambda i: (0, 0)),
            pl.BlockSpec((1, Hf), lambda i: (0, 0)),
            pl.BlockSpec((Hf, G), lambda i: (0, 0)),
            pl.BlockSpec((A1, G), lambda i: (0, 0)),
            pl.BlockSpec((1, G), lambda i: (0, 0)),
        ],
        out_specs=pl.BlockSpec((T, G), lambda i: (0, 0)),
    )(x_flat, lar, fc_w, fc_b.reshape(1, Hf), wih_fc, wih_lar,
      lstm_b.reshape(1, G))


def _lstm_kernel(gx_ref, h0_ref, c0_ref, whh_ref, hs_ref, hn_ref, cn_ref,
                 h_sc, c_sc):
    # Single-layer LSTM recurrence, batch=1, seq_len=T (PyTorch gate order i,f,g,o).
    # Input projection is pre-computed (gx_ref); only h @ W_hh stays in the loop.
    T = gx_ref.shape[0]
    H = h0_ref.shape[1]
    h_sc[...] = h0_ref[...]
    c_sc[...] = c0_ref[...]

    def step(t, carry):
        gates = gx_ref[pl.ds(t, 1), :] + jnp.dot(
            h_sc[...], whh_ref[...], preferred_element_type=jnp.float32)
        i_g = jax.nn.sigmoid(gates[:, 0:H])
        f_g = jax.nn.sigmoid(gates[:, H:2 * H])
        g_g = jnp.tanh(gates[:, 2 * H:3 * H])
        o_g = jax.nn.sigmoid(gates[:, 3 * H:4 * H])
        c_new = f_g * c_sc[...] + i_g * g_g
        h_new = o_g * jnp.tanh(c_new)
        c_sc[...] = c_new
        h_sc[...] = h_new
        hs_ref[pl.ds(t, 1), :] = h_new
        return carry

    jax.lax.fori_loop(0, T, step, 0)
    hn_ref[...] = h_sc[...]
    cn_ref[...] = c_sc[...]


def lstm_pallas(gates_x, h0, c0, w_hh):
    """gates_x: (T, 4H) precomputed input projection; h0/c0: (1, H); w_hh: (H, 4H)."""
    T, G = gates_x.shape
    H = h0.shape[1]
    return pl.pallas_call(
        _lstm_kernel,
        out_shape=(
            jax.ShapeDtypeStruct((T, H), jnp.float32),   # all hidden states
            jax.ShapeDtypeStruct((1, H), jnp.float32),   # final h
            jax.ShapeDtypeStruct((1, H), jnp.float32),   # final c
        ),
        grid=(1,),
        in_specs=[
            pl.BlockSpec((T, G), lambda i: (0, 0)),
            pl.BlockSpec((1, H), lambda i: (0, 0)),
            pl.BlockSpec((1, H), lambda i: (0, 0)),
            pl.BlockSpec((H, G), lambda i: (0, 0)),
        ],
        out_specs=(
            pl.BlockSpec((T, H), lambda i: (0, 0)),
            pl.BlockSpec((1, H), lambda i: (0, 0)),
            pl.BlockSpec((1, H), lambda i: (0, 0)),
        ),
        scratch_shapes=[pltpu.VMEM((1, H), jnp.float32),
                        pltpu.VMEM((1, H), jnp.float32)],
    )(gates_x, h0, c0, w_hh)


def _pc_deconv_q_kernel(p_ref, w_ref, b_ref, q_ref, qmax_ref, *, n_actions):
    # Fused v/a deconv GEMM (+bias+ReLU) and dueling combination per spatial site:
    # y = relu(patches @ [w_v | w_a] + b);  q = v + a - mean(a);  q_max = max(q).
    y = jnp.dot(p_ref[...], w_ref[...], preferred_element_type=jnp.float32)
    y = jnp.maximum(y + b_ref[...], 0.0)           # (tm, 1 + A): [v, a_1..a_A]
    v = y[:, 0:1]
    a = y[:, 1:1 + n_actions]
    q = v + a - jnp.mean(a, axis=1, keepdims=True)
    q_ref[...] = q
    qmax_ref[...] = jnp.max(q, axis=1, keepdims=True)


def pc_deconv_q_pallas(patches, w, b, n_actions):
    """patches: (M, K) im2col of the dilated/padded pc map; w: (K, 1+A), b: (1+A,)."""
    if w.dtype == jnp.bfloat16 and patches.dtype != jnp.bfloat16:
        patches = patches.astype(jnp.bfloat16)
    M, K = patches.shape
    Co = w.shape[1]
    if M >= 256 and M % 16 == 0:
        gm, tm = 2, M // 2
    else:
        gm, tm = 1, M
    return pl.pallas_call(
        functools.partial(_pc_deconv_q_kernel, n_actions=n_actions),
        out_shape=(jax.ShapeDtypeStruct((M, n_actions), jnp.float32),
                   jax.ShapeDtypeStruct((M, 1), jnp.float32)),
        grid=(gm,),
        in_specs=[
            pl.BlockSpec((tm, K), lambda i: (i, 0)),
            pl.BlockSpec((K, Co), lambda i: (0, 0)),
            pl.BlockSpec((1, Co), lambda i: (0, 0)),
        ],
        out_specs=(pl.BlockSpec((tm, n_actions), lambda i: (i, 0)),
                   pl.BlockSpec((tm, 1), lambda i: (i, 0))),
        compiler_params=pltpu.CompilerParams(
            dimension_semantics=("parallel",)),
    )(patches, w, b.reshape(1, Co))


# ----------------------------------------------------------------------------
# Conv trunk: NHWC im2col (plain-XLA glue) + Pallas GEMM kernel
# ----------------------------------------------------------------------------

def _im2col_nhwc(x, kh, kw, stride):
    """x: (N, H, W, C) -> (N*OH*OW, kh*kw*C); per-row element order (kh, kw, C)."""
    N, H, W, C = x.shape
    OH = (H - kh) // stride + 1
    OW = (W - kw) // stride + 1
    cols = []
    for i in range(kh):
        for j in range(kw):
            cols.append(x[:, i:i + stride * OH:stride, j:j + stride * OW:stride, :])
    p = jnp.stack(cols, axis=3)                      # (N, OH, OW, kh*kw, C)
    return p.reshape(N * OH * OW, kh * kw * C), OH, OW


def conv2d_nhwc_pallas(x, w_gemm, b, kh, kw, stride, relu=False):
    """x: (N, H, W, C) NHWC; w_gemm: (kh*kw*C, O) im2col layout -> (N, OH, OW, O)."""
    N = x.shape[0]
    patches, OH, OW = _im2col_nhwc(x, kh, kw, stride)
    y = linear_pallas(patches, w_gemm, b, relu=relu)
    return y.reshape(N, OH, OW, w_gemm.shape[1])


# ----------------------------------------------------------------------------
# Parameters (deterministic synthetic init in PyTorch layout, then a one-time
# preparation step that permutes/fuses weights into kernel-friendly layout)
# ----------------------------------------------------------------------------

def init_params(key, in_channels, action_size):
    H = 256
    D = H + action_size + 1
    keys = iter(jax.random.split(key, 32))

    def unif(shape, bound):
        return jax.random.uniform(next(keys), shape, jnp.float32, -bound, bound)

    p = {}
    d = 1.0 / (in_channels * 8 * 8) ** 0.5
    p['conv1_w'] = unif((16, in_channels, 8, 8), d)        # PyTorch (O, C, kh, kw)
    p['conv1_b'] = unif((16,), d)
    d = 1.0 / (16 * 4 * 4) ** 0.5
    p['conv2_w'] = unif((32, 16, 4, 4), d)
    p['conv2_b'] = unif((32,), d)
    d = 1.0 / 2592 ** 0.5
    p['fc_w'] = unif((2592, 256), d)                       # stored (in, out)
    p['fc_b'] = unif((256,), d)
    d = 1.0 / 256 ** 0.5
    p['lstm_w_ih'] = unif((D, 4 * 256), d)                 # (in, 4H), gates i,f,g,o
    p['lstm_w_hh'] = unif((256, 4 * 256), d)
    p['lstm_b'] = unif((4 * 256,), d) + unif((4 * 256,), d)  # b_ih + b_hh fused
    p['critic_w'] = unif((256, 1), d)
    p['critic_b'] = unif((1,), d)
    p['actor_w'] = unif((256, action_size), d)
    p['actor_b'] = unif((action_size,), d)
    # pixel control head
    p['pc_fc_w'] = unif((256, 9 * 9 * 32), d)
    p['pc_fc_b'] = unif((9 * 9 * 32,), d)
    d = 1.0 / (32 * 4 * 4) ** 0.5
    p['pc_deconv_v_w'] = unif((32, 1, 4, 4), d)            # PyTorch (Ci, Co, kh, kw)
    p['pc_deconv_v_b'] = unif((1,), d)
    p['pc_deconv_a_w'] = unif((32, action_size, 4, 4), d)
    p['pc_deconv_a_b'] = unif((action_size,), d)
    # reward prediction head
    d = 1.0 / (9 * 9 * 32 * 3) ** 0.5
    p['rp_w'] = unif((9 * 9 * 32 * 3, 3), d)
    p['rp_b'] = unif((3,), d)
    return p


def prepare_params(p, compute_dtype=jnp.bfloat16):
    """One-time (load-time) weight relayout: NHWC im2col GEMM layouts, split W_ih,
    fused actor|critic and fused v|a deconv, bf16 GEMM operands (f32 biases)."""
    cd = compute_dtype
    q = {}

    def conv_w(w):   # (O, C, kh, kw) -> (kh*kw*C, O) matching NHWC im2col rows
        O, C, kh, kw = w.shape
        return w.transpose(2, 3, 1, 0).reshape(kh * kw * C, O).astype(cd)

    def deconv_w(w):  # ConvTranspose2d (Ci, Co, kh, kw) -> stride-1-conv GEMM layout
        Ci, Co, kh, kw = w.shape
        return jnp.flip(w, axis=(2, 3)).transpose(2, 3, 0, 1).reshape(kh * kw * Ci, Co)

    q['conv1_w'] = conv_w(p['conv1_w']); q['conv1_b'] = p['conv1_b']
    q['conv2_w'] = conv_w(p['conv2_w']); q['conv2_b'] = p['conv2_b']
    # fc: PyTorch flattens the conv output as (C=32, H=9, W=9); we flatten NHWC.
    q['fc_w'] = (p['fc_w'].reshape(32, 9, 9, 256)
                 .transpose(1, 2, 0, 3).reshape(2592, 256).astype(cd))
    q['fc_b'] = p['fc_b']
    # LSTM: W_ih split into fc-part and last_action_reward-part (no concat needed).
    q['lstm_wih_fc'] = p['lstm_w_ih'][:256].astype(cd)       # (256, 4H)
    q['lstm_wih_lar'] = p['lstm_w_ih'][256:].astype(cd)      # (A+1, 4H)
    q['lstm_b'] = p['lstm_b']
    q['lstm_w_hh'] = p['lstm_w_hh']                          # recurrence stays f32
    # fused critic | actor head
    q['ac_w'] = jnp.concatenate([p['critic_w'], p['actor_w']], axis=1)  # (256, 1+A)
    q['ac_b'] = jnp.concatenate([p['critic_b'], p['actor_b']])
    # pixel control: pc_fc columns permuted (C,H,W) -> (H,W,C); deconvs fused v|a.
    q['pc_fc_w'] = (p['pc_fc_w'].reshape(256, 32, 9, 9)
                    .transpose(0, 2, 3, 1).reshape(256, 2592).astype(cd))
    q['pc_fc_b'] = p['pc_fc_b'].reshape(32, 9, 9).transpose(1, 2, 0).reshape(2592)
    q['pc_dec_w'] = jnp.concatenate(
        [deconv_w(p['pc_deconv_v_w']), deconv_w(p['pc_deconv_a_w'])],
        axis=1).astype(cd)                                   # (4*4*32, 1+A)
    q['pc_dec_b'] = jnp.concatenate([p['pc_deconv_v_b'], p['pc_deconv_a_b']])
    # reward prediction: rows permuted (frame, C, H, W) -> (frame, H, W, C).
    q['rp_w'] = (p['rp_w'].reshape(3, 32, 9, 9, 3)
                 .transpose(0, 2, 3, 1, 4).reshape(3 * 2592, 3).astype(cd))
    q['rp_b'] = p['rp_b']
    return q


# ----------------------------------------------------------------------------
# UNREAL forward
# ----------------------------------------------------------------------------

def _conv_trunk(params, states):
    x = jnp.transpose(states, (0, 2, 3, 1))    # NCHW -> NHWC once; stays NHWC after
    x = conv2d_nhwc_pallas(x, params['conv1_w'], params['conv1_b'], 8, 8, 4, relu=True)
    x = conv2d_nhwc_pallas(x, params['conv2_w'], params['conv2_b'], 4, 4, 2, relu=True)
    return x                                   # (N, 9, 9, 32)


def unreal_forward(params, states, hx, cx, last_action_reward=None, *, task_type):
    """states: (T, C, 84, 84) NCHW; hx, cx: (1, 1, 256); last_action_reward: (T, A+1)."""
    if task_type == 'rp':
        x = _conv_trunk(params, states)        # expects exactly 3 stacked frames
        x = x.reshape(1, 3 * 9 * 9 * 32)
        return linear_pallas(x, params['rp_w'], params['rp_b'])

    x = _conv_trunk(params, states)
    T = x.shape[0]
    x = x.reshape(T, 2592)

    # fc + ReLU + LSTM input projection fused into one GEMM kernel (gates hoisted
    # out of the recurrence; W_ih split so the last_action_reward concat vanishes).
    gates_x = fc_lstm_gates_pallas(
        x, last_action_reward, params['fc_w'], params['fc_b'],
        params['lstm_wih_fc'], params['lstm_wih_lar'], params['lstm_b'])
    hs, hn, cn = lstm_pallas(gates_x, hx.reshape(1, 256), cx.reshape(1, 256),
                             params['lstm_w_hh'])
    hx_out = hn.reshape(1, 1, 256)
    cx_out = cn.reshape(1, 1, 256)

    if task_type in ('a3c', 'vr'):
        vh = linear_pallas(hs, params['ac_w'], params['ac_b'])   # fused critic|actor
        value = vh[:, 0:1]
        if task_type == 'vr':
            return value, (hx_out, cx_out)
        logits = vh[:, 1:]
        return value, logits, (hx_out, cx_out)

    if task_type == 'pc':
        A = params['pc_dec_w'].shape[1] - 1
        p = linear_pallas(hs, params['pc_fc_w'], params['pc_fc_b'], relu=True)
        p = p.reshape(T, 9, 9, 32)             # NHWC (columns pre-permuted at prep)
        # ConvTranspose2d(k=4, stride=2) == stride-1 conv over the dilated+padded map.
        Hd = (9 - 1) * 2 + 1
        xd = jnp.zeros((T, Hd, Hd, 32), p.dtype).at[:, ::2, ::2, :].set(p)
        xp = jnp.pad(xd, ((0, 0), (3, 3), (3, 3), (0, 0)))
        patches, OH, OW = _im2col_nhwc(xp, 4, 4, 1)       # (T*20*20, 512), built once
        # single fused GEMM for the v & a deconvs + in-kernel dueling reduction
        q, qmax = pc_deconv_q_pallas(patches, params['pc_dec_w'],
                                     params['pc_dec_b'], A)
        pc_q = q.reshape(T, OH, OW, A).transpose(0, 3, 1, 2)   # -> (T, A, 20, 20)
        pc_q_max = qmax.reshape(T, OH, OW)
        return pc_q, pc_q_max, (hx_out, cx_out)

    raise ValueError(f"unknown task_type {task_type}")


# ----------------------------------------------------------------------------
# Demo
# ----------------------------------------------------------------------------

if __name__ == "__main__":
    in_channels, action_size = 3, 6
    T = 2                                      # seq_len / batch of frames

    key = jax.random.PRNGKey(0)
    k_params, k_states, k_lar, k_rp = jax.random.split(key, 4)

    raw_params = init_params(k_params, in_channels, action_size)
    params = prepare_params(raw_params)

    states = jax.random.uniform(k_states, (T, in_channels, 84, 84), jnp.float32)
    last_action_reward = jax.random.uniform(k_lar, (T, action_size + 1), jnp.float32)
    hx = jnp.zeros((1, 1, 256), jnp.float32)
    cx = jnp.zeros((1, 1, 256), jnp.float32)

    a3c_fwd = jax.jit(functools.partial(unreal_forward, task_type='a3c'))
    pc_fwd = jax.jit(functools.partial(unreal_forward, task_type='pc'))
    vr_fwd = jax.jit(functools.partial(unreal_forward, task_type='vr'))
    rp_fwd = jax.jit(functools.partial(unreal_forward, task_type='rp'))

    # a3c head (value + policy logits)
    value, logits, (hx1, cx1) = a3c_fwd(params, states, hx, cx, last_action_reward)
    jax.block_until_ready((value, logits, hx1, cx1))
    assert value.shape == (T, 1) and logits.shape == (T, action_size)
    assert hx1.shape == (1, 1, 256) and cx1.shape == (1, 1, 256)

    # pixel-control head
    pc_q, pc_q_max, _ = pc_fwd(params, states, hx, cx, last_action_reward)
    jax.block_until_ready((pc_q, pc_q_max))
    assert pc_q.shape == (T, action_size, 20, 20) and pc_q_max.shape == (T, 20, 20)

    # value-replay head
    v_vr, _ = vr_fwd(params, states, hx, cx, last_action_reward)
    jax.block_until_ready(v_vr)
    assert v_vr.shape == (T, 1)

    # reward-prediction head (expects exactly 3 stacked frames)
    rp_states = jax.random.uniform(k_rp, (3, in_channels, 84, 84), jnp.float32)
    rp_out = rp_fwd(params, rp_states, hx, cx)
    jax.block_until_ready(rp_out)
    assert rp_out.shape == (1, 3)

    print("KERNEL_OK")
</pallas_src>

<mosaic_0001>
module attributes {stable_mosaic.version = 11 : i64} {
  func.func @_linear_kernel(%arg0: i32, %arg1: memref<400x192xbf16, #tpu.memory_space<vmem>>, %arg2: memref<192x16xbf16, #tpu.memory_space<vmem>>, %arg3: memref<1x16xf32, #tpu.memory_space<vmem>>, %arg4: memref<400x16xf32, #tpu.memory_space<vmem>>) attributes {dimension_semantics = [#tpu.dimension_semantics<parallel>], iteration_bounds = array<i64: 2>, scalar_prefetch = 0 : i64, scratch_operands = 0 : i64, tpu.core_type = #tpu.core_type<tc>, window_params = [{transform_indices = @transform_0, window_bounds = array<i64: 400, 192>}, {pipeline_mode = #tpu.pipeline_mode<synchronous>, transform_indices = @transform_1, window_bounds = array<i64: 192, 16>}, {pipeline_mode = #tpu.pipeline_mode<synchronous>, transform_indices = @transform_2, window_bounds = array<i64: 1, 16>}, {transform_indices = @transform_3, window_bounds = array<i64: 400, 16>}]} {
    %c0 = arith.constant 0 : index
    %c0_0 = arith.constant 0 : index
    %0 = vector.load %arg1[%c0, %c0_0] : memref<400x192xbf16, #tpu.memory_space<vmem>>, vector<400x192xbf16>
    %c0_1 = arith.constant 0 : index
    %c0_2 = arith.constant 0 : index
    %1 = vector.load %arg2[%c0_1, %c0_2] : memref<192x16xbf16, #tpu.memory_space<vmem>>, vector<192x16xbf16>
    %cst = arith.constant dense<0.000000e+00> : vector<400x16xf32>
    %2 = tpu.matmul %0, %1, %cst {dimension_numbers = #tpu.dot_dimension_numbers<[1], [0], [0], [1], [0, 0, 1, 1], [], []>} : vector<400x192xbf16>, vector<192x16xbf16>, vector<400x16xf32> -> vector<400x16xf32>
    %c0_3 = arith.constant 0 : index
    %c0_4 = arith.constant 0 : index
    %3 = vector.load %arg3[%c0_3, %c0_4] : memref<1x16xf32, #tpu.memory_space<vmem>>, vector<1x16xf32>
    %4 = vector.broadcast %3 : vector<1x16xf32> to vector<400x16xf32>
    %5 = arith.addf %2, %4 : vector<400x16xf32>
    %cst_5 = arith.constant 0.000000e+00 : f32
    %6 = vector.broadcast %cst_5 : f32 to vector<400x16xf32>
    %7 = arith.maximumf %5, %6 : vector<400x16xf32>
    %c0_6 = arith.constant 0 : index
    %c0_7 = arith.constant 0 : index
    %8 = vector.load %arg4[%c0_6, %c0_7] : memref<400x16xf32, #tpu.memory_space<vmem>>, vector<400x16xf32>
    tpu.vector_store %arg4[%c0_6, %c0_7], %7 {strides = array<i32>} : memref<400x16xf32, #tpu.memory_space<vmem>>, vector<400x16xf32>,
    return
  }
  func.func @transform_0(%arg0: i32) -> (i32, i32) {
    %c0_i32 = arith.constant 0 : i32
    %c0_i32_0 = arith.constant 0 : i32
    return %arg0, %c0_i32 : i32, i32
  }
  func.func @transform_1(%arg0: i32) -> (i32, i32) {
    %c0_i32 = arith.constant 0 : i32
    %c0_i32_0 = arith.constant 0 : i32
    %c0_i32_1 = arith.constant 0 : i32
    return %c0_i32, %c0_i32_0 : i32, i32
  }
  func.func @transform_2(%arg0: i32) -> (i32, i32) {
    %c0_i32 = arith.constant 0 : i32
    %c0_i32_0 = arith.constant 0 : i32
    %c0_i32_1 = arith.constant 0 : i32
    return %c0_i32, %c0_i32_0 : i32, i32
  }
  func.func @transform_3(%arg0: i32) -> (i32, i32) {
    %c0_i32 = arith.constant 0 : i32
    %c0_i32_0 = arith.constant 0 : i32
    return %arg0, %c0_i32 : i32, i32
  }
}

module attributes {stable_mosaic.version = 11 : i64} {
  func.func @_linear_kernel(%arg0: i32, %arg1: memref<162x256xbf16, #tpu.memory_space<vmem>>, %arg2: memref<256x32xbf16, #tpu.memory_space<vmem>>, %arg3: memref<1x32xf32, #tpu.memory_space<vmem>>, %arg4: memref<162x32xf32, #tpu.memory_space<vmem>>) attributes {dimension_semantics = [#tpu.dimension_semantics<parallel>], iteration_bounds = array<i64: 1>, scalar_prefetch = 0 : i64, scratch_operands = 0 : i64, tpu.core_type = #tpu.core_type<tc>, window_params = [{transform_indices = @transform_0, window_bounds = array<i64: 162, 256>}, {pipeline_mode = #tpu.pipeline_mode<synchronous>, transform_indices = @transform_1, window_bounds = array<i64: 256, 32>}, {pipeline_mode = #tpu.pipeline_mode<synchronous>, transform_indices = @transform_2, window_bounds = array<i64: 1, 32>}, {transform_indices = @transform_3, window_bounds = array<i64: 162, 32>}]} {
    %c0 = arith.constant 0 : index
    %c0_0 = arith.constant 0 : index
    %0 = vector.load %arg1[%c0, %c0_0] : memref<162x256xbf16, #tpu.memory_space<vmem>>, vector<162x256xbf16>
    %c0_1 = arith.constant 0 : index
    %c0_2 = arith.constant 0 : index
    %1 = vector.load %arg2[%c0_1, %c0_2] : memref<256x32xbf16, #tpu.memory_space<vmem>>, vector<256x32xbf16>
    %cst = arith.constant dense<0.000000e+00> : vector<162x32xf32>
    %2 = tpu.matmul %0, %1, %cst {dimension_numbers = #tpu.dot_dimension_numbers<[1], [0], [0], [1], [0, 0, 1, 1], [], []>} : vector<162x256xbf16>, vector<256x32xbf16>, vector<162x32xf32> -> vector<162x32xf32>
    %c0_3 = arith.constant 0 : index
    %c0_4 = arith.constant 0 : index
    %3 = vector.load %arg3[%c0_3, %c0_4] : memref<1x32xf32, #tpu.memory_space<vmem>>, vector<1x32xf32>
    %4 = vector.broadcast %3 : vector<1x32xf32> to vector<162x32xf32>
    %5 = arith.addf %2, %4 : vector<162x32xf32>
    %cst_5 = arith.constant 0.000000e+00 : f32
    %6 = vector.broadcast %cst_5 : f32 to vector<162x32xf32>
    %7 = arith.maximumf %5, %6 : vector<162x32xf32>
    %c0_6 = arith.constant 0 : index
    %c0_7 = arith.constant 0 : index
    %8 = vector.load %arg4[%c0_6, %c0_7] : memref<162x32xf32, #tpu.memory_space<vmem>>, vector<162x32xf32>
    tpu.vector_store %arg4[%c0_6, %c0_7], %7 {strides = array<i32>} : memref<162x32xf32, #tpu.memory_space<vmem>>, vector<162x32xf32>,
    return
  }
  func.func @transform_0(%arg0: i32) -> (i32, i32) {
    %c0_i32 = arith.constant 0 : i32
    %c0_i32_0 = arith.constant 0 : i32
    return %arg0, %c0_i32 : i32, i32
  }
  func.func @transform_1(%arg0: i32) -> (i32, i32) {
    %c0_i32 = arith.constant 0 : i32
    %c0_i32_0 = arith.constant 0 : i32
    %c0_i32_1 = arith.constant 0 : i32
    return %c0_i32, %c0_i32_0 : i32, i32
  }
  func.func @transform_2(%arg0: i32) -> (i32, i32) {
    %c0_i32 = arith.constant 0 : i32
    %c0_i32_0 = arith.constant 0 : i32
    %c0_i32_1 = arith.constant 0 : i32
    return %c0_i32, %c0_i32_0 : i32, i32
  }
  func.func @transform_3(%arg0: i32) -> (i32, i32) {
    %c0_i32 = arith.constant 0 : i32
    %c0_i32_0 = arith.constant 0 : i32
    return %arg0, %c0_i32 : i32, i32
  }
}

module attributes {stable_mosaic.version = 11 : i64} {
  func.func @_fc_gates_kernel(%arg0: i32, %arg1: memref<2x2592xbf16, #tpu.memory_space<vmem>>, %arg2: memref<2x7xbf16, #tpu.memory_space<vmem>>, %arg3: memref<2592x256xbf16, #tpu.memory_space<vmem>>, %arg4: memref<1x256xf32, #tpu.memory_space<vmem>>, %arg5: memref<256x1024xbf16, #tpu.memory_space<vmem>>, %arg6: memref<7x1024xbf16, #tpu.memory_space<vmem>>, %arg7: memref<1x1024xf32, #tpu.memory_space<vmem>>, %arg8: memref<2x1024xf32, #tpu.memory_space<vmem>>) attributes {dimension_semantics = [#tpu.dimension_semantics<arbitrary>], iteration_bounds = array<i64: 1>, scalar_prefetch = 0 : i64, scratch_operands = 0 : i64, tpu.core_type = #tpu.core_type<tc>, window_params = [{pipeline_mode = #tpu.pipeline_mode<synchronous>, transform_indices = @transform_0, window_bounds = array<i64: 2, 2592>}, {pipeline_mode = #tpu.pipeline_mode<synchronous>, transform_indices = @transform_1, window_bounds = array<i64: 2, 7>}, {pipeline_mode = #tpu.pipeline_mode<synchronous>, transform_indices = @transform_2, window_bounds = array<i64: 2592, 256>}, {pipeline_mode = #tpu.pipeline_mode<synchronous>, transform_indices = @transform_3, window_bounds = array<i64: 1, 256>}, {pipeline_mode = #tpu.pipeline_mode<synchronous>, transform_indices = @transform_4, window_bounds = array<i64: 256, 1024>}, {pipeline_mode = #tpu.pipeline_mode<synchronous>, transform_indices = @transform_5, window_bounds = array<i64: 7, 1024>}, {pipeline_mode = #tpu.pipeline_mode<synchronous>, transform_indices = @transform_6, window_bounds = array<i64: 1, 1024>}, {pipeline_mode = #tpu.pipeline_mode<synchronous>, transform_indices = @transform_7, window_bounds = array<i64: 2, 1024>}]} {
    %c0 = arith.constant 0 : index
    %c0_0 = arith.constant 0 : index
    %0 = vector.load %arg1[%c0, %c0_0] : memref<2x2592xbf16, #tpu.memory_space<vmem>>, vector<2x2592xbf16>
    %c0_1 = arith.constant 0 : index
    %c0_2 = arith.constant 0 : index
    %1 = vector.load %arg3[%c0_1, %c0_2] : memref<2592x256xbf16, #tpu.memory_space<vmem>>, vector<2592x256xbf16>
    %cst = arith.constant dense<0.000000e+00> : vector<2x256xf32>
    %2 = tpu.matmul %0, %1, %cst {dimension_numbers = #tpu.dot_dimension_numbers<[1], [0], [0], [1], [0, 0, 1, 1], [], []>} : vector<2x2592xbf16>, vector<2592x256xbf16>, vector<2x256xf32> -> vector<2x256xf32>
    %c0_3 = arith.constant 0 : index
    %c0_4 = arith.constant 0 : index
    %3 = vector.load %arg4[%c0_3, %c0_4] : memref<1x256xf32, #tpu.memory_space<vmem>>, vector<1x256xf32>
    %4 = vector.broadcast %3 : vector<1x256xf32> to vector<2x256xf32>
    %5 = arith.addf %2, %4 : vector<2x256xf32>
    %cst_5 = arith.constant 0.000000e+00 : f32
    %6 = vector.broadcast %cst_5 : f32 to vector<2x256xf32>
    %7 = arith.maximumf %5, %6 : vector<2x256xf32>
    %8 = arith.truncf %7 : vector<2x256xf32> to vector<2x256xbf16>
    %c0_6 = arith.constant 0 : index
    %c0_7 = arith.constant 0 : index
    %9 = vector.load %arg5[%c0_6, %c0_7] : memref<256x1024xbf16, #tpu.memory_space<vmem>>, vector<256x1024xbf16>
    %cst_8 = arith.constant dense<0.000000e+00> : vector<2x1024xf32>
    %10 = tpu.matmul %8, %9, %cst_8 {dimension_numbers = #tpu.dot_dimension_numbers<[1], [0], [0], [1], [0, 0, 1, 1], [], []>} : vector<2x256xbf16>, vector<256x1024xbf16>, vector<2x1024xf32> -> vector<2x1024xf32>
    %c0_9 = arith.constant 0 : index
    %c0_10 = arith.constant 0 : index
    %11 = vector.load %arg2[%c0_9, %c0_10] : memref<2x7xbf16, #tpu.memory_space<vmem>>, vector<2x7xbf16>
    %c0_11 = arith.constant 0 : index
    %c0_12 = arith.constant 0 : index
    %12 = vector.load %arg6[%c0_11, %c0_12] : memref<7x1024xbf16, #tpu.memory_space<vmem>>, vector<7x1024xbf16>
    %cst_13 = arith.constant dense<0.000000e+00> : vector<2x1024xf32>
    %13 = tpu.matmul %11, %12, %cst_13 {dimension_numbers = #tpu.dot_dimension_numbers<[1], [0], [0], [1], [0, 0, 1, 1], [], []>} : vector<2x7xbf16>, vector<7x1024xbf16>, vector<2x1024xf32> -> vector<2x1024xf32>
    %14 = arith.addf %10, %13 : vector<2x1024xf32>
    %c0_14 = arith.constant 0 : index
    %c0_15 = arith.constant 0 : index
    %15 = vector.load %arg7[%c0_14, %c0_15] : memref<1x1024xf32, #tpu.memory_space<vmem>>, vector<1x1024xf32>
    %16 = vector.broadcast %15 : vector<1x1024xf32> to vector<2x1024xf32>
    %17 = arith.addf %14, %16 : vector<2x1024xf32>
    %c0_16 = arith.constant 0 : index
    %c0_17 = arith.constant 0 : index
    %18 = vector.load %arg8[%c0_16, %c0_17] : memref<2x1024xf32, #tpu.memory_space<vmem>>, vector<2x1024xf32>
    tpu.vector_store %arg8[%c0_16, %c0_17], %17 {strides = array<i32>} : memref<2x1024xf32, #tpu.memory_space<vmem>>, vector<2x1024xf32>,
    return
  }
  func.func @transform_0(%arg0: i32) -> (i32, i32) {
    %c0_i32 = arith.constant 0 : i32
    %c0_i32_0 = arith.constant 0 : i32
    %c0_i32_1 = arith.constant 0 : i32
    return %c0_i32, %c0_i32_0 : i32, i32
  }
  func.func @transform_1(%arg0: i32) -> (i32, i32) {
    %c0_i32 = arith.constant 0 : i32
    %c0_i32_0 = arith.constant 0 : i32
    %c0_i32_1 = arith.constant 0 : i32
    return %c0_i32, %c0_i32_0 : i32, i32
  }
  func.func @transform_2(%arg0: i32) -> (i32, i32) {
    %c0_i32 = arith.constant 0 : i32
    %c0_i32_0 = arith.constant 0 : i32
    %c0_i32_1 = arith.constant 0 : i32
    return %c0_i32, %c0_i32_0 : i32, i32
  }
  func.func @transform_3(%arg0: i32) -> (i32, i32) {
    %c0_i32 = arith.constant 0 : i32
    %c0_i32_0 = arith.constant 0 : i32
    %c0_i32_1 = arith.constant 0 : i32
    return %c0_i32, %c0_i32_0 : i32, i32
  }
  func.func @transform_4(%arg0: i32) -> (i32, i32) {
    %c0_i32 = arith.constant 0 : i32
    %c0_i32_0 = arith.constant 0 : i32
    %c0_i32_1 = arith.constant 0 : i32
    return %c0_i32, %c0_i32_0 : i32, i32
  }
  func.func @transform_5(%arg0: i32) -> (i32, i32) {
    %c0_i32 = arith.constant 0 : i32
    %c0_i32_0 = arith.constant 0 : i32
    %c0_i32_1 = arith.constant 0 : i32
    return %c0_i32, %c0_i32_0 : i32, i32
  }
  func.func @transform_6(%arg0: i32) -> (i32, i32) {
    %c0_i32 = arith.constant 0 : i32
    %c0_i32_0 = arith.constant 0 : i32
    %c0_i32_1 = arith.constant 0 : i32
    return %c0_i32, %c0_i32_0 : i32, i32
  }
  func.func @transform_7(%arg0: i32) -> (i32, i32) {
    %c0_i32 = arith.constant 0 : i32
    %c0_i32_0 = arith.constant 0 : i32
    %c0_i32_1 = arith.constant 0 : i32
    return %c0_i32, %c0_i32_0 : i32, i32
  }
}

module attributes {stable_mosaic.version = 11 : i64} {
  func.func @_lstm_kernel(%arg0: i32, %arg1: memref<2x1024xf32, #tpu.memory_space<vmem>>, %arg2: memref<1x256xf32, #tpu.memory_space<vmem>>, %arg3: memref<1x256xf32, #tpu.memory_space<vmem>>, %arg4: memref<256x1024xf32, #tpu.memory_space<vmem>>, %arg5: memref<2x256xf32, #tpu.memory_space<vmem>>, %arg6: memref<1x256xf32, #tpu.memory_space<vmem>>, %arg7: memref<1x256xf32, #tpu.memory_space<vmem>>, %arg8: memref<1x256xf32, #tpu.memory_space<vmem>>, %arg9: memref<1x256xf32, #tpu.memory_space<vmem>>) attributes {dimension_semantics = [#tpu.dimension_semantics<arbitrary>], iteration_bounds = array<i64: 1>, scalar_prefetch = 0 : i64, scratch_operands = 2 : i64, tpu.core_type = #tpu.core_type<tc>, window_params = [{pipeline_mode = #tpu.pipeline_mode<synchronous>, transform_indices = @transform_0, window_bounds = array<i64: 2, 1024>}, {pipeline_mode = #tpu.pipeline_mode<synchronous>, transform_indices = @transform_1, window_bounds = array<i64: 1, 256>}, {pipeline_mode = #tpu.pipeline_mode<synchronous>, transform_indices = @transform_2, window_bounds = array<i64: 1, 256>}, {pipeline_mode = #tpu.pipeline_mode<synchronous>, transform_indices = @transform_3, window_bounds = array<i64: 256, 1024>}, {pipeline_mode = #tpu.pipeline_mode<synchronous>, transform_indices = @transform_4, window_bounds = array<i64: 2, 256>}, {pipeline_mode = #tpu.pipeline_mode<synchronous>, transform_indices = @transform_5, window_bounds = array<i64: 1, 256>}, {pipeline_mode = #tpu.pipeline_mode<synchronous>, transform_indices = @transform_6, window_bounds = array<i64: 1, 256>}]} {
    %c0 = arith.constant 0 : index
    %c0_0 = arith.constant 0 : index
    %0 = vector.load %arg2[%c0, %c0_0] : memref<1x256xf32, #tpu.memory_space<vmem>>, vector<1x256xf32>
    %c0_1 = arith.constant 0 : index
    %c0_2 = arith.constant 0 : index
    %1 = vector.load %arg8[%c0_1, %c0_2] : memref<1x256xf32, #tpu.memory_space<vmem>>, vector<1x256xf32>
    tpu.vector_store %arg8[%c0_1, %c0_2], %0 {strides = array<i32>} : memref<1x256xf32, #tpu.memory_space<vmem>>, vector<1x256xf32>,
    %c0_3 = arith.constant 0 : index
    %c0_4 = arith.constant 0 : index
    %2 = vector.load %arg3[%c0_3, %c0_4] : memref<1x256xf32, #tpu.memory_space<vmem>>, vector<1x256xf32>
    %c0_5 = arith.constant 0 : index
    %c0_6 = arith.constant 0 : index
    %3 = vector.load %arg9[%c0_5, %c0_6] : memref<1x256xf32, #tpu.memory_space<vmem>>, vector<1x256xf32>
    tpu.vector_store %arg9[%c0_5, %c0_6], %2 {strides = array<i32>} : memref<1x256xf32, #tpu.memory_space<vmem>>, vector<1x256xf32>,
    %c0_i32 = arith.constant 0 : i32
    %c2_i32 = arith.constant 2 : i32
    %4 = arith.addi %c0_i32, %c2_i32 : i32
    %c1_i32 = arith.constant 1 : i32
    scf.for %arg10 = %c0_i32 to %4 step %c1_i32  : i32 {
      %9 = arith.index_cast %arg10 : i32 to index
      %c0_16 = arith.constant 0 : index
      %10 = vector.load %arg1[%9, %c0_16] : memref<2x1024xf32, #tpu.memory_space<vmem>>, vector<1x1024xf32>
      %c0_17 = arith.constant 0 : index
      %c0_18 = arith.constant 0 : index
      %11 = vector.load %arg8[%c0_17, %c0_18] : memref<1x256xf32, #tpu.memory_space<vmem>>, vector<1x256xf32>
      %c0_19 = arith.constant 0 : index
      %c0_20 = arith.constant 0 : index
      %12 = vector.load %arg4[%c0_19, %c0_20] : memref<256x1024xf32, #tpu.memory_space<vmem>>, vector<256x1024xf32>
      %cst = arith.constant dense<0.000000e+00> : vector<1x1024xf32>
      %13 = tpu.matmul %11, %12, %cst {dimension_numbers = #tpu.dot_dimension_numbers<[1], [0], [0], [1], [0, 0, 1, 1], [], []>} : vector<1x256xf32>, vector<256x1024xf32>, vector<1x1024xf32> -> vector<1x1024xf32>
      %14 = arith.addf %10, %13 : vector<1x1024xf32>
      %15 = vector.extract_strided_slice %14 {offsets = [0, 0], sizes = [1, 256], strides = [1, 1]} : vector<1x1024xf32> to vector<1x256xf32>
      %16 = arith.negf %15 : vector<1x256xf32>
      %17 = math.exp %16 : vector<1x256xf32>
      %cst_21 = arith.constant 1.000000e+00 : f32
      %18 = vector.broadcast %cst_21 : f32 to vector<1x256xf32>
      %19 = arith.addf %18, %17 : vector<1x256xf32>
      %20 = arith.divf %18, %19 : vector<1x256xf32>
      %21 = vector.extract_strided_slice %14 {offsets = [0, 256], sizes = [1, 256], strides = [1, 1]} : vector<1x1024xf32> to vector<1x256xf32>
      %22 = arith.negf %21 : vector<1x256xf32>
      %23 = math.exp %22 : vector<1x256xf32>
      %cst_22 = arith.constant 1.000000e+00 : f32
      %24 = vector.broadcast %cst_22 : f32 to vector<1x256xf32>
      %25 = arith.addf %24, %23 : vector<1x256xf32>
      %26 = arith.divf %24, %25 : vector<1x256xf32>
      %27 = vector.extract_strided_slice %14 {offsets = [0, 512], sizes = [1, 256], strides = [1, 1]} : vector<1x1024xf32> to vector<1x256xf32>
      %28 = math.tanh %27 : vector<1x256xf32>
      %29 = vector.extract_strided_slice %14 {offsets = [0, 768], sizes = [1, 256], strides = [1, 1]} : vector<1x1024xf32> to vector<1x256xf32>
      %30 = arith.negf %29 : vector<1x256xf32>
      %31 = math.exp %30 : vector<1x256xf32>
      %cst_23 = arith.constant 1.000000e+00 : f32
      %32 = vector.broadcast %cst_23 : f32 to vector<1x256xf32>
      %33 = arith.addf %32, %31 : vector<1x256xf32>
      %34 = arith.divf %32, %33 : vector<1x256xf32>
      %c0_24 = arith.constant 0 : index
      %c0_25 = arith.constant 0 : index
      %35 = vector.load %arg9[%c0_24, %c0_25] : memref<1x256xf32, #tpu.memory_space<vmem>>, vector<1x256xf32>
      %36 = arith.mulf %26, %35 : vector<1x256xf32>
      %37 = arith.mulf %20, %28 : vector<1x256xf32>
      %38 = arith.addf %36, %37 : vector<1x256xf32>
      %39 = math.tanh %38 : vector<1x256xf32>
      %40 = arith.mulf %34, %39 : vector<1x256xf32>
      %c0_26 = arith.constant 0 : index
      %c0_27 = arith.constant 0 : index
      %41 = vector.load %arg9[%c0_26, %c0_27] : memref<1x256xf32, #tpu.memory_space<vmem>>, vector<1x256xf32>
      tpu.vector_store %arg9[%c0_26, %c0_27], %38 {strides = array<i32>} : memref<1x256xf32, #tpu.memory_space<vmem>>, vector<1x256xf32>,
      %c0_28 = arith.constant 0 : index
      %c0_29 = arith.constant 0 : index
      %42 = vector.load %arg8[%c0_28, %c0_29] : memref<1x256xf32, #tpu.memory_space<vmem>>, vector<1x256xf32>
      tpu.vector_store %arg8[%c0_28, %c0_29], %40 {strides = array<i32>} : memref<1x256xf32, #tpu.memory_space<vmem>>, vector<1x256xf32>,
      %43 = arith.index_cast %arg10 : i32 to index
      %c0_30 = arith.constant 0 : index
      %44 = vector.load %arg5[%43, %c0_30] : memref<2x256xf32, #tpu.memory_space<vmem>>, vector<1x256xf32>
      tpu.vector_store %arg5[%43, %c0_30], %40 {strides = array<i32>} : memref<2x256xf32, #tpu.memory_space<vmem>>, vector<1x256xf32>,
    }
    %c2_i32_7 = arith.constant 2 : i32
    %c0_8 = arith.constant 0 : index
    %c0_9 = arith.constant 0 : index
    %5 = vector.load %arg8[%c0_8, %c0_9] : memref<1x256xf32, #tpu.memory_space<vmem>>, vector<1x256xf32>
    %c0_10 = arith.constant 0 : index
    %c0_11 = arith.constant 0 : index
    %6 = vector.load %arg6[%c0_10, %c0_11] : memref<1x256xf32, #tpu.memory_space<vmem>>, vector<1x256xf32>
    tpu.vector_store %arg6[%c0_10, %c0_11], %5 {strides = array<i32>} : memref<1x256xf32, #tpu.memory_space<vmem>>, vector<1x256xf32>,
    %c0_12 = arith.constant 0 : index
    %c0_13 = arith.constant 0 : index
    %7 = vector.load %arg9[%c0_12, %c0_13] : memref<1x256xf32, #tpu.memory_space<vmem>>, vector<1x256xf32>
    %c0_14 = arith.constant 0 : index
    %c0_15 = arith.constant 0 : index
    %8 = vector.load %arg7[%c0_14, %c0_15] : memref<1x256xf32, #tpu.memory_space<vmem>>, vector<1x256xf32>
    tpu.vector_store %arg7[%c0_14, %c0_15], %7 {strides = array<i32>} : memref<1x256xf32, #tpu.memory_space<vmem>>, vector<1x256xf32>,
    return
  }
  func.func @transform_0(%arg0: i32) -> (i32, i32) {
    %c0_i32 = arith.constant 0 : i32
    %c0_i32_0 = arith.constant 0 : i32
    %c0_i32_1 = arith.constant 0 : i32
    return %c0_i32, %c0_i32_0 : i32, i32
  }
  func.func @transform_1(%arg0: i32) -> (i32, i32) {
    %c0_i32 = arith.constant 0 : i32
    %c0_i32_0 = arith.constant 0 : i32
    %c0_i32_1 = arith.constant 0 : i32
    return %c0_i32, %c0_i32_0 : i32, i32
  }
  func.func @transform_2(%arg0: i32) -> (i32, i32) {
    %c0_i32 = arith.constant 0 : i32
    %c0_i32_0 = arith.constant 0 : i32
    %c0_i32_1 = arith.constant 0 : i32
    return %c0_i32, %c0_i32_0 : i32, i32
  }
  func.func @transform_3(%arg0: i32) -> (i32, i32) {
    %c0_i32 = arith.constant 0 : i32
    %c0_i32_0 = arith.constant 0 : i32
    %c0_i32_1 = arith.constant 0 : i32
    return %c0_i32, %c0_i32_0 : i32, i32
  }
  func.func @transform_4(%arg0: i32) -> (i32, i32) {
    %c0_i32 = arith.constant 0 : i32
    %c0_i32_0 = arith.constant 0 : i32
    %c0_i32_1 = arith.constant 0 : i32
    return %c0_i32, %c0_i32_0 : i32, i32
  }
  func.func @transform_5(%arg0: i32) -> (i32, i32) {
    %c0_i32 = arith.constant 0 : i32
    %c0_i32_0 = arith.constant 0 : i32
    %c0_i32_1 = arith.constant 0 : i32
    return %c0_i32, %c0_i32_0 : i32, i32
  }
  func.func @transform_6(%arg0: i32) -> (i32, i32) {
    %c0_i32 = arith.constant 0 : i32
    %c0_i32_0 = arith.constant 0 : i32
    %c0_i32_1 = arith.constant 0 : i32
    return %c0_i32, %c0_i32_0 : i32, i32
  }
}

module attributes {stable_mosaic.version = 11 : i64} {
  func.func @_linear_kernel(%arg0: i32, %arg1: memref<2x256xf32, #tpu.memory_space<vmem>>, %arg2: memref<256x7xf32, #tpu.memory_space<vmem>>, %arg3: memref<1x7xf32, #tpu.memory_space<vmem>>, %arg4: memref<2x7xf32, #tpu.memory_space<vmem>>) attributes {dimension_semantics = [#tpu.dimension_semantics<parallel>], iteration_bounds = array<i64: 1>, scalar_prefetch = 0 : i64, scratch_operands = 0 : i64, tpu.core_type = #tpu.core_type<tc>, window_params = [{transform_indices = @transform_0, window_bounds = array<i64: 2, 256>}, {pipeline_mode = #tpu.pipeline_mode<synchronous>, transform_indices = @transform_1, window_bounds = array<i64: 256, 7>}, {pipeline_mode = #tpu.pipeline_mode<synchronous>, transform_indices = @transform_2, window_bounds = array<i64: 1, 7>}, {transform_indices = @transform_3, window_bounds = array<i64: 2, 7>}]} {
    %c0 = arith.constant 0 : index
    %c0_0 = arith.constant 0 : index
    %0 = vector.load %arg1[%c0, %c0_0] : memref<2x256xf32, #tpu.memory_space<vmem>>, vector<2x256xf32>
    %c0_1 = arith.constant 0 : index
    %c0_2 = arith.constant 0 : index
    %1 = vector.load %arg2[%c0_1, %c0_2] : memref<256x7xf32, #tpu.memory_space<vmem>>, vector<256x7xf32>
    %cst = arith.constant dense<0.000000e+00> : vector<2x7xf32>
    %2 = tpu.matmul %0, %1, %cst {dimension_numbers = #tpu.dot_dimension_numbers<[1], [0], [0], [1], [0, 0, 1, 1], [], []>} : vector<2x256xf32>, vector<256x7xf32>, vector<2x7xf32> -> vector<2x7xf32>
    %c0_3 = arith.constant 0 : index
    %c0_4 = arith.constant 0 : index
    %3 = vector.load %arg3[%c0_3, %c0_4] : memref<1x7xf32, #tpu.memory_space<vmem>>, vector<1x7xf32>
    %4 = vector.broadcast %3 : vector<1x7xf32> to vector<2x7xf32>
    %5 = arith.addf %2, %4 : vector<2x7xf32>
    %c0_5 = arith.constant 0 : index
    %c0_6 = arith.constant 0 : index
    %6 = vector.load %arg4[%c0_5, %c0_6] : memref<2x7xf32, #tpu.memory_space<vmem>>, vector<2x7xf32>
    tpu.vector_store %arg4[%c0_5, %c0_6], %5 {strides = array<i32>} : memref<2x7xf32, #tpu.memory_space<vmem>>, vector<2x7xf32>,
    return
  }
  func.func @transform_0(%arg0: i32) -> (i32, i32) {
    %c0_i32 = arith.constant 0 : i32
    %c0_i32_0 = arith.constant 0 : i32
    return %arg0, %c0_i32 : i32, i32
  }
  func.func @transform_1(%arg0: i32) -> (i32, i32) {
    %c0_i32 = arith.constant 0 : i32
    %c0_i32_0 = arith.constant 0 : i32
    %c0_i32_1 = arith.constant 0 : i32
    return %c0_i32, %c0_i32_0 : i32, i32
  }
  func.func @transform_2(%arg0: i32) -> (i32, i32) {
    %c0_i32 = arith.constant 0 : i32
    %c0_i32_0 = arith.constant 0 : i32
    %c0_i32_1 = arith.constant 0 : i32
    return %c0_i32, %c0_i32_0 : i32, i32
  }
  func.func @transform_3(%arg0: i32) -> (i32, i32) {
    %c0_i32 = arith.constant 0 : i32
    %c0_i32_0 = arith.constant 0 : i32
    return %arg0, %c0_i32 : i32, i32
  }
}

</mosaic_0001>

<llo_original>
// kernel: unreal_forward.5
$region0: #{unreal_forward.5}
  #allocation0 [shape = 'u32[]', space=smem, size = 0x4, offset = 0x4, fixed_abs, tag = 'smem constant byte address 0x4 - core index']
  #allocation1 [shape = 'u32[144,128]{1,0:T(1,128)}', space=vmem, size = 0x12000, scoped, tag = 'internal scratch']
  %s0 = inlined_call_operand.vmem [shape: bf16[800,192], index: 0, kind: input, shape index: {}]
  %s1 = inlined_call_operand.vmem [shape: bf16[192,16], index: 1, kind: input, shape index: {}]
  %s2 = inlined_call_operand.vmem [shape: f32[1,16], index: 2, kind: input, shape index: {}]
  %s3 = inlined_call_operand.vmem [shape: f32[800,16], index: 3, kind: output, shape index: {}]
  %s4 = sld [smem:[#allocation0]]
  $region45: #{unreal_forward.5} parent=0
    _
  %s6 = ssub.s32 1, %s4
  %s7 = scalar_select 0, %s6, %s4
  loop: start=0, step=1, limit=4
  $region2: #{unreal_forward.5} parent=0 // loop_pre_header
    _
  $region3: #{unreal_forward.5} parent=0 // loop_header
    %s9 = sphi 0, %s13
    %p10 = scmp.ge.s32.totalorder %s9, 4
    %s19 = sphi 0, %s21
    %s22 = sphi 0, %s19
    %s23 = sphi 0, %s22
    %s39 = sphi 0, %s23
    %s43 = sphi 0, %s43
    %s45 = sphi 0, %s43
    %s46 = sphi 0, %s45
    %s60 = sphi 0, %s46
    %s64 = sphi 0, %s64
    %s66 = sphi 0, %s64
    %s67 = sphi 0, %s66
    %s81 = sphi 0, %s67
    %s87 = sphi 0, %s89
    %s90 = sphi 0, %s87
    %s91 = sphi 0, %s90
    %s107 = sphi 0, %s91
  $region4: #{unreal_forward.5} parent=0 // loop_header_branch
    %12 = sbr.rel (%p10) target = $region8
  $region5: #{unreal_forward.5} parent=0 // loop_body
    %s14 = ssub.s32 %s9, 1
    %s15 = ssub.s32 %s9, 2
    %s16 = sadd.s32 %s9, 1
    %s17 = ssub.s32 %s9, %s16
    %p18 = scmp.eq.s32.totalorder %s17, 0
    %s20 = sadd.s32 %s19, 1
    %s21 = scalar_select %p18, %s19, %s20
    %p24 = pneg %p18
    %p25 = scmp.eq.s32.totalorder %s9, 1
    %p26 = por %p24, %p25
    %p27 = scmp.ne.s32.totalorder %s19, %s22
    %p28 = scmp.eq.s32.totalorder %s9, 0
    %p29 = por %p27, %p28
    %p30 = scmp.ne.s32.totalorder %s19, %s22
    %p31 = scmp.eq.s32.totalorder %s14, 1
    %p32 = por %p30, %p31
    %p33 = scmp.ne.s32.totalorder %s22, %s23
    %p34 = scmp.eq.s32.totalorder %s14, 0
    %p35 = por %p33, %p34
    %p36 = scmp.ne.s32.totalorder %s22, %s23
    %p37 = scmp.eq.s32.totalorder %s15, 1
    %p38 = por %p36, %p37
    %p40 = scmp.ne.s32.totalorder %s23, %s39
    %p41 = scmp.eq.s32.totalorder %s15, 0
    %p42 = por %p40, %p41
    %s44 = sadd.s32 %s43, 1
    %p47 = scmp.eq.s32.totalorder %s9, 1
    %p48 = scmp.ne.s32.totalorder %s43, %s45
    %p49 = scmp.eq.s32.totalorder %s9, 0
    %p50 = por %p48, %p49
    %p51 = scmp.ne.s32.totalorder %s43, %s45
    %p52 = scmp.eq.s32.totalorder %s14, 1
    %p53 = por %p51, %p52
    %p54 = scmp.ne.s32.totalorder %s45, %s46
    %p55 = scmp.eq.s32.totalorder %s14, 0
    %p56 = por %p54, %p55
    %p57 = scmp.ne.s32.totalorder %s45, %s46
    %p58 = scmp.eq.s32.totalorder %s15, 1
    %p59 = por %p57, %p58
    %p61 = scmp.ne.s32.totalorder %s46, %s60
    %p62 = scmp.eq.s32.totalorder %s15, 0
    %p63 = por %p61, %p62
    %s65 = sadd.s32 %s64, 1
    %p68 = scmp.eq.s32.totalorder %s9, 1
    %p69 = scmp.ne.s32.totalorder %s64, %s66
    %p70 = scmp.eq.s32.totalorder %s9, 0
    %p71 = por %p69, %p70
    %p72 = scmp.ne.s32.totalorder %s64, %s66
    %p73 = scmp.eq.s32.totalorder %s14, 1
    %p74 = por %p72, %p73
    %p75 = scmp.ne.s32.totalorder %s66, %s67
    %p76 = scmp.eq.s32.totalorder %s14, 0
    %p77 = por %p75, %p76
    %p78 = scmp.ne.s32.totalorder %s66, %s67
    %p79 = scmp.eq.s32.totalorder %s15, 1
    %p80 = por %p78, %p79
    %p82 = scmp.ne.s32.totalorder %s67, %s81
    %p83 = scmp.eq.s32.totalorder %s15, 0
    %p84 = por %p82, %p83
    %s85 = ssub.s32 %s9, %s16
    %p86 = scmp.eq.s32.totalorder %s85, 0
    %s88 = sadd.s32 %s87, 1
    %s89 = scalar_select %p86, %s87, %s88
    %p92 = pneg %p86
    %p93 = scmp.eq.s32.totalorder %s9, 1
    %p94 = por %p92, %p93
    %p95 = scmp.ne.s32.totalorder %s87, %s90
    %p96 = scmp.eq.s32.totalorder %s9, 0
    %p97 = por %p95, %p96
    %p98 = scmp.ne.s32.totalorder %s87, %s90
    %p99 = scmp.eq.s32.totalorder %s14, 1
    %p100 = por %p98, %p99
    %p101 = scmp.ne.s32.totalorder %s90, %s91
    %p102 = scmp.eq.s32.totalorder %s14, 0
    %p103 = por %p101, %p102
    %p104 = scmp.ne.s32.totalorder %s90, %s91
    %p105 = scmp.eq.s32.totalorder %s15, 1
    %p106 = por %p104, %p105
    %p108 = scmp.ne.s32.totalorder %s91, %s107
    %p109 = scmp.eq.s32.totalorder %s15, 0
    %p110 = por %p108, %p109
    %p111 = scmp.le.s32.totalorder 1, %s9
    %p112 = scmp.lt.s32.totalorder %s9, 3
    %p113 = pnand %p111, %p112
    %p114 = pneg %p113
    // Predicated region
    $region9: #{unreal_forward.5} parent=5 // pred_check
      _
    $region10: #{unreal_forward.5} parent=5 // pred_check_branch
      %116 = sbr.rel (%p113) target = $region12
    $region11: #{unreal_forward.5} parent=5 // pred_region
      %s117 = ssub.s32 %s9, 1
      // Predicated region
      $region13: #{unreal_forward.5} parent=11 // pred_check
        %p118 = pneg %p56
      $region14: #{unreal_forward.5} parent=11 // pred_check_branch
        %120 = sbr.rel (%p118) target = $region16
      $region15: #{unreal_forward.5} parent=11 // pred_region
        _
      $region16: #{unreal_forward.5} parent=11 // pred_fallthru
        _
      // Predicated region
      $region17: #{unreal_forward.5} parent=11 // pred_check
        %p121 = pneg %p77
      $region18: #{unreal_forward.5} parent=11 // pred_check_branch
        %123 = sbr.rel (%p121) target = $region20
      $region19: #{unreal_forward.5} parent=11 // pred_region
        _
      $region20: #{unreal_forward.5} parent=11 // pred_fallthru
        _
    $region12: #{unreal_forward.5} parent=5 // pred_fallthru
      _
    %p124 = scmp.lt.s32.totalorder %s9, 2
    // Predicated region
    $region21: #{unreal_forward.5} parent=5 // pred_check
      %p125 = pneg %p124
    $region22: #{unreal_forward.5} parent=5 // pred_check_branch
      %127 = sbr.rel (%p125) target = $region24
    $region23: #{unreal_forward.5} parent=5 // pred_region
      // Predicated region
      $region25: #{unreal_forward.5} parent=23 // pred_check
        %p128 = pneg %p29
      $region26: #{unreal_forward.5} parent=23 // pred_check_branch
        %130 = sbr.rel (%p128) target = $region28
      $region27: #{unreal_forward.5} parent=23 // pred_region
        %s131 = smul.u32 50, %s9
        %p132 = scmp.lt.s32.totalorder %s131, 99
        %s133 = scalar_select %p132, %s131, 99
        %s134 = smul.addr %s133, 2
        %s135 = smul.addr %s134, 4
        %s136 = scalar_lea.vmem %s0, %s135
        %s137 = smul.u32 50, %s9
      $region28: #{unreal_forward.5} parent=23 // pred_fallthru
        _
    $region24: #{unreal_forward.5} parent=5 // pred_fallthru
      _
    %p138 = scmp.le.s32.totalorder 1, %s9
    %p139 = scmp.lt.s32.totalorder %s9, 3
    %p140 = pnand %p138, %p139
    %p141 = pneg %p140
    // Predicated region
    $region29: #{unreal_forward.5} parent=5 // pred_check
      _
    $region30: #{unreal_forward.5} parent=5 // pred_check_branch
      %143 = sbr.rel (%p140) target = $region32
    $region31: #{unreal_forward.5} parent=5 // pred_region
      %s144 = ssub.s32 %s9, 1
      %s145 = smul.u32 50, %s14
      %p146 = scmp.lt.s32.totalorder %s145, 99
      %s147 = scalar_select %p146, %s145, 99
      %s148 = smul.addr %s147, 2
      %s149 = smul.addr %s148, 4
      %s150 = scalar_lea.vmem %s0, %s149
      %p151 = pneg %p35
      %p152 = pneg %p32
      %p153 = pneg %p56
      %p154 = pneg %p53
      %p155 = pneg %p77
      %p156 = pneg %p74
      %p157 = pneg %p103
      %p158 = pneg %p100
      %s159 = smul.u32 50, %s14
      %p160 = scmp.lt.s32.totalorder %s159, 99
      %s161 = scalar_select %p160, %s159, 99
      %s162 = smul.addr %s161, 8
      %s163 = scalar_lea.vmem %s3, %s162
      %s164 = smul.u32 50, %s14
      %p165 = scmp.lt.s32.totalorder %s164, 99
      %s166 = scalar_select %p165, %s164, 99
      %s167 = smul.addr %s166, 2
      %s168 = smul.addr %s167, 4
      %s169 = scalar_lea.vmem %s0, %s168
      %s170 = smul.u32 50, %s14
      %s171 = smul.u32 50, %s14
      %p172 = scmp.lt.s32.totalorder %s171, 99
      %s173 = scalar_select %p172, %s171, 99
      %s174 = smul.addr %s173, 8
      %s175 = scalar_lea.vmem %s3, %s174
      %s176 = smul.u32 50, %s14
      %v178 = vld [vmem:[%s169] sm:$0xff]
      %v179 = vld [vmem:[%s169 + $0x8] sm:$0xff]
      %v180 = vld [vmem:[%s169 + $0x10] sm:$0xff]
      %v181 = vld [vmem:[%s169 + $0x18] sm:$0xff]
      %v182 = vld [vmem:[%s169 + $0x20] sm:$0xff]
      %v183 = vld [vmem:[%s169 + $0x28] sm:$0xff]
      %v184 = vld [vmem:[%s169 + $0x30] sm:$0xff]
      %v185 = vld [vmem:[%s169 + $0x38] sm:$0xff]
      %v186 = vld [vmem:[%s169 + $0x40] sm:$0xff]
      %v187 = vld [vmem:[%s169 + $0x48] sm:$0xff]
      %v188 = vld [vmem:[%s169 + $0x50] sm:$0xff]
      %v189 = vld [vmem:[%s169 + $0x58] sm:$0xff]
      %v190 = vld [vmem:[%s169 + $0x60] sm:$0xff]
      %v191 = vld [vmem:[%s169 + $0x68] sm:$0xff]
      %v192 = vld [vmem:[%s169 + $0x70] sm:$0xff]
      %v193 = vld [vmem:[%s169 + $0x78] sm:$0xff]
      %v194 = vld [vmem:[%s169 + $0x80] sm:$0xff]
      %v195 = vld [vmem:[%s169 + $0x88] sm:$0xff]
      %v196 = vld [vmem:[%s169 + $0x90] sm:$0xff]
      %v197 = vld [vmem:[%s169 + $0x98] sm:$0xff]
      %v198 = vld [vmem:[%s169 + $0xa0] sm:$0xff]
      %v199 = vld [vmem:[%s169 + $0xa8] sm:$0xff]
      %v200 = vld [vmem:[%s169 + $0xb0] sm:$0xff]
      %v201 = vld [vmem:[%s169 + $0xb8] sm:$0xff]
      %v202 = vld [vmem:[%s169 + $0xc0] sm:$0xff]
      %v203 = vld [vmem:[%s169 + $0xc8] sm:$0xff]
      %v204 = vld [vmem:[%s169 + $0xd0] sm:$0xff]
      %v205 = vld [vmem:[%s169 + $0xd8] sm:$0xff]
      %v206 = vld [vmem:[%s169 + $0xe0] sm:$0xff]
      %v207 = vld [vmem:[%s169 + $0xe8] sm:$0xff]
      %v208 = vld [vmem:[%s169 + $0xf0] sm:$0xff]
      %v209 = vld [vmem:[%s169 + $0xf8] sm:$0xff]
      %v210 = vld [vmem:[%s169 + $0x100] sm:$0xff]
      %v211 = vld [vmem:[%s169 + $0x108] sm:$0xff]
      %v212 = vld [vmem:[%s169 + $0x110] sm:$0xff]
      %v213 = vld [vmem:[%s169 + $0x118] sm:$0xff]
      %v214 = vld [vmem:[%s169 + $0x120] sm:$0xff]
      %v215 = vld [vmem:[%s169 + $0x128] sm:$0xff]
      %v216 = vld [vmem:[%s169 + $0x130] sm:$0xff]
      %v217 = vld [vmem:[%s169 + $0x138] sm:$0xff]
      %v218 = vld [vmem:[%s169 + $0x140] sm:$0xff]
      %v219 = vld [vmem:[%s169 + $0x148] sm:$0xff]
      %v220 = vld [vmem:[%s169 + $0x150] sm:$0xff]
      %v221 = vld [vmem:[%s169 + $0x158] sm:$0xff]
      %v222 = vld [vmem:[%s169 + $0x160] sm:$0xff]
      %v223 = vld [vmem:[%s169 + $0x168] sm:$0xff]
      %v224 = vld [vmem:[%s169 + $0x170] sm:$0xff]
      %v225 = vld [vmem:[%s169 + $0x178] sm:$0xff]
      %v226 = vld [vmem:[%s169 + $0x180] sm:$0xff]
      %v227 = vld [vmem:[%s169 + $0x188] sm:$0xff]
      %v228 = vld [vmem:[%s1] sm:$0xf]
      %v229 = vld [vmem:[%s1 + $0x4] sm:$0xf]
      %v230 = vld [vmem:[%s1 + $0x8] sm:$0xf]
      %v231 = vld [vmem:[%s1 + $0xc] sm:$0xf]
      %v232 = vld [vmem:[%s1 + $0x10] sm:$0xf]
      %v233 = vld [vmem:[%s1 + $0x14] sm:$0xf]
      %v234 = vld [vmem:[%s1 + $0x18] sm:$0xf]
      %v235 = vld [vmem:[%s1 + $0x1c] sm:$0xf]
      %v236 = vld [vmem:[%s1 + $0x20] sm:$0xf]
      %v237 = vld [vmem:[%s1 + $0x24] sm:$0xf]
      %v238 = vld [vmem:[%s1 + $0x28] sm:$0xf]
      %v239 = vld [vmem:[%s1 + $0x2c] sm:$0xf]
      %v240 = vld [vmem:[%s1 + $0x30] sm:$0xf]
      %v241 = vld [vmem:[%s1 + $0x34] sm:$0xf]
      %v242 = vld [vmem:[%s1 + $0x38] sm:$0xf]
      %v243 = vld [vmem:[%s1 + $0x3c] sm:$0xf]
      %v244 = vld [vmem:[%s1 + $0x40] sm:$0xf]
      %v245 = vld [vmem:[%s1 + $0x44] sm:$0xf]
      %v246 = vld [vmem:[%s1 + $0x48] sm:$0xf]
      %v247 = vld [vmem:[%s1 + $0x4c] sm:$0xf]
      %v248 = vld [vmem:[%s1 + $0x50] sm:$0xf]
      %v249 = vld [vmem:[%s1 + $0x54] sm:$0xf]
      %v250 = vld [vmem:[%s1 + $0x58] sm:$0xf]
      %v251 = vld [vmem:[%s1 + $0x5c] sm:$0xf]
      %v252 = vld [vmem:[%s2] sm:$0x1]
      %v254 = vlaneseq
      %v255 = vshrl.u32 %v254, 7
      %v256 = vsub.s32 0, %v255
      %v257 = vrot.slane %v252, %v256
      %v309 = vunpack.c.l.b16 %v178
      %v310 = vunpack.c.h.b16 %v178
      %v311 = vunpack.c.l.b16 %v179
      %v312 = vunpack.c.h.b16 %v179
      %v313 = vunpack.c.l.b16 %v180
      %v314 = vunpack.c.h.b16 %v180
      %v315 = vunpack.c.l.b16 %v181
      %v316 = vunpack.c.h.b16 %v181
      %v317 = vunpack.c.l.b16 %v182
      %v318 = vunpack.c.h.b16 %v182
      %v319 = vunpack.c.l.b16 %v183
      %v320 = vunpack.c.h.b16 %v183
      %v321 = vunpack.c.l.b16 %v184
      %v322 = vunpack.c.h.b16 %v184
      %v323 = vunpack.c.l.b16 %v185
      %v324 = vunpack.c.h.b16 %v185
      %v325 = vunpack.c.l.b16 %v186
      %v326 = vunpack.c.h.b16 %v186
      %v327 = vunpack.c.l.b16 %v187
      %v328 = vunpack.c.h.b16 %v187
      %v329 = vunpack.c.l.b16 %v188
      %v330 = vunpack.c.h.b16 %v188
      %v331 = vunpack.c.l.b16 %v189
      %v332 = vunpack.c.h.b16 %v189
      %v333 = vunpack.c.l.b16 %v190
      %v334 = vunpack.c.h.b16 %v190
      %v335 = vunpack.c.l.b16 %v191
      %v336 = vunpack.c.h.b16 %v191
      %v337 = vunpack.c.l.b16 %v192
      %v338 = vunpack.c.h.b16 %v192
      %v339 = vunpack.c.l.b16 %v193
      %v340 = vunpack.c.h.b16 %v193
      %v341 = vunpack.c.l.b16 %v194
      %v342 = vunpack.c.h.b16 %v194
      %v343 = vunpack.c.l.b16 %v195
      %v344 = vunpack.c.h.b16 %v195
      %v345 = vunpack.c.l.b16 %v196
      %v346 = vunpack.c.h.b16 %v196
      %v347 = vunpack.c.l.b16 %v197
      %v348 = vunpack.c.h.b16 %v197
      %v349 = vunpack.c.l.b16 %v198
      %v350 = vunpack.c.h.b16 %v198
      %v351 = vunpack.c.l.b16 %v199
      %v352 = vunpack.c.h.b16 %v199
      %v353 = vunpack.c.l.b16 %v200
      %v354 = vunpack.c.h.b16 %v200
      %v355 = vunpack.c.l.b16 %v201
      %v356 = vunpack.c.h.b16 %v201
      %v357 = vunpack.c.l.b16 %v202
      %v358 = vunpack.c.h.b16 %v202
      %v359 = vunpack.c.l.b16 %v203
      %v360 = vunpack.c.h.b16 %v203
      %v361 = vunpack.c.l.b16 %v204
      %v362 = vunpack.c.h.b16 %v204
      %v363 = vunpack.c.l.b16 %v205
      %v364 = vunpack.c.h.b16 %v205
      %v365 = vunpack.c.l.b16 %v206
      %v366 = vunpack.c.h.b16 %v206
      %v367 = vunpack.c.l.b16 %v207
      %v368 = vunpack.c.h.b16 %v207
      %v369 = vunpack.c.l.b16 %v208
      %v370 = vunpack.c.h.b16 %v208
      %v371 = vunpack.c.l.b16 %v209
      %v372 = vunpack.c.h.b16 %v209
      %v373 = vunpack.c.l.b16 %v210
      %v374 = vunpack.c.h.b16 %v210
      %v375 = vunpack.c.l.b16 %v211
      %v376 = vunpack.c.h.b16 %v211
      %v377 = vunpack.c.l.b16 %v212
      %v378 = vunpack.c.h.b16 %v212
      %v379 = vunpack.c.l.b16 %v213
      %v380 = vunpack.c.h.b16 %v213
      %v381 = vunpack.c.l.b16 %v214
      %v382 = vunpack.c.h.b16 %v214
      %v383 = vunpack.c.l.b16 %v215
      %v384 = vunpack.c.h.b16 %v215
      %v385 = vunpack.c.l.b16 %v216
      %v386 = vunpack.c.h.b16 %v216
      %v387 = vunpack.c.l.b16 %v217
      %v388 = vunpack.c.h.b16 %v217
      %v389 = vunpack.c.l.b16 %v218
      %v390 = vunpack.c.h.b16 %v218
      %v391 = vunpack.c.l.b16 %v219
      %v392 = vunpack.c.h.b16 %v219
      %v393 = vunpack.c.l.b16 %v220
      %v394 = vunpack.c.h.b16 %v220
      %v395 = vunpack.c.l.b16 %v221
      %v396 = vunpack.c.h.b16 %v221
      %v397 = vunpack.c.l.b16 %v222
      %v398 = vunpack.c.h.b16 %v222
      %v399 = vunpack.c.l.b16 %v223
      %v400 = vunpack.c.h.b16 %v223
      %v401 = vunpack.c.l.b16 %v224
      %v402 = vunpack.c.h.b16 %v224
      %v403 = vunpack.c.l.b16 %v225
      %v404 = vunpack.c.h.b16 %v225
      %v405 = vunpack.c.l.b16 %v226
      %v406 = vunpack.c.h.b16 %v226
      %v407 = vunpack.c.l.b16 %v227
      %v408 = vunpack.c.h.b16 %v227
      %v409 = vpack.c.b16 %v311, %v309
      %v410 = vpack.c.b16 %v312, %v310
      %v411 = vpack.c.b16 %v315, %v313
      %v412 = vpack.c.b16 %v316, %v314
      %v413 = vpack.c.b16 %v319, %v317
      %v414 = vpack.c.b16 %v320, %v318
      %v415 = vpack.c.b16 %v323, %v321
      %v416 = vpack.c.b16 %v324, %v322
      %v417 = vpack.c.b16 %v327, %v325
      %v418 = vpack.c.b16 %v328, %v326
      %v419 = vpack.c.b16 %v331, %v329
      %v420 = vpack.c.b16 %v332, %v330
      %v421 = vpack.c.b16 %v335, %v333
      %v422 = vpack.c.b16 %v336, %v334
      %v423 = vpack.c.b16 %v339, %v337
      %v424 = vpack.c.b16 %v340, %v338
      %v425 = vpack.c.b16 %v343, %v341
      %v426 = vpack.c.b16 %v344, %v342
      %v427 = vpack.c.b16 %v347, %v345
      %v428 = vpack.c.b16 %v348, %v346
      %v429 = vpack.c.b16 %v351, %v349
      %v430 = vpack.c.b16 %v352, %v350
      %v431 = vpack.c.b16 %v355, %v353
      %v432 = vpack.c.b16 %v356, %v354
      %v433 = vpack.c.b16 %v359, %v357
      %v434 = vpack.c.b16 %v360, %v358
      %v435 = vpack.c.b16 %v363, %v361
      %v436 = vpack.c.b16 %v364, %v362
      %v437 = vpack.c.b16 %v367, %v365
      %v438 = vpack.c.b16 %v368, %v366
      %v439 = vpack.c.b16 %v371, %v369
      %v440 = vpack.c.b16 %v372, %v370
      %v441 = vpack.c.b16 %v375, %v373
      %v442 = vpack.c.b16 %v376, %v374
      %v443 = vpack.c.b16 %v379, %v377
      %v444 = vpack.c.b16 %v380, %v378
      %v445 = vpack.c.b16 %v383, %v381
      %v446 = vpack.c.b16 %v384, %v382
      %v447 = vpack.c.b16 %v387, %v385
      %v448 = vpack.c.b16 %v388, %v386
      %v449 = vpack.c.b16 %v391, %v389
      %v450 = vpack.c.b16 %v392, %v390
      %v451 = vpack.c.b16 %v395, %v393
      %v452 = vpack.c.b16 %v396, %v394
      %v453 = vpack.c.b16 %v399, %v397
      %v454 = vpack.c.b16 %v400, %v398
      %v455 = vpack.c.b16 %v403, %v401
      %v456 = vpack.c.b16 %v404, %v402
      %v457 = vpack.c.b16 %v407, %v405
      %v458 = vpack.c.b16 %v408, %v406
      %v508 = vunpack.c.l.b16 %v228
      %v509 = vunpack.c.l.b16 %v229
      %v510 = vunpack.c.l.b16 %v230
      %v511 = vunpack.c.l.b16 %v231
      %v512 = vunpack.c.l.b16 %v232
      %v513 = vunpack.c.l.b16 %v233
      %v514 = vunpack.c.l.b16 %v234
      %v515 = vunpack.c.l.b16 %v235
      %v516 = vunpack.c.l.b16 %v236
      %v517 = vunpack.c.l.b16 %v237
      %v518 = vunpack.c.l.b16 %v238
      %v519 = vunpack.c.l.b16 %v239
      %v520 = vunpack.c.l.b16 %v240
      %v521 = vunpack.c.l.b16 %v241
      %v522 = vunpack.c.l.b16 %v242
      %v523 = vunpack.c.l.b16 %v243
      %v524 = vunpack.c.l.b16 %v244
      %v525 = vunpack.c.l.b16 %v245
      %v526 = vunpack.c.l.b16 %v246
      %v527 = vunpack.c.l.b16 %v247
      %v528 = vunpack.c.l.b16 %v248
      %v529 = vunpack.c.l.b16 %v249
      %v530 = vunpack.c.l.b16 %v250
      %v531 = vunpack.c.l.b16 %v251
      %v532 = vpack.c.b16 %v509, %v508
      %v533 = vpack.c.b16 %v511, %v510
      %v534 = vpack.c.b16 %v513, %v512
      %v535 = vpack.c.b16 %v515, %v514
      %v536 = vpack.c.b16 %v517, %v516
      %v537 = vpack.c.b16 %v519, %v518
      %v538 = vpack.c.b16 %v521, %v520
      %v539 = vpack.c.b16 %v523, %v522
      %v540 = vpack.c.b16 %v525, %v524
      %v541 = vpack.c.b16 %v527, %v526
      %v542 = vpack.c.b16 %v529, %v528
      %v543 = vpack.c.b16 %v531, %v530
      %vm556 = vcmask 523264
      %v558 = vsel %vm556, %v410, 0
      %v561 = vsel %vm556, %v412, 0
      %v564 = vsel %vm556, %v414, 0
      %v567 = vsel %vm556, %v416, 0
      %v570 = vsel %vm556, %v418, 0
      %v573 = vsel %vm556, %v420, 0
      %v576 = vsel %vm556, %v422, 0
      %v579 = vsel %vm556, %v424, 0
      %v582 = vsel %vm556, %v426, 0
      %v585 = vsel %vm556, %v428, 0
      %v588 = vsel %vm556, %v430, 0
      %v591 = vsel %vm556, %v432, 0
      %v594 = vsel %vm556, %v434, 0
      %v597 = vsel %vm556, %v436, 0
      %v600 = vsel %vm556, %v438, 0
      %v603 = vsel %vm556, %v440, 0
      %v606 = vsel %vm556, %v442, 0
      %v609 = vsel %vm556, %v444, 0
      %v612 = vsel %vm556, %v446, 0
      %v615 = vsel %vm556, %v448, 0
      %v618 = vsel %vm556, %v450, 0
      %v621 = vsel %vm556, %v452, 0
      %v624 = vsel %vm556, %v454, 0
      %v627 = vsel %vm556, %v456, 0
      %v630 = vsel %vm556, %v458, 0
      %632 = vmatprep.subr.bf16.mxu0 0
      %633 = vmatpush1.bf16.msra.mxu0 %v532
      %634 = vmatprep.subr.bf16.mxu0 0
      %635 = vmatpush1.bf16.msra.mxu0 %v533
      %636 = vmatprep.subr.bf16.mxu0 0
      %637 = vmatpush1.bf16.msra.mxu0 %v534
      %638 = vmatprep.subr.bf16.mxu0 0
      %639 = vmatpush1.bf16.msra.mxu0 %v535
      %640 = vmatprep.subr.bf16.mxu0 0
      %641 = vmatpush1.bf16.msra.mxu0 %v536
      %642 = vmatprep.subr.bf16.mxu0 0
      %643 = vmatpush1.bf16.msra.mxu0 %v537
      %644 = vmatprep.subr.bf16.mxu0 0
      %645 = vmatpush1.bf16.msra.mxu0 %v538
      %646 = vmatprep.subr.bf16.mxu0 0
      %647 = vmatpush1.bf16.msra.mxu0 %v539
      %648 = vmatprep.subr.bf16.mxu0 0
      %649 = vmatpush1.bf16.msra.mxu0 %v540
      %650 = vmatprep.subr.bf16.mxu0 0
      %651 = vmatpush1.bf16.msra.mxu0 %v541
      %652 = vmatprep.subr.bf16.mxu0 0
      %653 = vmatpush1.bf16.msra.mxu0 %v542
      %654 = vmatprep.subr.bf16.mxu0 0
      %655 = vmatpush1.bf16.msra.mxu0 %v543
      %656 = vmatprep.subr.bf16.mxu0 0
      %657 = vmatpush1.bf16.msra.mxu0 0
      %658 = vmatprep.subr.bf16.mxu0 0
      %659 = vmatpush1.bf16.msra.mxu0 0
      %660 = vmatprep.subr.bf16.mxu0 0
      %661 = vmatpush1.bf16.msra.mxu0 0
      %662 = vmatprep.subr.bf16.mxu0 0
      %663 = vmatpush1.bf16.msra.mxu0 0
      %664 = vmatprep.mubr.bf16.mxu0 %v558
      %665 = vmatmul.mubr.bf16.gmra.mrb[0].mxu0 %v409
      %v666 = vpop.f32.mrb[0].mxu0
      %v667 = vadd.f32 %v257, %v666
      %v668 = vpop.f32.mrb[0].mxu0
      %v669 = vpop.f32.mrb[0].mxu0
      %v670 = vadd.f32 %v257, %v669
      %v671 = vpop.f32.mrb[0].mxu0
      %672 = vmatprep.mubr.bf16.mxu0 %v561
      %673 = vmatmul.mubr.bf16.gmra.mrb[0].mxu0 %v411
      %v674 = vpop.f32.mrb[0].mxu0
      %v675 = vadd.f32 %v257, %v674
      %v676 = vpop.f32.mrb[0].mxu0
      %v677 = vpop.f32.mrb[0].mxu0
      %v678 = vadd.f32 %v257, %v677
      %v679 = vpop.f32.mrb[0].mxu0
      %680 = vmatprep.mubr.bf16.mxu0 %v564
      %681 = vmatmul.mubr.bf16.gmra.mrb[0].mxu0 %v413
      %v682 = vpop.f32.mrb[0].mxu0
      %v683 = vadd.f32 %v257, %v682
      %v684 = vpop.f32.mrb[0].mxu0
      %v685 = vpop.f32.mrb[0].mxu0
      %v686 = vadd.f32 %v257, %v685
      %v687 = vpop.f32.mrb[0].mxu0
      %688 = vmatprep.mubr.bf16.mxu0 %v567
      %689 = vmatmul.mubr.bf16.gmra.mrb[0].mxu0 %v415
      %v690 = vpop.f32.mrb[0].mxu0
      %v691 = vadd.f32 %v257, %v690
      %v692 = vpop.f32.mrb[0].mxu0
      %v693 = vpop.f32.mrb[0].mxu0
      %v694 = vadd.f32 %v257, %v693
      %v695 = vpop.f32.mrb[0].mxu0
      %696 = vmatprep.mubr.bf16.mxu0 %v570
      %697 = vmatmul.mubr.bf16.gmra.mrb[0].mxu0 %v417
      %v698 = vpop.f32.mrb[0].mxu0
      %v699 = vadd.f32 %v257, %v698
      %v700 = vpop.f32.mrb[0].mxu0
      %v701 = vpop.f32.mrb[0].mxu0
      %v702 = vadd.f32 %v257, %v701
      %v703 = vpop.f32.mrb[0].mxu0
      %704 = vmatprep.mubr.bf16.mxu0 %v573
      %705 = vmatmul.mubr.bf16.gmra.mrb[0].mxu0 %v419
      %v706 = vpop.f32.mrb[0].mxu0
      %v707 = vadd.f32 %v257, %v706
      %v708 = vpop.f32.mrb[0].mxu0
      %v709 = vpop.f32.mrb[0].mxu0
      %v710 = vadd.f32 %v257, %v709
      %v711 = vpop.f32.mrb[0].mxu0
      %712 = vmatprep.mubr.bf16.mxu0 %v576
      %713 = vmatmul.mubr.bf16.gmra.mrb[0].mxu0 %v421
      %v714 = vpop.f32.mrb[0].mxu0
      %v715 = vadd.f32 %v257, %v714
      %v716 = vpop.f32.mrb[0].mxu0
      %v717 = vpop.f32.mrb[0].mxu0
      %v718 = vadd.f32 %v257, %v717
      %v719 = vpop.f32.mrb[0].mxu0
      %720 = vmatprep.mubr.bf16.mxu0 %v579
      %721 = vmatmul.mubr.bf16.gmra.mrb[0].mxu0 %v423
      %v722 = vpop.f32.mrb[0].mxu0
      %v723 = vadd.f32 %v257, %v722
      %v724 = vpop.f32.mrb[0].mxu0
      %v725 = vpop.f32.mrb[0].mxu0
      %v726 = vadd.f32 %v257, %v725
      %v727 = vpop.f32.mrb[0].mxu0
      %728 = vmatprep.mubr.bf16.mxu0 %v582
      %729 = vmatmul.mubr.bf16.gmra.mrb[0].mxu0 %v425
      %v730 = vpop.f32.mrb[0].mxu0
      %v731 = vadd.f32 %v257, %v730
      %v732 = vpop.f32.mrb[0].mxu0
      %v733 = vpop.f32.mrb[0].mxu0
      %v734 = vadd.f32 %v257, %v733
      %v735 = vpop.f32.mrb[0].mxu0
      %736 = vmatprep.mubr.bf16.mxu0 %v585
      %737 = vmatmul.mubr.bf16.gmra.mrb[0].mxu0 %v427
      %v738 = vpop.f32.mrb[0].mxu0
      %v739 = vadd.f32 %v257, %v738
      %v740 = vpop.f32.mrb[0].mxu0
      %v741 = vpop.f32.mrb[0].mxu0
      %v742 = vadd.f32 %v257, %v741
      %v743 = vpop.f32.mrb[0].mxu0
      %744 = vmatprep.mubr.bf16.mxu0 %v588
      %745 = vmatmul.mubr.bf16.gmra.mrb[0].mxu0 %v429
      %v746 = vpop.f32.mrb[0].mxu0
      %v747 = vadd.f32 %v257, %v746
      %v748 = vpop.f32.mrb[0].mxu0
      %v749 = vpop.f32.mrb[0].mxu0
      %v750 = vadd.f32 %v257, %v749
      %v751 = vpop.f32.mrb[0].mxu0
      %752 = vmatprep.mubr.bf16.mxu0 %v591
      %753 = vmatmul.mubr.bf16.gmra.mrb[0].mxu0 %v431
      %v754 = vpop.f32.mrb[0].mxu0
      %v755 = vadd.f32 %v257, %v754
      %v756 = vpop.f32.mrb[0].mxu0
      %v757 = vpop.f32.mrb[0].mxu0
      %v758 = vadd.f32 %v257, %v757
      %v759 = vpop.f32.mrb[0].mxu0
      %760 = vmatprep.mubr.bf16.mxu0 %v594
      %761 = vmatmul.mubr.bf16.gmra.mrb[0].mxu0 %v433
      %v762 = vpop.f32.mrb[0].mxu0
      %v763 = vadd.f32 %v257, %v762
      %v764 = vpop.f32.mrb[0].mxu0
      %v765 = vpop.f32.mrb[0].mxu0
      %v766 = vadd.f32 %v257, %v765
      %v767 = vpop.f32.mrb[0].mxu0
      %768 = vmatprep.mubr.bf16.mxu0 %v597
      %769 = vmatmul.mubr.bf16.gmra.mrb[0].mxu0 %v435
      %v770 = vpop.f32.mrb[0].mxu0
      %v771 = vadd.f32 %v257, %v770
      %v772 = vpop.f32.mrb[0].mxu0
      %v773 = vpop.f32.mrb[0].mxu0
      %v774 = vadd.f32 %v257, %v773
      %v775 = vpop.f32.mrb[0].mxu0
      %776 = vmatprep.mubr.bf16.mxu0 %v600
      %777 = vmatmul.mubr.bf16.gmra.mrb[0].mxu0 %v437
      %v778 = vpop.f32.mrb[0].mxu0
      %v779 = vadd.f32 %v257, %v778
      %v780 = vpop.f32.mrb[0].mxu0
      %v781 = vpop.f32.mrb[0].mxu0
      %v782 = vadd.f32 %v257, %v781
      %v783 = vpop.f32.mrb[0].mxu0
      %784 = vmatprep.mubr.bf16.mxu0 %v603
      %785 = vmatmul.mubr.bf16.gmra.mrb[0].mxu0 %v439
      %v786 = vpop.f32.mrb[0].mxu0
      %v787 = vadd.f32 %v257, %v786
      %v788 = vpop.f32.mrb[0].mxu0
      %v789 = vpop.f32.mrb[0].mxu0
      %v790 = vadd.f32 %v257, %v789
      %v791 = vpop.f32.mrb[0].mxu0
      %792 = vmatprep.mubr.bf16.mxu0 %v606
      %793 = vmatmul.mubr.bf16.gmra.mrb[0].mxu0 %v441
      %v794 = vpop.f32.mrb[0].mxu0
      %v795 = vadd.f32 %v257, %v794
      %v796 = vpop.f32.mrb[0].mxu0
      %v797 = vpop.f32.mrb[0].mxu0
      %v798 = vadd.f32 %v257, %v797
      %v799 = vpop.f32.mrb[0].mxu0
      %800 = vmatprep.mubr.bf16.mxu0 %v609
      %801 = vmatmul.mubr.bf16.gmra.mrb[0].mxu0 %v443
      %v802 = vpop.f32.mrb[0].mxu0
      %v803 = vadd.f32 %v257, %v802
      %v804 = vpop.f32.mrb[0].mxu0
      %v805 = vpop.f32.mrb[0].mxu0
      %v806 = vadd.f32 %v257, %v805
      %v807 = vpop.f32.mrb[0].mxu0
      %808 = vmatprep.mubr.bf16.mxu0 %v612
      %809 = vmatmul.mubr.bf16.gmra.mrb[0].mxu0 %v445
      %v810 = vpop.f32.mrb[0].mxu0
      %v811 = vadd.f32 %v257, %v810
      %v812 = vpop.f32.mrb[0].mxu0
      %v813 = vpop.f32.mrb[0].mxu0
      %v814 = vadd.f32 %v257, %v813
      %v815 = vpop.f32.mrb[0].mxu0
      %816 = vmatprep.mubr.bf16.mxu0 %v615
      %817 = vmatmul.mubr.bf16.gmra.mrb[0].mxu0 %v447
      %v818 = vpop.f32.mrb[0].mxu0
      %v819 = vadd.f32 %v257, %v818
      %v820 = vpop.f32.mrb[0].mxu0
      %v821 = vpop.f32.mrb[0].mxu0
      %v822 = vadd.f32 %v257, %v821
      %v823 = vpop.f32.mrb[0].mxu0
      %824 = vmatprep.mubr.bf16.mxu0 %v618
      %825 = vmatmul.mubr.bf16.gmra.mrb[0].mxu0 %v449
      %v826 = vpop.f32.mrb[0].mxu0
      %v827 = vadd.f32 %v257, %v826
      %v828 = vpop.f32.mrb[0].mxu0
      %v829 = vpop.f32.mrb[0].mxu0
      %v830 = vadd.f32 %v257, %v829
      %v831 = vpop.f32.mrb[0].mxu0
      %832 = vmatprep.mubr.bf16.mxu0 %v621
      %833 = vmatmul.mubr.bf16.gmra.mrb[0].mxu0 %v451
      %v834 = vpop.f32.mrb[0].mxu0
      %v835 = vadd.f32 %v257, %v834
      %v836 = vpop.f32.mrb[0].mxu0
      %v837 = vpop.f32.mrb[0].mxu0
      %v838 = vadd.f32 %v257, %v837
      %v839 = vpop.f32.mrb[0].mxu0
      %840 = vmatprep.mubr.bf16.mxu0 %v624
      %841 = vmatmul.mubr.bf16.gmra.mrb[0].mxu0 %v453
      %v842 = vpop.f32.mrb[0].mxu0
      %v843 = vadd.f32 %v257, %v842
      %v844 = vpop.f32.mrb[0].mxu0
      %v845 = vpop.f32.mrb[0].mxu0
      %v846 = vadd.f32 %v257, %v845
      %v847 = vpop.f32.mrb[0].mxu0
      %848 = vmatprep.mubr.bf16.mxu0 %v627
      %849 = vmatmul.mubr.bf16.gmra.mrb[0].mxu0 %v455
      %v850 = vpop.f32.mrb[0].mxu0
      %v851 = vadd.f32 %v257, %v850
      %v852 = vpop.f32.mrb[0].mxu0
      %v853 = vpop.f32.mrb[0].mxu0
      %v854 = vadd.f32 %v257, %v853
      %v855 = vpop.f32.mrb[0].mxu0
      %856 = vmatprep.mubr.bf16.mxu0 %v630
      %857 = vmatmul.mubr.bf16.gmra.mrb[0].mxu0 %v457
      %v858 = vpop.f32.mrb[0].mxu0
      %v859 = vadd.f32 %v257, %v858
      %v860 = vpop.f32.mrb[0].mxu0
      %v861 = vpop.f32.mrb[0].mxu0
      %v862 = vadd.f32 %v257, %v861
      %v863 = vpop.f32.mrb[0].mxu0
      %864 = vdwg.mxu0
      %v865 = vmax.f32 %v667, 0.0
      %v866 = vmax.f32 %v670, 0.0
      %v867 = vmax.f32 %v675, 0.0
      %v868 = vmax.f32 %v678, 0.0
      %v869 = vmax.f32 %v683, 0.0
      %v870 = vmax.f32 %v686, 0.0
      %v871 = vmax.f32 %v691, 0.0
      %v872 = vmax.f32 %v694, 0.0
      %v873 = vmax.f32 %v699, 0.0
      %v874 = vmax.f32 %v702, 0.0
      %v875 = vmax.f32 %v707, 0.0
      %v876 = vmax.f32 %v710, 0.0
      %v877 = vmax.f32 %v715, 0.0
      %v878 = vmax.f32 %v718, 0.0
      %v879 = vmax.f32 %v723, 0.0
      %v880 = vmax.f32 %v726, 0.0
      %v881 = vmax.f32 %v731, 0.0
      %v882 = vmax.f32 %v734, 0.0
      %v883 = vmax.f32 %v739, 0.0
      %v884 = vmax.f32 %v742, 0.0
      %v885 = vmax.f32 %v747, 0.0
      %v886 = vmax.f32 %v750, 0.0
      %v887 = vmax.f32 %v755, 0.0
      %v888 = vmax.f32 %v758, 0.0
      %v889 = vmax.f32 %v763, 0.0
      %v890 = vmax.f32 %v766, 0.0
      %v891 = vmax.f32 %v771, 0.0
      %v892 = vmax.f32 %v774, 0.0
      %v893 = vmax.f32 %v779, 0.0
      %v894 = vmax.f32 %v782, 0.0
      %v895 = vmax.f32 %v787, 0.0
      %v896 = vmax.f32 %v790, 0.0
      %v897 = vmax.f32 %v795, 0.0
      %v898 = vmax.f32 %v798, 0.0
      %v899 = vmax.f32 %v803, 0.0
      %v900 = vmax.f32 %v806, 0.0
      %v901 = vmax.f32 %v811, 0.0
      %v902 = vmax.f32 %v814, 0.0
      %v903 = vmax.f32 %v819, 0.0
      %v904 = vmax.f32 %v822, 0.0
      %v905 = vmax.f32 %v827, 0.0
      %v906 = vmax.f32 %v830, 0.0
      %v907 = vmax.f32 %v835, 0.0
      %v908 = vmax.f32 %v838, 0.0
      %v909 = vmax.f32 %v843, 0.0
      %v910 = vmax.f32 %v846, 0.0
      %v911 = vmax.f32 %v851, 0.0
      %v912 = vmax.f32 %v854, 0.0
      %v913 = vmax.f32 %v859, 0.0
      %v914 = vmax.f32 %v862, 0.0
      %vm915 = vcmask 130048
      %916 = vst.msk [vmem:[%s175] sm:$0xff] %vm915, %v865
      %917 = vst.msk [vmem:[%s175 + $0x8] sm:$0xff] %vm915, %v866
      %918 = vst.msk [vmem:[%s175 + $0x10] sm:$0xff] %vm915, %v867
      %919 = vst.msk [vmem:[%s175 + $0x18] sm:$0xff] %vm915, %v868
      %920 = vst.msk [vmem:[%s175 + $0x20] sm:$0xff] %vm915, %v869
      %921 = vst.msk [vmem:[%s175 + $0x28] sm:$0xff] %vm915, %v870
      %922 = vst.msk [vmem:[%s175 + $0x30] sm:$0xff] %vm915, %v871
      %923 = vst.msk [vmem:[%s175 + $0x38] sm:$0xff] %vm915, %v872
      %924 = vst.msk [vmem:[%s175 + $0x40] sm:$0xff] %vm915, %v873
      %925 = vst.msk [vmem:[%s175 + $0x48] sm:$0xff] %vm915, %v874
      %926 = vst.msk [vmem:[%s175 + $0x50] sm:$0xff] %vm915, %v875
      %927 = vst.msk [vmem:[%s175 + $0x58] sm:$0xff] %vm915, %v876
      %928 = vst.msk [vmem:[%s175 + $0x60] sm:$0xff] %vm915, %v877
      %929 = vst.msk [vmem:[%s175 + $0x68] sm:$0xff] %vm915, %v878
      %930 = vst.msk [vmem:[%s175 + $0x70] sm:$0xff] %vm915, %v879
      %931 = vst.msk [vmem:[%s175 + $0x78] sm:$0xff] %vm915, %v880
      %932 = vst.msk [vmem:[%s175 + $0x80] sm:$0xff] %vm915, %v881
      %933 = vst.msk [vmem:[%s175 + $0x88] sm:$0xff] %vm915, %v882
      %934 = vst.msk [vmem:[%s175 + $0x90] sm:$0xff] %vm915, %v883
      %935 = vst.msk [vmem:[%s175 + $0x98] sm:$0xff] %vm915, %v884
      %936 = vst.msk [vmem:[%s175 + $0xa0] sm:$0xff] %vm915, %v885
      %937 = vst.msk [vmem:[%s175 + $0xa8] sm:$0xff] %vm915, %v886
      %938 = vst.msk [vmem:[%s175 + $0xb0] sm:$0xff] %vm915, %v887
      %939 = vst.msk [vmem:[%s175 + $0xb8] sm:$0xff] %vm915, %v888
      %940 = vst.msk [vmem:[%s175 + $0xc0] sm:$0xff] %vm915, %v889
      %941 = vst.msk [vmem:[%s175 + $0xc8] sm:$0xff] %vm915, %v890
      %942 = vst.msk [vmem:[%s175 + $0xd0] sm:$0xff] %vm915, %v891
      %943 = vst.msk [vmem:[%s175 + $0xd8] sm:$0xff] %vm915, %v892
      %944 = vst.msk [vmem:[%s175 + $0xe0] sm:$0xff] %vm915, %v893
      %945 = vst.msk [vmem:[%s175 + $0xe8] sm:$0xff] %vm915, %v894
      %946 = vst.msk [vmem:[%s175 + $0xf0] sm:$0xff] %vm915, %v895
      %947 = vst.msk [vmem:[%s175 + $0xf8] sm:$0xff] %vm915, %v896
      %948 = vst.msk [vmem:[%s175 + $0x100] sm:$0xff] %vm915, %v897
      %949 = vst.msk [vmem:[%s175 + $0x108] sm:$0xff] %vm915, %v898
      %950 = vst.msk [vmem:[%s175 + $0x110] sm:$0xff] %vm915, %v899
      %951 = vst.msk [vmem:[%s175 + $0x118] sm:$0xff] %vm915, %v900
      %952 = vst.msk [vmem:[%s175 + $0x120] sm:$0xff] %vm915, %v901
      %953 = vst.msk [vmem:[%s175 + $0x128] sm:$0xff] %vm915, %v902
      %954 = vst.msk [vmem:[%s175 + $0x130] sm:$0xff] %vm915, %v903
      %955 = vst.msk [vmem:[%s175 + $0x138] sm:$0xff] %vm915, %v904
      %956 = vst.msk [vmem:[%s175 + $0x140] sm:$0xff] %vm915, %v905
      %957 = vst.msk [vmem:[%s175 + $0x148] sm:$0xff] %vm915, %v906
      %958 = vst.msk [vmem:[%s175 + $0x150] sm:$0xff] %vm915, %v907
      %959 = vst.msk [vmem:[%s175 + $0x158] sm:$0xff] %vm915, %v908
      %960 = vst.msk [vmem:[%s175 + $0x160] sm:$0xff] %vm915, %v909
      %961 = vst.msk [vmem:[%s175 + $0x168] sm:$0xff] %vm915, %v910
      %962 = vst.msk [vmem:[%s175 + $0x170] sm:$0xff] %vm915, %v911
      %963 = vst.msk [vmem:[%s175 + $0x178] sm:$0xff] %vm915, %v912
      %964 = vst.msk [vmem:[%s175 + $0x180] sm:$0xff] %vm915, %v913
      %965 = vst.msk [vmem:[%s175 + $0x188] sm:$0xff] %vm915, %v914
      %s966 = smul.u32 50, %s14
      %p967 = scmp.lt.s32.totalorder %s966, 99
      %s968 = scalar_select %p967, %s966, 99
      %s969 = smul.addr %s968, 8
      %s970 = scalar_lea.vmem %s3, %s969
      // Predicated region
      $region33: #{unreal_forward.5} parent=31 // pred_check
        %p971 = pneg %p100
      $region34: #{unreal_forward.5} parent=31 // pred_check_branch
        %973 = sbr.rel (%p971) target = $region36
      $region35: #{unreal_forward.5} parent=31 // pred_region
        %s974 = smul.u32 50, %s14
      $region36: #{unreal_forward.5} parent=31 // pred_fallthru
        _
    $region32: #{unreal_forward.5} parent=5 // pred_fallthru
      _
    %p975 = scmp.le.s32.totalorder 2, %s9
    // Predicated region
    $region37: #{unreal_forward.5} parent=5 // pred_check
      %p976 = pneg %p975
    $region38: #{unreal_forward.5} parent=5 // pred_check_branch
      %978 = sbr.rel (%p976) target = $region40
    $region39: #{unreal_forward.5} parent=5 // pred_region
      %s979 = ssub.s32 %s9, 2
      // Predicated region
      $region41: #{unreal_forward.5} parent=39 // pred_check
        %p980 = pneg %p106
      $region42: #{unreal_forward.5} parent=39 // pred_check_branch
        %982 = sbr.rel (%p980) target = $region44
      $region43: #{unreal_forward.5} parent=39 // pred_region
        %s983 = smul.u32 50, %s15
        %p984 = scmp.lt.s32.totalorder %s983, 99
        %s985 = scalar_select %p984, %s983, 99
        %s986 = smul.addr %s985, 8
        %s987 = scalar_lea.vmem %s3, %s986
      $region44: #{unreal_forward.5} parent=39 // pred_fallthru
        _
    $region40: #{unreal_forward.5} parent=5 // pred_fallthru
      _
  $region6: #{unreal_forward.5} parent=0 // loop_footer
    %s13 = sadd.s32 1, %s9
  $region7: #{unreal_forward.5} parent=0 // loop_footer_branch
    %8 = sbr.rel target = $region3
  $region8: #{unreal_forward.5} parent=0 // loop_exit
    _

// kernel: unreal_forward.6
$region0: #{unreal_forward.6}
  #allocation0 [shape = 'u32[]', space=smem, size = 0x4, offset = 0x4, fixed_abs, tag = 'smem constant byte address 0x4 - core index']
  #allocation1 [shape = 'u32[144,128]{1,0:T(1,128)}', space=vmem, size = 0x12000, scoped, tag = 'internal scratch']
  %s0 = inlined_call_operand.vmem [shape: bf16[162,256], index: 0, kind: input, shape index: {}]
  %s1 = inlined_call_operand.vmem [shape: bf16[256,32], index: 1, kind: input, shape index: {}]
  %s2 = inlined_call_operand.vmem [shape: f32[1,32], index: 2, kind: input, shape index: {}]
  %s3 = inlined_call_operand.vmem [shape: f32[162,32], index: 3, kind: output, shape index: {}]
  %s4 = sld [smem:[#allocation0]]
  $region22: #{unreal_forward.6} parent=0
    _
  %s6 = ssub.s32 1, %s4
  %s7 = scalar_select 0, %s6, %s4
  // Predicated region
  $region2: #{unreal_forward.6} parent=0 // pred_check
    _
  $region3: #{unreal_forward.6} parent=0 // pred_check_branch
    %9 = sbr.rel (0) target = $region5
  $region4: #{unreal_forward.6} parent=0 // pred_region
    _
  $region5: #{unreal_forward.6} parent=0 // pred_fallthru
    _
  // Predicated region
  $region6: #{unreal_forward.6} parent=0 // pred_check
    _
  $region7: #{unreal_forward.6} parent=0 // pred_check_branch
    %11 = sbr.rel (0) target = $region9
  $region8: #{unreal_forward.6} parent=0 // pred_region
    _
  $region9: #{unreal_forward.6} parent=0 // pred_fallthru
    _
  // Predicated region
  $region10: #{unreal_forward.6} parent=0 // pred_check
    _
  $region11: #{unreal_forward.6} parent=0 // pred_check_branch
    %13 = sbr.rel (0) target = $region13
  $region12: #{unreal_forward.6} parent=0 // pred_region
    _
  $region13: #{unreal_forward.6} parent=0 // pred_fallthru
    _
  %v15 = vld [vmem:[%s0] sm:$0xff]
  %v16 = vld [vmem:[%s0 + $0x8] sm:$0xff]
  %v17 = vld [vmem:[%s0 + $0x10] sm:$0xff]
  %v18 = vld [vmem:[%s0 + $0x18] sm:$0xff]
  %v19 = vld [vmem:[%s0 + $0x20] sm:$0xff]
  %v20 = vld [vmem:[%s0 + $0x28] sm:$0xff]
  %v21 = vld [vmem:[%s0 + $0x30] sm:$0xff]
  %v22 = vld [vmem:[%s0 + $0x38] sm:$0xff]
  %v23 = vld [vmem:[%s0 + $0x40] sm:$0xff]
  %v24 = vld [vmem:[%s0 + $0x48] sm:$0xff]
  %v25 = vld [vmem:[%s0 + $0x50] sm:$0xff]
  %v26 = vld [vmem:[%s0 + $0x58] sm:$0xff]
  %v27 = vld [vmem:[%s0 + $0x60] sm:$0xff]
  %v28 = vld [vmem:[%s0 + $0x68] sm:$0xff]
  %v29 = vld [vmem:[%s0 + $0x70] sm:$0xff]
  %v30 = vld [vmem:[%s0 + $0x78] sm:$0xff]
  %v31 = vld [vmem:[%s0 + $0x80] sm:$0xff]
  %v32 = vld [vmem:[%s0 + $0x88] sm:$0xff]
  %v33 = vld [vmem:[%s0 + $0x90] sm:$0xff]
  %v34 = vld [vmem:[%s0 + $0x98] sm:$0xff]
  %v35 = vld [vmem:[%s0 + $0xa0] sm:$0x11]
  %v36 = vld [vmem:[%s1] sm:$0xf]
  %v37 = vld [vmem:[%s1 + $0x4] sm:$0xf]
  %v38 = vld [vmem:[%s1 + $0x8] sm:$0xf]
  %v39 = vld [vmem:[%s1 + $0xc] sm:$0xf]
  %v40 = vld [vmem:[%s1 + $0x10] sm:$0xf]
  %v41 = vld [vmem:[%s1 + $0x14] sm:$0xf]
  %v42 = vld [vmem:[%s1 + $0x18] sm:$0xf]
  %v43 = vld [vmem:[%s1 + $0x1c] sm:$0xf]
  %v44 = vld [vmem:[%s1 + $0x20] sm:$0xf]
  %v45 = vld [vmem:[%s1 + $0x24] sm:$0xf]
  %v46 = vld [vmem:[%s1 + $0x28] sm:$0xf]
  %v47 = vld [vmem:[%s1 + $0x2c] sm:$0xf]
  %v48 = vld [vmem:[%s1 + $0x30] sm:$0xf]
  %v49 = vld [vmem:[%s1 + $0x34] sm:$0xf]
  %v50 = vld [vmem:[%s1 + $0x38] sm:$0xf]
  %v51 = vld [vmem:[%s1 + $0x3c] sm:$0xf]
  %v52 = vld [vmem:[%s1 + $0x40] sm:$0xf]
  %v53 = vld [vmem:[%s1 + $0x44] sm:$0xf]
  %v54 = vld [vmem:[%s1 + $0x48] sm:$0xf]
  %v55 = vld [vmem:[%s1 + $0x4c] sm:$0xf]
  %v56 = vld [vmem:[%s1 + $0x50] sm:$0xf]
  %v57 = vld [vmem:[%s1 + $0x54] sm:$0xf]
  %v58 = vld [vmem:[%s1 + $0x58] sm:$0xf]
  %v59 = vld [vmem:[%s1 + $0x5c] sm:$0xf]
  %v60 = vld [vmem:[%s1 + $0x60] sm:$0xf]
  %v61 = vld [vmem:[%s1 + $0x64] sm:$0xf]
  %v62 = vld [vmem:[%s1 + $0x68] sm:$0xf]
  %v63 = vld [vmem:[%s1 + $0x6c] sm:$0xf]
  %v64 = vld [vmem:[%s1 + $0x70] sm:$0xf]
  %v65 = vld [vmem:[%s1 + $0x74] sm:$0xf]
  %v66 = vld [vmem:[%s1 + $0x78] sm:$0xf]
  %v67 = vld [vmem:[%s1 + $0x7c] sm:$0xf]
  %v68 = vld [vmem:[%s2] sm:$0x1]
  %v70 = vlaneseq
  %v71 = vshrl.u32 %v70, 7
  %v72 = vsub.s32 0, %v71
  %v73 = vrot.slane %v68, %v72
  %v96 = vunpack.c.l.b16 %v15
  %v97 = vunpack.c.h.b16 %v15
  %v98 = vunpack.c.l.b16 %v16
  %v99 = vunpack.c.h.b16 %v16
  %v100 = vunpack.c.l.b16 %v17
  %v101 = vunpack.c.h.b16 %v17
  %v102 = vunpack.c.l.b16 %v18
  %v103 = vunpack.c.h.b16 %v18
  %v104 = vunpack.c.l.b16 %v19
  %v105 = vunpack.c.h.b16 %v19
  %v106 = vunpack.c.l.b16 %v20
  %v107 = vunpack.c.h.b16 %v20
  %v108 = vunpack.c.l.b16 %v21
  %v109 = vunpack.c.h.b16 %v21
  %v110 = vunpack.c.l.b16 %v22
  %v111 = vunpack.c.h.b16 %v22
  %v112 = vunpack.c.l.b16 %v23
  %v113 = vunpack.c.h.b16 %v23
  %v114 = vunpack.c.l.b16 %v24
  %v115 = vunpack.c.h.b16 %v24
  %v116 = vunpack.c.l.b16 %v25
  %v117 = vunpack.c.h.b16 %v25
  %v118 = vunpack.c.l.b16 %v26
  %v119 = vunpack.c.h.b16 %v26
  %v120 = vunpack.c.l.b16 %v27
  %v121 = vunpack.c.h.b16 %v27
  %v122 = vunpack.c.l.b16 %v28
  %v123 = vunpack.c.h.b16 %v28
  %v124 = vunpack.c.l.b16 %v29
  %v125 = vunpack.c.h.b16 %v29
  %v126 = vunpack.c.l.b16 %v30
  %v127 = vunpack.c.h.b16 %v30
  %v128 = vunpack.c.l.b16 %v31
  %v129 = vunpack.c.h.b16 %v31
  %v130 = vunpack.c.l.b16 %v32
  %v131 = vunpack.c.h.b16 %v32
  %v132 = vunpack.c.l.b16 %v33
  %v133 = vunpack.c.h.b16 %v33
  %v134 = vunpack.c.l.b16 %v34
  %v135 = vunpack.c.h.b16 %v34
  %v136 = vunpack.c.l.b16 %v35
  %v137 = vunpack.c.h.b16 %v35
  %v138 = vpack.c.b16 %v98, %v96
  %v139 = vpack.c.b16 %v99, %v97
  %v140 = vpack.c.b16 %v102, %v100
  %v141 = vpack.c.b16 %v103, %v101
  %v142 = vpack.c.b16 %v106, %v104
  %v143 = vpack.c.b16 %v107, %v105
  %v144 = vpack.c.b16 %v110, %v108
  %v145 = vpack.c.b16 %v111, %v109
  %v146 = vpack.c.b16 %v114, %v112
  %v147 = vpack.c.b16 %v115, %v113
  %v148 = vpack.c.b16 %v118, %v116
  %v149 = vpack.c.b16 %v119, %v117
  %v150 = vpack.c.b16 %v122, %v120
  %v151 = vpack.c.b16 %v123, %v121
  %v152 = vpack.c.b16 %v126, %v124
  %v153 = vpack.c.b16 %v127, %v125
  %v154 = vpack.c.b16 %v130, %v128
  %v155 = vpack.c.b16 %v131, %v129
  %v156 = vpack.c.b16 %v134, %v132
  %v157 = vpack.c.b16 %v135, %v133
  %v158 = vpack.c.b16 %v136, %v136
  %v159 = vpack.c.b16 %v137, %v137
  %v214 = vunpack.c.l.b16 %v36
  %v215 = vunpack.c.l.b16 %v37
  %v216 = vunpack.c.l.b16 %v38
  %v217 = vunpack.c.l.b16 %v39
  %v218 = vunpack.c.l.b16 %v40
  %v219 = vunpack.c.l.b16 %v41
  %v220 = vunpack.c.l.b16 %v42
  %v221 = vunpack.c.l.b16 %v43
  %v222 = vunpack.c.l.b16 %v44
  %v223 = vunpack.c.l.b16 %v45
  %v224 = vunpack.c.l.b16 %v46
  %v225 = vunpack.c.l.b16 %v47
  %v226 = vunpack.c.l.b16 %v48
  %v227 = vunpack.c.l.b16 %v49
  %v228 = vunpack.c.l.b16 %v50
  %v229 = vunpack.c.l.b16 %v51
  %v230 = vunpack.c.l.b16 %v52
  %v231 = vunpack.c.l.b16 %v53
  %v232 = vunpack.c.l.b16 %v54
  %v233 = vunpack.c.l.b16 %v55
  %v234 = vunpack.c.l.b16 %v56
  %v235 = vunpack.c.l.b16 %v57
  %v236 = vunpack.c.l.b16 %v58
  %v237 = vunpack.c.l.b16 %v59
  %v238 = vunpack.c.l.b16 %v60
  %v239 = vunpack.c.l.b16 %v61
  %v240 = vunpack.c.l.b16 %v62
  %v241 = vunpack.c.l.b16 %v63
  %v242 = vunpack.c.l.b16 %v64
  %v243 = vunpack.c.l.b16 %v65
  %v244 = vunpack.c.l.b16 %v66
  %v245 = vunpack.c.l.b16 %v67
  %v246 = vpack.c.b16 %v215, %v214
  %v247 = vpack.c.b16 %v217, %v216
  %v248 = vpack.c.b16 %v219, %v218
  %v249 = vpack.c.b16 %v221, %v220
  %v250 = vpack.c.b16 %v223, %v222
  %v251 = vpack.c.b16 %v225, %v224
  %v252 = vpack.c.b16 %v227, %v226
  %v253 = vpack.c.b16 %v229, %v228
  %v254 = vpack.c.b16 %v231, %v230
  %v255 = vpack.c.b16 %v233, %v232
  %v256 = vpack.c.b16 %v235, %v234
  %v257 = vpack.c.b16 %v237, %v236
  %v258 = vpack.c.b16 %v239, %v238
  %v259 = vpack.c.b16 %v241, %v240
  %v260 = vpack.c.b16 %v243, %v242
  %v261 = vpack.c.b16 %v245, %v244
  %278 = vmatprep.subr.bf16.mxu0 0
  %279 = vmatpush1.bf16.msra.mxu0 %v246
  %280 = vmatprep.subr.bf16.mxu0 0
  %281 = vmatpush1.bf16.msra.mxu0 %v247
  %282 = vmatprep.subr.bf16.mxu0 0
  %283 = vmatpush1.bf16.msra.mxu0 %v248
  %284 = vmatprep.subr.bf16.mxu0 0
  %285 = vmatpush1.bf16.msra.mxu0 %v249
  %286 = vmatprep.subr.bf16.mxu0 0
  %287 = vmatpush1.bf16.msra.mxu0 %v250
  %288 = vmatprep.subr.bf16.mxu0 0
  %289 = vmatpush1.bf16.msra.mxu0 %v251
  %290 = vmatprep.subr.bf16.mxu0 0
  %291 = vmatpush1.bf16.msra.mxu0 %v252
  %292 = vmatprep.subr.bf16.mxu0 0
  %293 = vmatpush1.bf16.msra.mxu0 %v253
  %294 = vmatprep.subr.bf16.mxu0 0
  %295 = vmatpush1.bf16.msra.mxu0 %v254
  %296 = vmatprep.subr.bf16.mxu0 0
  %297 = vmatpush1.bf16.msra.mxu0 %v255
  %298 = vmatprep.subr.bf16.mxu0 0
  %299 = vmatpush1.bf16.msra.mxu0 %v256
  %300 = vmatprep.subr.bf16.mxu0 0
  %301 = vmatpush1.bf16.msra.mxu0 %v257
  %302 = vmatprep.subr.bf16.mxu0 0
  %303 = vmatpush1.bf16.msra.mxu0 %v258
  %304 = vmatprep.subr.bf16.mxu0 0
  %305 = vmatpush1.bf16.msra.mxu0 %v259
  %306 = vmatprep.subr.bf16.mxu0 0
  %307 = vmatpush1.bf16.msra.mxu0 %v260
  %308 = vmatprep.subr.bf16.mxu0 0
  %309 = vmatpush1.bf16.msra.mxu0 %v261
  %310 = vmatprep.mubr.bf16.mxu0 %v139
  %311 = vmatmul.mubr.bf16.gmra.mrb[0].mxu0 %v138
  %v312 = vpop.f32.mrb[0].mxu0
  %v313 = vadd.f32 %v73, %v312
  %v314 = vpop.f32.mrb[0].mxu0
  %v315 = vpop.f32.mrb[0].mxu0
  %v316 = vadd.f32 %v73, %v315
  %v317 = vpop.f32.mrb[0].mxu0
  %318 = vmatprep.mubr.bf16.mxu0 %v141
  %319 = vmatmul.mubr.bf16.gmra.mrb[0].mxu0 %v140
  %v320 = vpop.f32.mrb[0].mxu0
  %v321 = vadd.f32 %v73, %v320
  %v322 = vpop.f32.mrb[0].mxu0
  %v323 = vpop.f32.mrb[0].mxu0
  %v324 = vadd.f32 %v73, %v323
  %v325 = vpop.f32.mrb[0].mxu0
  %326 = vmatprep.mubr.bf16.mxu0 %v143
  %327 = vmatmul.mubr.bf16.gmra.mrb[0].mxu0 %v142
  %v328 = vpop.f32.mrb[0].mxu0
  %v329 = vadd.f32 %v73, %v328
  %v330 = vpop.f32.mrb[0].mxu0
  %v331 = vpop.f32.mrb[0].mxu0
  %v332 = vadd.f32 %v73, %v331
  %v333 = vpop.f32.mrb[0].mxu0
  %334 = vmatprep.mubr.bf16.mxu0 %v145
  %335 = vmatmul.mubr.bf16.gmra.mrb[0].mxu0 %v144
  %v336 = vpop.f32.mrb[0].mxu0
  %v337 = vadd.f32 %v73, %v336
  %v338 = vpop.f32.mrb[0].mxu0
  %v339 = vpop.f32.mrb[0].mxu0
  %v340 = vadd.f32 %v73, %v339
  %v341 = vpop.f32.mrb[0].mxu0
  %342 = vmatprep.mubr.bf16.mxu0 %v147
  %343 = vmatmul.mubr.bf16.gmra.mrb[0].mxu0 %v146
  %v344 = vpop.f32.mrb[0].mxu0
  %v345 = vadd.f32 %v73, %v344
  %v346 = vpop.f32.mrb[0].mxu0
  %v347 = vpop.f32.mrb[0].mxu0
  %v348 = vadd.f32 %v73, %v347
  %v349 = vpop.f32.mrb[0].mxu0
  %350 = vmatprep.mubr.bf16.mxu0 %v149
  %351 = vmatmul.mubr.bf16.gmra.mrb[0].mxu0 %v148
  %v352 = vpop.f32.mrb[0].mxu0
  %v353 = vadd.f32 %v73, %v352
  %v354 = vpop.f32.mrb[0].mxu0
  %v355 = vpop.f32.mrb[0].mxu0
  %v356 = vadd.f32 %v73, %v355
  %v357 = vpop.f32.mrb[0].mxu0
  %358 = vmatprep.mubr.bf16.mxu0 %v151
  %359 = vmatmul.mubr.bf16.gmra.mrb[0].mxu0 %v150
  %v360 = vpop.f32.mrb[0].mxu0
  %v361 = vadd.f32 %v73, %v360
  %v362 = vpop.f32.mrb[0].mxu0
  %v363 = vpop.f32.mrb[0].mxu0
  %v364 = vadd.f32 %v73, %v363
  %v365 = vpop.f32.mrb[0].mxu0
  %366 = vmatprep.mubr.bf16.mxu0 %v153
  %367 = vmatmul.mubr.bf16.gmra.mrb[0].mxu0 %v152
  %v368 = vpop.f32.mrb[0].mxu0
  %v369 = vadd.f32 %v73, %v368
  %v370 = vpop.f32.mrb[0].mxu0
  %v371 = vpop.f32.mrb[0].mxu0
  %v372 = vadd.f32 %v73, %v371
  %v373 = vpop.f32.mrb[0].mxu0
  %374 = vmatprep.mubr.bf16.mxu0 %v155
  %375 = vmatmul.mubr.bf16.gmra.mrb[0].mxu0 %v154
  %v376 = vpop.f32.mrb[0].mxu0
  %v377 = vadd.f32 %v73, %v376
  %v378 = vpop.f32.mrb[0].mxu0
  %v379 = vpop.f32.mrb[0].mxu0
  %v380 = vadd.f32 %v73, %v379
  %v381 = vpop.f32.mrb[0].mxu0
  %382 = vmatprep.mubr.bf16.mxu0 %v157
  %383 = vmatmul.mubr.bf16.gmra.mrb[0].mxu0 %v156
  %v384 = vpop.f32.mrb[0].mxu0
  %v385 = vadd.f32 %v73, %v384
  %v386 = vpop.f32.mrb[0].mxu0
  %v387 = vpop.f32.mrb[0].mxu0
  %v388 = vadd.f32 %v73, %v387
  %v389 = vpop.f32.mrb[0].mxu0
  %390 = vmatprep.mubr.bf16.mxu0 %v159
  %391 = vmatmul.mubr.bf16.gmra.mrb[0].mxu0 %v158
  %v392 = vpop.f32.mrb[0].mxu0
  %v393 = vadd.f32 %v73, %v392
  %v394 = vpop.f32.mrb[0].mxu0
  %v395 = vpop.f32.mrb[0].mxu0
  %v396 = vpop.f32.mrb[0].mxu0
  %397 = vdwg.mxu0
  %v398 = vmax.f32 %v313, 0.0
  %v399 = vmax.f32 %v316, 0.0
  %v400 = vmax.f32 %v321, 0.0
  %v401 = vmax.f32 %v324, 0.0
  %v402 = vmax.f32 %v329, 0.0
  %v403 = vmax.f32 %v332, 0.0
  %v404 = vmax.f32 %v337, 0.0
  %v405 = vmax.f32 %v340, 0.0
  %v406 = vmax.f32 %v345, 0.0
  %v407 = vmax.f32 %v348, 0.0
  %v408 = vmax.f32 %v353, 0.0
  %v409 = vmax.f32 %v356, 0.0
  %v410 = vmax.f32 %v361, 0.0
  %v411 = vmax.f32 %v364, 0.0
  %v412 = vmax.f32 %v369, 0.0
  %v413 = vmax.f32 %v372, 0.0
  %v414 = vmax.f32 %v377, 0.0
  %v415 = vmax.f32 %v380, 0.0
  %v416 = vmax.f32 %v385, 0.0
  %v417 = vmax.f32 %v388, 0.0
  %v418 = vmax.f32 %v393, 0.0
  %vm419 = vcmask 261120
  %420 = vst.msk [vmem:[%s3] sm:$0xff] %vm419, %v398
  %421 = vst.msk [vmem:[%s3 + $0x8] sm:$0xff] %vm419, %v399
  %422 = vst.msk [vmem:[%s3 + $0x10] sm:$0xff] %vm419, %v400
  %423 = vst.msk [vmem:[%s3 + $0x18] sm:$0xff] %vm419, %v401
  %424 = vst.msk [vmem:[%s3 + $0x20] sm:$0xff] %vm419, %v402
  %425 = vst.msk [vmem:[%s3 + $0x28] sm:$0xff] %vm419, %v403
  %426 = vst.msk [vmem:[%s3 + $0x30] sm:$0xff] %vm419, %v404
  %427 = vst.msk [vmem:[%s3 + $0x38] sm:$0xff] %vm419, %v405
  %428 = vst.msk [vmem:[%s3 + $0x40] sm:$0xff] %vm419, %v406
  %429 = vst.msk [vmem:[%s3 + $0x48] sm:$0xff] %vm419, %v407
  %430 = vst.msk [vmem:[%s3 + $0x50] sm:$0xff] %vm419, %v408
  %431 = vst.msk [vmem:[%s3 + $0x58] sm:$0xff] %vm419, %v409
  %432 = vst.msk [vmem:[%s3 + $0x60] sm:$0xff] %vm419, %v410
  %433 = vst.msk [vmem:[%s3 + $0x68] sm:$0xff] %vm419, %v411
  %434 = vst.msk [vmem:[%s3 + $0x70] sm:$0xff] %vm419, %v412
  %435 = vst.msk [vmem:[%s3 + $0x78] sm:$0xff] %vm419, %v413
  %436 = vst.msk [vmem:[%s3 + $0x80] sm:$0xff] %vm419, %v414
  %437 = vst.msk [vmem:[%s3 + $0x88] sm:$0xff] %vm419, %v415
  %438 = vst.msk [vmem:[%s3 + $0x90] sm:$0xff] %vm419, %v416
  %439 = vst.msk [vmem:[%s3 + $0x98] sm:$0xff] %vm419, %v417
  %vm440 = vcmask 254976
  %441 = vst.msk [vmem:[%s3 + $0xa0] sm:$0x3] %vm440, %v418
  // Predicated region
  $region14: #{unreal_forward.6} parent=0 // pred_check
    _
  $region15: #{unreal_forward.6} parent=0 // pred_check_branch
    %443 = sbr.rel (0) target = $region17
  $region16: #{unreal_forward.6} parent=0 // pred_region
    _
  $region17: #{unreal_forward.6} parent=0 // pred_fallthru
    _
  // Predicated region
  $region18: #{unreal_forward.6} parent=0 // pred_check
    _
  $region19: #{unreal_forward.6} parent=0 // pred_check_branch
    %445 = sbr.rel (0) target = $region21
  $region20: #{unreal_forward.6} parent=0 // pred_region
    _
  $region21: #{unreal_forward.6} parent=0 // pred_fallthru
    _

// kernel: unreal_forward.7
$region0: #{unreal_forward.7}
  #allocation0 [shape = 'u32[]', space=smem, size = 0x4, offset = 0x4, fixed_abs, tag = 'smem constant byte address 0x4 - core index']
  #allocation1 [shape = 'u32[144,128]{1,0:T(1,128)}', space=vmem, size = 0x12000, scoped, tag = 'internal scratch']
  %s0 = inlined_call_operand.vmem [shape: bf16[2,2592], index: 0, kind: input, shape index: {}]
  %s1 = inlined_call_operand.vmem [shape: bf16[2,7], index: 1, kind: input, shape index: {}]
  %s2 = inlined_call_operand.vmem [shape: bf16[2592,256], index: 2, kind: input, shape index: {}]
  %s3 = inlined_call_operand.vmem [shape: f32[1,256], index: 3, kind: input, shape index: {}]
  %s4 = inlined_call_operand.vmem [shape: bf16[256,1024], index: 4, kind: input, shape index: {}]
  %s5 = inlined_call_operand.vmem [shape: bf16[7,1024], index: 5, kind: input, shape index: {}]
  %s6 = inlined_call_operand.vmem [shape: f32[1,1024], index: 6, kind: input, shape index: {}]
  %s7 = inlined_call_operand.vmem [shape: f32[2,1024], index: 7, kind: output, shape index: {}]
  %s8 = sld [smem:[#allocation0]]
  $region38: #{unreal_forward.7} parent=0
    _
  %s10 = ssub.s32 1, %s8
  %s11 = scalar_select 0, %s10, %s8
  // Predicated region
  $region2: #{unreal_forward.7} parent=0 // pred_check
    _
  $region3: #{unreal_forward.7} parent=0 // pred_check_branch
    %13 = sbr.rel (0) target = $region5
  $region4: #{unreal_forward.7} parent=0 // pred_region
    _
  $region5: #{unreal_forward.7} parent=0 // pred_fallthru
    _
  // Predicated region
  $region6: #{unreal_forward.7} parent=0 // pred_check
    _
  $region7: #{unreal_forward.7} parent=0 // pred_check_branch
    %15 = sbr.rel (0) target = $region9
  $region8: #{unreal_forward.7} parent=0 // pred_region
    _
  $region9: #{unreal_forward.7} parent=0 // pred_fallthru
    _
  // Predicated region
  $region10: #{unreal_forward.7} parent=0 // pred_check
    _
  $region11: #{unreal_forward.7} parent=0 // pred_check_branch
    %17 = sbr.rel (0) target = $region13
  $region12: #{unreal_forward.7} parent=0 // pred_region
    _
  $region13: #{unreal_forward.7} parent=0 // pred_fallthru
    _
  // Predicated region
  $region14: #{unreal_forward.7} parent=0 // pred_check
    _
  $region15: #{unreal_forward.7} parent=0 // pred_check_branch
    %19 = sbr.rel (0) target = $region17
  $region16: #{unreal_forward.7} parent=0 // pred_region
    _
  $region17: #{unreal_forward.7} parent=0 // pred_fallthru
    _
  // Predicated region
  $region18: #{unreal_forward.7} parent=0 // pred_check
    _
  $region19: #{unreal_forward.7} parent=0 // pred_check_branch
    %21 = sbr.rel (0) target = $region21
  $region20: #{unreal_forward.7} parent=0 // pred_region
    _
  $region21: #{unreal_forward.7} parent=0 // pred_fallthru
    _
  // Predicated region
  $region22: #{unreal_forward.7} parent=0 // pred_check
    _
  $region23: #{unreal_forward.7} parent=0 // pred_check_branch
    %23 = sbr.rel (0) target = $region25
  $region24: #{unreal_forward.7} parent=0 // pred_region
    _
  $region25: #{unreal_forward.7} parent=0 // pred_fallthru
    _
  // Predicated region
  $region26: #{unreal_forward.7} parent=0 // pred_check
    _
  $region27: #{unreal_forward.7} parent=0 // pred_check_branch
    %25 = sbr.rel (0) target = $region29
  $region28: #{unreal_forward.7} parent=0 // pred_region
    _
  $region29: #{unreal_forward.7} parent=0 // pred_fallthru
    _
  %v27 = vld [vmem:[%s0] sm:$0xff]
  %v28 = vld [vmem:[%s0 + $0x8] sm:$0xff]
  %v29 = vld [vmem:[%s0 + $0x10] sm:$0x1f]
  %v30 = vld [vmem:[%s2] sm:$0xff]
  %v31 = vld [vmem:[%s2 + $0x8] sm:$0xff]
  %v32 = vld [vmem:[%s2 + $0x10] sm:$0xff]
  %v33 = vld [vmem:[%s2 + $0x18] sm:$0xff]
  %v34 = vld [vmem:[%s2 + $0x20] sm:$0xff]
  %v35 = vld [vmem:[%s2 + $0x28] sm:$0xff]
  %v36 = vld [vmem:[%s2 + $0x30] sm:$0xff]
  %v37 = vld [vmem:[%s2 + $0x38] sm:$0xff]
  %v38 = vld [vmem:[%s2 + $0x40] sm:$0xff]
  %v39 = vld [vmem:[%s2 + $0x48] sm:$0xff]
  %v40 = vld [vmem:[%s2 + $0x50] sm:$0xff]
  %v41 = vld [vmem:[%s2 + $0x58] sm:$0xff]
  %v42 = vld [vmem:[%s2 + $0x60] sm:$0xff]
  %v43 = vld [vmem:[%s2 + $0x68] sm:$0xff]
  %v44 = vld [vmem:[%s2 + $0x70] sm:$0xff]
  %v45 = vld [vmem:[%s2 + $0x78] sm:$0xff]
  %v46 = vld [vmem:[%s2 + $0x80] sm:$0xff]
  %v47 = vld [vmem:[%s2 + $0x88] sm:$0xff]
  %v48 = vld [vmem:[%s2 + $0x90] sm:$0xff]
  %v49 = vld [vmem:[%s2 + $0x98] sm:$0xff]
  %v50 = vld [vmem:[%s2 + $0xa0] sm:$0xff]
  %v51 = vld [vmem:[%s2 + $0xa8] sm:$0xff]
  %v52 = vld [vmem:[%s2 + $0xb0] sm:$0xff]
  %v53 = vld [vmem:[%s2 + $0xb8] sm:$0xff]
  %v54 = vld [vmem:[%s2 + $0xc0] sm:$0xff]
  %v55 = vld [vmem:[%s2 + $0xc8] sm:$0xff]
  %v56 = vld [vmem:[%s2 + $0xd0] sm:$0xff]
  %v57 = vld [vmem:[%s2 + $0xd8] sm:$0xff]
  %v58 = vld [vmem:[%s2 + $0xe0] sm:$0xff]
  %v59 = vld [vmem:[%s2 + $0xe8] sm:$0xff]
  %v60 = vld [vmem:[%s2 + $0xf0] sm:$0xff]
  %v61 = vld [vmem:[%s2 + $0xf8] sm:$0xff]
  %v62 = vld [vmem:[%s2 + $0x100] sm:$0xff]
  %v63 = vld [vmem:[%s2 + $0x108] sm:$0xff]
  %v64 = vld [vmem:[%s2 + $0x110] sm:$0xff]
  %v65 = vld [vmem:[%s2 + $0x118] sm:$0xff]
  %v66 = vld [vmem:[%s2 + $0x120] sm:$0xff]
  %v67 = vld [vmem:[%s2 + $0x128] sm:$0xff]
  %v68 = vld [vmem:[%s2 + $0x130] sm:$0xff]
  %v69 = vld [vmem:[%s2 + $0x138] sm:$0xff]
  %v70 = vld [vmem:[%s2 + $0x140] sm:$0xff]
  %v71 = vld [vmem:[%s2 + $0x148] sm:$0xff]
  %v72 = vld [vmem:[%s2 + $0x150] sm:$0xff]
  %v73 = vld [vmem:[%s2 + $0x158] sm:$0xff]
  %v74 = vld [vmem:[%s2 + $0x160] sm:$0xff]
  %v75 = vld [vmem:[%s2 + $0x168] sm:$0xff]
  %v76 = vld [vmem:[%s2 + $0x170] sm:$0xff]
  %v77 = vld [vmem:[%s2 + $0x178] sm:$0xff]
  %v78 = vld [vmem:[%s2 + $0x180] sm:$0xff]
  %v79 = vld [vmem:[%s2 + $0x188] sm:$0xff]
  %v80 = vld [vmem:[%s2 + $0x190] sm:$0xff]
  %v81 = vld [vmem:[%s2 + $0x198] sm:$0xff]
  %v82 = vld [vmem:[%s2 + $0x1a0] sm:$0xff]
  %v83 = vld [vmem:[%s2 + $0x1a8] sm:$0xff]
  %v84 = vld [vmem:[%s2 + $0x1b0] sm:$0xff]
  %v85 = vld [vmem:[%s2 + $0x1b8] sm:$0xff]
  %v86 = vld [vmem:[%s2 + $0x1c0] sm:$0xff]
  %v87 = vld [vmem:[%s2 + $0x1c8] sm:$0xff]
  %v88 = vld [vmem:[%s2 + $0x1d0] sm:$0xff]
  %v89 = vld [vmem:[%s2 + $0x1d8] sm:$0xff]
  %v90 = vld [vmem:[%s2 + $0x1e0] sm:$0xff]
  %v91 = vld [vmem:[%s2 + $0x1e8] sm:$0xff]
  %v92 = vld [vmem:[%s2 + $0x1f0] sm:$0xff]
  %v93 = vld [vmem:[%s2 + $0x1f8] sm:$0xff]
  %v94 = vld [vmem:[%s2 + $0x200] sm:$0xff]
  %v95 = vld [vmem:[%s2 + $0x208] sm:$0xff]
  %v96 = vld [vmem:[%s2 + $0x210] sm:$0xff]
  %v97 = vld [vmem:[%s2 + $0x218] sm:$0xff]
  %v98 = vld [vmem:[%s2 + $0x220] sm:$0xff]
  %v99 = vld [vmem:[%s2 + $0x228] sm:$0xff]
  %v100 = vld [vmem:[%s2 + $0x230] sm:$0xff]
  %v101 = vld [vmem:[%s2 + $0x238] sm:$0xff]
  %v102 = vld [vmem:[%s2 + $0x240] sm:$0xff]
  %v103 = vld [vmem:[%s2 + $0x248] sm:$0xff]
  %v104 = vld [vmem:[%s2 + $0x250] sm:$0xff]
  %v105 = vld [vmem:[%s2 + $0x258] sm:$0xff]
  %v106 = vld [vmem:[%s2 + $0x260] sm:$0xff]
  %v107 = vld [vmem:[%s2 + $0x268] sm:$0xff]
  %v108 = vld [vmem:[%s2 + $0x270] sm:$0xff]
  %v109 = vld [vmem:[%s2 + $0x278] sm:$0xff]
  %v110 = vld [vmem:[%s2 + $0x280] sm:$0xff]
  %v111 = vld [vmem:[%s2 + $0x288] sm:$0xff]
  %v112 = vld [vmem:[%s2 + $0x290] sm:$0xff]
  %v113 = vld [vmem:[%s2 + $0x298] sm:$0xff]
  %v114 = vld [vmem:[%s2 + $0x2a0] sm:$0xff]
  %v115 = vld [vmem:[%s2 + $0x2a8] sm:$0xff]
  %v116 = vld [vmem:[%s2 + $0x2b0] sm:$0xff]
  %v117 = vld [vmem:[%s2 + $0x2b8] sm:$0xff]
  %v118 = vld [vmem:[%s2 + $0x2c0] sm:$0xff]
  %v119 = vld [vmem:[%s2 + $0x2c8] sm:$0xff]
  %v120 = vld [vmem:[%s2 + $0x2d0] sm:$0xff]
  %v121 = vld [vmem:[%s2 + $0x2d8] sm:$0xff]
  %v122 = vld [vmem:[%s2 + $0x2e0] sm:$0xff]
  %v123 = vld [vmem:[%s2 + $0x2e8] sm:$0xff]
  %v124 = vld [vmem:[%s2 + $0x2f0] sm:$0xff]
  %v125 = vld [vmem:[%s2 + $0x2f8] sm:$0xff]
  %v126 = vld [vmem:[%s2 + $0x300] sm:$0xff]
  %v127 = vld [vmem:[%s2 + $0x308] sm:$0xff]
  %v128 = vld [vmem:[%s2 + $0x310] sm:$0xff]
  %v129 = vld [vmem:[%s2 + $0x318] sm:$0xff]
  %v130 = vld [vmem:[%s2 + $0x320] sm:$0xff]
  %v131 = vld [vmem:[%s2 + $0x328] sm:$0xff]
  %v132 = vld [vmem:[%s2 + $0x330] sm:$0xff]
  %v133 = vld [vmem:[%s2 + $0x338] sm:$0xff]
  %v134 = vld [vmem:[%s2 + $0x340] sm:$0xff]
  %v135 = vld [vmem:[%s2 + $0x348] sm:$0xff]
  %v136 = vld [vmem:[%s2 + $0x350] sm:$0xff]
  %v137 = vld [vmem:[%s2 + $0x358] sm:$0xff]
  %v138 = vld [vmem:[%s2 + $0x360] sm:$0xff]
  %v139 = vld [vmem:[%s2 + $0x368] sm:$0xff]
  %v140 = vld [vmem:[%s2 + $0x370] sm:$0xff]
  %v141 = vld [vmem:[%s2 + $0x378] sm:$0xff]
  %v142 = vld [vmem:[%s2 + $0x380] sm:$0xff]
  %v143 = vld [vmem:[%s2 + $0x388] sm:$0xff]
  %v144 = vld [vmem:[%s2 + $0x390] sm:$0xff]
  %v145 = vld [vmem:[%s2 + $0x398] sm:$0xff]
  %v146 = vld [vmem:[%s2 + $0x3a0] sm:$0xff]
  %v147 = vld [vmem:[%s2 + $0x3a8] sm:$0xff]
  %v148 = vld [vmem:[%s2 + $0x3b0] sm:$0xff]
  %v149 = vld [vmem:[%s2 + $0x3b8] sm:$0xff]
  %v150 = vld [vmem:[%s2 + $0x3c0] sm:$0xff]
  %v151 = vld [vmem:[%s2 + $0x3c8] sm:$0xff]
  %v152 = vld [vmem:[%s2 + $0x3d0] sm:$0xff]
  %v153 = vld [vmem:[%s2 + $0x3d8] sm:$0xff]
  %v154 = vld [vmem:[%s2 + $0x3e0] sm:$0xff]
  %v155 = vld [vmem:[%s2 + $0x3e8] sm:$0xff]
  %v156 = vld [vmem:[%s2 + $0x3f0] sm:$0xff]
  %v157 = vld [vmem:[%s2 + $0x3f8] sm:$0xff]
  %v158 = vld [vmem:[%s2 + $0x400] sm:$0xff]
  %v159 = vld [vmem:[%s2 + $0x408] sm:$0xff]
  %v160 = vld [vmem:[%s2 + $0x410] sm:$0xff]
  %v161 = vld [vmem:[%s2 + $0x418] sm:$0xff]
  %v162 = vld [vmem:[%s2 + $0x420] sm:$0xff]
  %v163 = vld [vmem:[%s2 + $0x428] sm:$0xff]
  %v164 = vld [vmem:[%s2 + $0x430] sm:$0xff]
  %v165 = vld [vmem:[%s2 + $0x438] sm:$0xff]
  %v166 = vld [vmem:[%s2 + $0x440] sm:$0xff]
  %v167 = vld [vmem:[%s2 + $0x448] sm:$0xff]
  %v168 = vld [vmem:[%s2 + $0x450] sm:$0xff]
  %v169 = vld [vmem:[%s2 + $0x458] sm:$0xff]
  %v170 = vld [vmem:[%s2 + $0x460] sm:$0xff]
  %v171 = vld [vmem:[%s2 + $0x468] sm:$0xff]
  %v172 = vld [vmem:[%s2 + $0x470] sm:$0xff]
  %v173 = vld [vmem:[%s2 + $0x478] sm:$0xff]
  %v174 = vld [vmem:[%s2 + $0x480] sm:$0xff]
  %v175 = vld [vmem:[%s2 + $0x488] sm:$0xff]
  %v176 = vld [vmem:[%s2 + $0x490] sm:$0xff]
  %v177 = vld [vmem:[%s2 + $0x498] sm:$0xff]
  %v178 = vld [vmem:[%s2 + $0x4a0] sm:$0xff]
  %v179 = vld [vmem:[%s2 + $0x4a8] sm:$0xff]
  %v180 = vld [vmem:[%s2 + $0x4b0] sm:$0xff]
  %v181 = vld [vmem:[%s2 + $0x4b8] sm:$0xff]
  %v182 = vld [vmem:[%s2 + $0x4c0] sm:$0xff]
  %v183 = vld [vmem:[%s2 + $0x4c8] sm:$0xff]
  %v184 = vld [vmem:[%s2 + $0x4d0] sm:$0xff]
  %v185 = vld [vmem:[%s2 + $0x4d8] sm:$0xff]
  %v186 = vld [vmem:[%s2 + $0x4e0] sm:$0xff]
  %v187 = vld [vmem:[%s2 + $0x4e8] sm:$0xff]
  %v188 = vld [vmem:[%s2 + $0x4f0] sm:$0xff]
  %v189 = vld [vmem:[%s2 + $0x4f8] sm:$0xff]
  %v190 = vld [vmem:[%s2 + $0x500] sm:$0xff]
  %v191 = vld [vmem:[%s2 + $0x508] sm:$0xff]
  %v192 = vld [vmem:[%s2 + $0x510] sm:$0xff]
  %v193 = vld [vmem:[%s2 + $0x518] sm:$0xff]
  %v194 = vld [vmem:[%s2 + $0x520] sm:$0xff]
  %v195 = vld [vmem:[%s2 + $0x528] sm:$0xff]
  %v196 = vld [vmem:[%s2 + $0x530] sm:$0xff]
  %v197 = vld [vmem:[%s2 + $0x538] sm:$0xff]
  %v198 = vld [vmem:[%s2 + $0x540] sm:$0xff]
  %v199 = vld [vmem:[%s2 + $0x548] sm:$0xff]
  %v200 = vld [vmem:[%s2 + $0x550] sm:$0xff]
  %v201 = vld [vmem:[%s2 + $0x558] sm:$0xff]
  %v202 = vld [vmem:[%s2 + $0x560] sm:$0xff]
  %v203 = vld [vmem:[%s2 + $0x568] sm:$0xff]
  %v204 = vld [vmem:[%s2 + $0x570] sm:$0xff]
  %v205 = vld [vmem:[%s2 + $0x578] sm:$0xff]
  %v206 = vld [vmem:[%s2 + $0x580] sm:$0xff]
  %v207 = vld [vmem:[%s2 + $0x588] sm:$0xff]
  %v208 = vld [vmem:[%s2 + $0x590] sm:$0xff]
  %v209 = vld [vmem:[%s2 + $0x598] sm:$0xff]
  %v210 = vld [vmem:[%s2 + $0x5a0] sm:$0xff]
  %v211 = vld [vmem:[%s2 + $0x5a8] sm:$0xff]
  %v212 = vld [vmem:[%s2 + $0x5b0] sm:$0xff]
  %v213 = vld [vmem:[%s2 + $0x5b8] sm:$0xff]
  %v214 = vld [vmem:[%s2 + $0x5c0] sm:$0xff]
  %v215 = vld [vmem:[%s2 + $0x5c8] sm:$0xff]
  %v216 = vld [vmem:[%s2 + $0x5d0] sm:$0xff]
  %v217 = vld [vmem:[%s2 + $0x5d8] sm:$0xff]
  %v218 = vld [vmem:[%s2 + $0x5e0] sm:$0xff]
  %v219 = vld [vmem:[%s2 + $0x5e8] sm:$0xff]
  %v220 = vld [vmem:[%s2 + $0x5f0] sm:$0xff]
  %v221 = vld [vmem:[%s2 + $0x5f8] sm:$0xff]
  %v222 = vld [vmem:[%s2 + $0x600] sm:$0xff]
  %v223 = vld [vmem:[%s2 + $0x608] sm:$0xff]
  %v224 = vld [vmem:[%s2 + $0x610] sm:$0xff]
  %v225 = vld [vmem:[%s2 + $0x618] sm:$0xff]
  %v226 = vld [vmem:[%s2 + $0x620] sm:$0xff]
  %v227 = vld [vmem:[%s2 + $0x628] sm:$0xff]
  %v228 = vld [vmem:[%s2 + $0x630] sm:$0xff]
  %v229 = vld [vmem:[%s2 + $0x638] sm:$0xff]
  %v230 = vld [vmem:[%s2 + $0x640] sm:$0xff]
  %v231 = vld [vmem:[%s2 + $0x648] sm:$0xff]
  %v232 = vld [vmem:[%s2 + $0x650] sm:$0xff]
  %v233 = vld [vmem:[%s2 + $0x658] sm:$0xff]
  %v234 = vld [vmem:[%s2 + $0x660] sm:$0xff]
  %v235 = vld [vmem:[%s2 + $0x668] sm:$0xff]
  %v236 = vld [vmem:[%s2 + $0x670] sm:$0xff]
  %v237 = vld [vmem:[%s2 + $0x678] sm:$0xff]
  %v238 = vld [vmem:[%s2 + $0x680] sm:$0xff]
  %v239 = vld [vmem:[%s2 + $0x688] sm:$0xff]
  %v240 = vld [vmem:[%s2 + $0x690] sm:$0xff]
  %v241 = vld [vmem:[%s2 + $0x698] sm:$0xff]
  %v242 = vld [vmem:[%s2 + $0x6a0] sm:$0xff]
  %v243 = vld [vmem:[%s2 + $0x6a8] sm:$0xff]
  %v244 = vld [vmem:[%s2 + $0x6b0] sm:$0xff]
  %v245 = vld [vmem:[%s2 + $0x6b8] sm:$0xff]
  %v246 = vld [vmem:[%s2 + $0x6c0] sm:$0xff]
  %v247 = vld [vmem:[%s2 + $0x6c8] sm:$0xff]
  %v248 = vld [vmem:[%s2 + $0x6d0] sm:$0xff]
  %v249 = vld [vmem:[%s2 + $0x6d8] sm:$0xff]
  %v250 = vld [vmem:[%s2 + $0x6e0] sm:$0xff]
  %v251 = vld [vmem:[%s2 + $0x6e8] sm:$0xff]
  %v252 = vld [vmem:[%s2 + $0x6f0] sm:$0xff]
  %v253 = vld [vmem:[%s2 + $0x6f8] sm:$0xff]
  %v254 = vld [vmem:[%s2 + $0x700] sm:$0xff]
  %v255 = vld [vmem:[%s2 + $0x708] sm:$0xff]
  %v256 = vld [vmem:[%s2 + $0x710] sm:$0xff]
  %v257 = vld [vmem:[%s2 + $0x718] sm:$0xff]
  %v258 = vld [vmem:[%s2 + $0x720] sm:$0xff]
  %v259 = vld [vmem:[%s2 + $0x728] sm:$0xff]
  %v260 = vld [vmem:[%s2 + $0x730] sm:$0xff]
  %v261 = vld [vmem:[%s2 + $0x738] sm:$0xff]
  %v262 = vld [vmem:[%s2 + $0x740] sm:$0xff]
  %v263 = vld [vmem:[%s2 + $0x748] sm:$0xff]
  %v264 = vld [vmem:[%s2 + $0x750] sm:$0xff]
  %v265 = vld [vmem:[%s2 + $0x758] sm:$0xff]
  %v266 = vld [vmem:[%s2 + $0x760] sm:$0xff]
  %v267 = vld [vmem:[%s2 + $0x768] sm:$0xff]
  %v268 = vld [vmem:[%s2 + $0x770] sm:$0xff]
  %v269 = vld [vmem:[%s2 + $0x778] sm:$0xff]
  %v270 = vld [vmem:[%s2 + $0x780] sm:$0xff]
  %v271 = vld [vmem:[%s2 + $0x788] sm:$0xff]
  %v272 = vld [vmem:[%s2 + $0x790] sm:$0xff]
  %v273 = vld [vmem:[%s2 + $0x798] sm:$0xff]
  %v274 = vld [vmem:[%s2 + $0x7a0] sm:$0xff]
  %v275 = vld [vmem:[%s2 + $0x7a8] sm:$0xff]
  %v276 = vld [vmem:[%s2 + $0x7b0] sm:$0xff]
  %v277 = vld [vmem:[%s2 + $0x7b8] sm:$0xff]
  %v278 = vld [vmem:[%s2 + $0x7c0] sm:$0xff]
  %v279 = vld [vmem:[%s2 + $0x7c8] sm:$0xff]
  %v280 = vld [vmem:[%s2 + $0x7d0] sm:$0xff]
  %v281 = vld [vmem:[%s2 + $0x7d8] sm:$0xff]
  %v282 = vld [vmem:[%s2 + $0x7e0] sm:$0xff]
  %v283 = vld [vmem:[%s2 + $0x7e8] sm:$0xff]
  %v284 = vld [vmem:[%s2 + $0x7f0] sm:$0xff]
  %v285 = vld [vmem:[%s2 + $0x7f8] sm:$0xff]
  %v286 = vld [vmem:[%s2 + $0x800] sm:$0xff]
  %v287 = vld [vmem:[%s2 + $0x808] sm:$0xff]
  %v288 = vld [vmem:[%s2 + $0x810] sm:$0xff]
  %v289 = vld [vmem:[%s2 + $0x818] sm:$0xff]
  %v290 = vld [vmem:[%s2 + $0x820] sm:$0xff]
  %v291 = vld [vmem:[%s2 + $0x828] sm:$0xff]
  %v292 = vld [vmem:[%s2 + $0x830] sm:$0xff]
  %v293 = vld [vmem:[%s2 + $0x838] sm:$0xff]
  %v294 = vld [vmem:[%s2 + $0x840] sm:$0xff]
  %v295 = vld [vmem:[%s2 + $0x848] sm:$0xff]
  %v296 = vld [vmem:[%s2 + $0x850] sm:$0xff]
  %v297 = vld [vmem:[%s2 + $0x858] sm:$0xff]
  %v298 = vld [vmem:[%s2 + $0x860] sm:$0xff]
  %v299 = vld [vmem:[%s2 + $0x868] sm:$0xff]
  %v300 = vld [vmem:[%s2 + $0x870] sm:$0xff]
  %v301 = vld [vmem:[%s2 + $0x878] sm:$0xff]
  %v302 = vld [vmem:[%s2 + $0x880] sm:$0xff]
  %v303 = vld [vmem:[%s2 + $0x888] sm:$0xff]
  %v304 = vld [vmem:[%s2 + $0x890] sm:$0xff]
  %v305 = vld [vmem:[%s2 + $0x898] sm:$0xff]
  %v306 = vld [vmem:[%s2 + $0x8a0] sm:$0xff]
  %v307 = vld [vmem:[%s2 + $0x8a8] sm:$0xff]
  %v308 = vld [vmem:[%s2 + $0x8b0] sm:$0xff]
  %v309 = vld [vmem:[%s2 + $0x8b8] sm:$0xff]
  %v310 = vld [vmem:[%s2 + $0x8c0] sm:$0xff]
  %v311 = vld [vmem:[%s2 + $0x8c8] sm:$0xff]
  %v312 = vld [vmem:[%s2 + $0x8d0] sm:$0xff]
  %v313 = vld [vmem:[%s2 + $0x8d8] sm:$0xff]
  %v314 = vld [vmem:[%s2 + $0x8e0] sm:$0xff]
  %v315 = vld [vmem:[%s2 + $0x8e8] sm:$0xff]
  %v316 = vld [vmem:[%s2 + $0x8f0] sm:$0xff]
  %v317 = vld [vmem:[%s2 + $0x8f8] sm:$0xff]
  %v318 = vld [vmem:[%s2 + $0x900] sm:$0xff]
  %v319 = vld [vmem:[%s2 + $0x908] sm:$0xff]
  %v320 = vld [vmem:[%s2 + $0x910] sm:$0xff]
  %v321 = vld [vmem:[%s2 + $0x918] sm:$0xff]
  %v322 = vld [vmem:[%s2 + $0x920] sm:$0xff]
  %v323 = vld [vmem:[%s2 + $0x928] sm:$0xff]
  %v324 = vld [vmem:[%s2 + $0x930] sm:$0xff]
  %v325 = vld [vmem:[%s2 + $0x938] sm:$0xff]
  %v326 = vld [vmem:[%s2 + $0x940] sm:$0xff]
  %v327 = vld [vmem:[%s2 + $0x948] sm:$0xff]
  %v328 = vld [vmem:[%s2 + $0x950] sm:$0xff]
  %v329 = vld [vmem:[%s2 + $0x958] sm:$0xff]
  %v330 = vld [vmem:[%s2 + $0x960] sm:$0xff]
  %v331 = vld [vmem:[%s2 + $0x968] sm:$0xff]
  %v332 = vld [vmem:[%s2 + $0x970] sm:$0xff]
  %v333 = vld [vmem:[%s2 + $0x978] sm:$0xff]
  %v334 = vld [vmem:[%s2 + $0x980] sm:$0xff]
  %v335 = vld [vmem:[%s2 + $0x988] sm:$0xff]
  %v336 = vld [vmem:[%s2 + $0x990] sm:$0xff]
  %v337 = vld [vmem:[%s2 + $0x998] sm:$0xff]
  %v338 = vld [vmem:[%s2 + $0x9a0] sm:$0xff]
  %v339 = vld [vmem:[%s2 + $0x9a8] sm:$0xff]
  %v340 = vld [vmem:[%s2 + $0x9b0] sm:$0xff]
  %v341 = vld [vmem:[%s2 + $0x9b8] sm:$0xff]
  %v342 = vld [vmem:[%s2 + $0x9c0] sm:$0xff]
  %v343 = vld [vmem:[%s2 + $0x9c8] sm:$0xff]
  %v344 = vld [vmem:[%s2 + $0x9d0] sm:$0xff]
  %v345 = vld [vmem:[%s2 + $0x9d8] sm:$0xff]
  %v346 = vld [vmem:[%s2 + $0x9e0] sm:$0xff]
  %v347 = vld [vmem:[%s2 + $0x9e8] sm:$0xff]
  %v348 = vld [vmem:[%s2 + $0x9f0] sm:$0xff]
  %v349 = vld [vmem:[%s2 + $0x9f8] sm:$0xff]
  %v350 = vld [vmem:[%s2 + $0xa00] sm:$0xff]
  %v351 = vld [vmem:[%s2 + $0xa08] sm:$0xff]
  %v352 = vld [vmem:[%s2 + $0xa10] sm:$0xff]
  %v353 = vld [vmem:[%s2 + $0xa18] sm:$0xff]
  %v354 = vld [vmem:[%s3] sm:$0x3]
  %v356 = vlaneseq
  %v357 = vshrl.u32 %v356, 7
  %v358 = vsub.s32 0, %v357
  %v359 = vrot.slane %v354, %v358
  %v360 = vlaneseq
  %v361 = vshrl.u32 %v360, 7
  %v362 = vsub.s32 1, %v361
  %v363 = vrot.slane %v354, %v362
  %v369 = vcombine.high %v27, %v27
  %v371 = vunpack.c.l.s4 1966171168
  %v372 = vunpack.c.0.s8 %v371
  %v373 = vlaneseq
  %v374 = vshrl.u32 %v373, 7
  %v375 = vsub.s32 %v372, %v374
  %v376 = vrot.slane %v27, %v375
  %v378 = vunpack.c.l.s4 1966171168
  %v379 = vunpack.c.0.s8 %v378
  %v380 = vlaneseq
  %v381 = vshrl.u32 %v380, 7
  %v382 = vsub.s32 %v379, %v381
  %v383 = vrot.slane %v369, %v382
  %v384 = vcombine.high %v376, %v376
  %v385 = vcombine.high %v383, %v383
  %v387 = vunpack.c.l.s4 1966171168
  %v388 = vunpack.c.0.s8 %v387
  %v389 = vlaneseq
  %v390 = vshrl.u32 %v389, 7
  %v391 = vsub.s32 %v388, %v390
  %v392 = vrot.slane %v376, %v391
  %v394 = vunpack.c.l.s4 1966171168
  %v395 = vunpack.c.0.s8 %v394
  %v396 = vlaneseq
  %v397 = vshrl.u32 %v396, 7
  %v398 = vsub.s32 %v395, %v397
  %v399 = vrot.slane %v383, %v398
  %v401 = vunpack.c.l.s4 1966171168
  %v402 = vunpack.c.0.s8 %v401
  %v403 = vlaneseq
  %v404 = vshrl.u32 %v403, 7
  %v405 = vsub.s32 %v402, %v404
  %v406 = vrot.slane %v384, %v405
  %v408 = vunpack.c.l.s4 1966171168
  %v409 = vunpack.c.0.s8 %v408
  %v410 = vlaneseq
  %v411 = vshrl.u32 %v410, 7
  %v412 = vsub.s32 %v409, %v411
  %v413 = vrot.slane %v385, %v412
  %v414 = vcombine.high %v392, %v392
  %v415 = vcombine.high %v399, %v399
  %v416 = vcombine.high %v406, %v406
  %v417 = vcombine.high %v413, %v413
  %v418 = vcombine.high %v28, %v28
  %v420 = vunpack.c.l.s4 1966171168
  %v421 = vunpack.c.0.s8 %v420
  %v422 = vlaneseq
  %v423 = vshrl.u32 %v422, 7
  %v424 = vsub.s32 %v421, %v423
  %v425 = vrot.slane %v28, %v424
  %v427 = vunpack.c.l.s4 1966171168
  %v428 = vunpack.c.0.s8 %v427
  %v429 = vlaneseq
  %v430 = vshrl.u32 %v429, 7
  %v431 = vsub.s32 %v428, %v430
  %v432 = vrot.slane %v418, %v431
  %v433 = vcombine.high %v425, %v425
  %v434 = vcombine.high %v432, %v432
  %v436 = vunpack.c.l.s4 1966171168
  %v437 = vunpack.c.0.s8 %v436
  %v438 = vlaneseq
  %v439 = vshrl.u32 %v438, 7
  %v440 = vsub.s32 %v437, %v439
  %v441 = vrot.slane %v425, %v440
  %v443 = vunpack.c.l.s4 1966171168
  %v444 = vunpack.c.0.s8 %v443
  %v445 = vlaneseq
  %v446 = vshrl.u32 %v445, 7
  %v447 = vsub.s32 %v444, %v446
  %v448 = vrot.slane %v432, %v447
  %v450 = vunpack.c.l.s4 1966171168
  %v451 = vunpack.c.0.s8 %v450
  %v452 = vlaneseq
  %v453 = vshrl.u32 %v452, 7
  %v454 = vsub.s32 %v451, %v453
  %v455 = vrot.slane %v433, %v454
  %v457 = vunpack.c.l.s4 1966171168
  %v458 = vunpack.c.0.s8 %v457
  %v459 = vlaneseq
  %v460 = vshrl.u32 %v459, 7
  %v461 = vsub.s32 %v458, %v460
  %v462 = vrot.slane %v434, %v461
  %v463 = vcombine.high %v441, %v441
  %v464 = vcombine.high %v448, %v448
  %v465 = vcombine.high %v455, %v455
  %v466 = vcombine.high %v462, %v462
  %v467 = vcombine.high %v29, %v29
  %v469 = vunpack.c.l.s4 1966171168
  %v470 = vunpack.c.0.s8 %v469
  %v471 = vlaneseq
  %v472 = vshrl.u32 %v471, 7
  %v473 = vsub.s32 %v470, %v472
  %v474 = vrot.slane %v29, %v473
  %v476 = vunpack.c.l.s4 1966171168
  %v477 = vunpack.c.0.s8 %v476
  %v478 = vlaneseq
  %v479 = vshrl.u32 %v478, 7
  %v480 = vsub.s32 %v477, %v479
  %v481 = vrot.slane %v467, %v480
  %v482 = vcombine.high %v474, %v474
  %v484 = vunpack.c.l.s4 1966171168
  %v485 = vunpack.c.0.s8 %v484
  %v486 = vlaneseq
  %v487 = vshrl.u32 %v486, 7
  %v488 = vsub.s32 %v485, %v487
  %v489 = vrot.slane %v474, %v488
  %v491 = vunpack.c.l.s4 1966171168
  %v492 = vunpack.c.0.s8 %v491
  %v493 = vlaneseq
  %v494 = vshrl.u32 %v493, 7
  %v495 = vsub.s32 %v492, %v494
  %v496 = vrot.slane %v481, %v495
  %v498 = vunpack.c.l.s4 1966171168
  %v499 = vunpack.c.0.s8 %v498
  %v500 = vlaneseq
  %v501 = vshrl.u32 %v500, 7
  %v502 = vsub.s32 %v499, %v501
  %v503 = vrot.slane %v482, %v502
  %v504 = vcombine.high %v489, %v489
  %v505 = vcombine.high %v503, %v503
  %v850 = vunpack.c.l.b16 %v30
  %v851 = vunpack.c.h.b16 %v30
  %v852 = vunpack.c.l.b16 %v31
  %v853 = vunpack.c.h.b16 %v31
  %v854 = vunpack.c.l.b16 %v32
  %v855 = vunpack.c.h.b16 %v32
  %v856 = vunpack.c.l.b16 %v33
  %v857 = vunpack.c.h.b16 %v33
  %v858 = vunpack.c.l.b16 %v34
  %v859 = vunpack.c.h.b16 %v34
  %v860 = vunpack.c.l.b16 %v35
  %v861 = vunpack.c.h.b16 %v35
  %v862 = vunpack.c.l.b16 %v36
  %v863 = vunpack.c.h.b16 %v36
  %v864 = vunpack.c.l.b16 %v37
  %v865 = vunpack.c.h.b16 %v37
  %v866 = vunpack.c.l.b16 %v38
  %v867 = vunpack.c.h.b16 %v38
  %v868 = vunpack.c.l.b16 %v39
  %v869 = vunpack.c.h.b16 %v39
  %v870 = vunpack.c.l.b16 %v40
  %v871 = vunpack.c.h.b16 %v40
  %v872 = vunpack.c.l.b16 %v41
  %v873 = vunpack.c.h.b16 %v41
  %v874 = vunpack.c.l.b16 %v42
  %v875 = vunpack.c.h.b16 %v42
  %v876 = vunpack.c.l.b16 %v43
  %v877 = vunpack.c.h.b16 %v43
  %v878 = vunpack.c.l.b16 %v44
  %v879 = vunpack.c.h.b16 %v44
  %v880 = vunpack.c.l.b16 %v45
  %v881 = vunpack.c.h.b16 %v45
  %v882 = vunpack.c.l.b16 %v46
  %v883 = vunpack.c.h.b16 %v46
  %v884 = vunpack.c.l.b16 %v47
  %v885 = vunpack.c.h.b16 %v47
  %v886 = vunpack.c.l.b16 %v48
  %v887 = vunpack.c.h.b16 %v48
  %v888 = vunpack.c.l.b16 %v49
  %v889 = vunpack.c.h.b16 %v49
  %v890 = vunpack.c.l.b16 %v50
  %v891 = vunpack.c.h.b16 %v50
  %v892 = vunpack.c.l.b16 %v51
  %v893 = vunpack.c.h.b16 %v51
  %v894 = vunpack.c.l.b16 %v52
  %v895 = vunpack.c.h.b16 %v52
  %v896 = vunpack.c.l.b16 %v53
  %v897 = vunpack.c.h.b16 %v53
  %v898 = vunpack.c.l.b16 %v54
  %v899 = vunpack.c.h.b16 %v54
  %v900 = vunpack.c.l.b16 %v55
  %v901 = vunpack.c.h.b16 %v55
  %v902 = vunpack.c.l.b16 %v56
  %v903 = vunpack.c.h.b16 %v56
  %v904 = vunpack.c.l.b16 %v57
  %v905 = vunpack.c.h.b16 %v57
  %v906 = vunpack.c.l.b16 %v58
  %v907 = vunpack.c.h.b16 %v58
  %v908 = vunpack.c.l.b16 %v59
  %v909 = vunpack.c.h.b16 %v59
  %v910 = vunpack.c.l.b16 %v60
  %v911 = vunpack.c.h.b16 %v60
  %v912 = vunpack.c.l.b16 %v61
  %v913 = vunpack.c.h.b16 %v61
  %v914 = vunpack.c.l.b16 %v62
  %v915 = vunpack.c.h.b16 %v62
  %v916 = vunpack.c.l.b16 %v63
  %v917 = vunpack.c.h.b16 %v63
  %v918 = vunpack.c.l.b16 %v64
  %v919 = vunpack.c.h.b16 %v64
  %v920 = vunpack.c.l.b16 %v65
  %v921 = vunpack.c.h.b16 %v65
  %v922 = vunpack.c.l.b16 %v66
  %v923 = vunpack.c.h.b16 %v66
  %v924 = vunpack.c.l.b16 %v67
  %v925 = vunpack.c.h.b16 %v67
  %v926 = vunpack.c.l.b16 %v68
  %v927 = vunpack.c.h.b16 %v68
  %v928 = vunpack.c.l.b16 %v69
  %v929 = vunpack.c.h.b16 %v69
  %v930 = vunpack.c.l.b16 %v70
  %v931 = vunpack.c.h.b16 %v70
  %v932 = vunpack.c.l.b16 %v71
  %v933 = vunpack.c.h.b16 %v71
  %v934 = vunpack.c.l.b16 %v72
  %v935 = vunpack.c.h.b16 %v72
  %v936 = vunpack.c.l.b16 %v73
  %v937 = vunpack.c.h.b16 %v73
  %v938 = vunpack.c.l.b16 %v74
  %v939 = vunpack.c.h.b16 %v74
  %v940 = vunpack.c.l.b16 %v75
  %v941 = vunpack.c.h.b16 %v75
  %v942 = vunpack.c.l.b16 %v76
  %v943 = vunpack.c.h.b16 %v76
  %v944 = vunpack.c.l.b16 %v77
  %v945 = vunpack.c.h.b16 %v77
  %v946 = vunpack.c.l.b16 %v78
  %v947 = vunpack.c.h.b16 %v78
  %v948 = vunpack.c.l.b16 %v79
  %v949 = vunpack.c.h.b16 %v79
  %v950 = vunpack.c.l.b16 %v80
  %v951 = vunpack.c.h.b16 %v80
  %v952 = vunpack.c.l.b16 %v81
  %v953 = vunpack.c.h.b16 %v81
  %v954 = vunpack.c.l.b16 %v82
  %v955 = vunpack.c.h.b16 %v82
  %v956 = vunpack.c.l.b16 %v83
  %v957 = vunpack.c.h.b16 %v83
  %v958 = vunpack.c.l.b16 %v84
  %v959 = vunpack.c.h.b16 %v84
  %v960 = vunpack.c.l.b16 %v85
  %v961 = vunpack.c.h.b16 %v85
  %v962 = vunpack.c.l.b16 %v86
  %v963 = vunpack.c.h.b16 %v86
  %v964 = vunpack.c.l.b16 %v87
  %v965 = vunpack.c.h.b16 %v87
  %v966 = vunpack.c.l.b16 %v88
  %v967 = vunpack.c.h.b16 %v88
  %v968 = vunpack.c.l.b16 %v89
  %v969 = vunpack.c.h.b16 %v89
  %v970 = vunpack.c.l.b16 %v90
  %v971 = vunpack.c.h.b16 %v90
  %v972 = vunpack.c.l.b16 %v91
  %v973 = vunpack.c.h.b16 %v91
  %v974 = vunpack.c.l.b16 %v92
  %v975 = vunpack.c.h.b16 %v92
  %v976 = vunpack.c.l.b16 %v93
  %v977 = vunpack.c.h.b16 %v93
  %v978 = vunpack.c.l.b16 %v94
  %v979 = vunpack.c.h.b16 %v94
  %v980 = vunpack.c.l.b16 %v95
  %v981 = vunpack.c.h.b16 %v95
  %v982 = vunpack.c.l.b16 %v96
  %v983 = vunpack.c.h.b16 %v96
  %v984 = vunpack.c.l.b16 %v97
  %v985 = vunpack.c.h.b16 %v97
  %v986 = vunpack.c.l.b16 %v98
  %v987 = vunpack.c.h.b16 %v98
  %v988 = vunpack.c.l.b16 %v99
  %v989 = vunpack.c.h.b16 %v99
  %v990 = vunpack.c.l.b16 %v100
  %v991 = vunpack.c.h.b16 %v100
  %v992 = vunpack.c.l.b16 %v101
  %v993 = vunpack.c.h.b16 %v101
  %v994 = vunpack.c.l.b16 %v102
  %v995 = vunpack.c.h.b16 %v102
  %v996 = vunpack.c.l.b16 %v103
  %v997 = vunpack.c.h.b16 %v103
  %v998 = vunpack.c.l.b16 %v104
  %v999 = vunpack.c.h.b16 %v104
  %v1000 = vunpack.c.l.b16 %v105
  %v1001 = vunpack.c.h.b16 %v105
  %v1002 = vunpack.c.l.b16 %v106
  %v1003 = vunpack.c.h.b16 %v106
  %v1004 = vunpack.c.l.b16 %v107
  %v1005 = vunpack.c.h.b16 %v107
  %v1006 = vunpack.c.l.b16 %v108
  %v1007 = vunpack.c.h.b16 %v108
  %v1008 = vunpack.c.l.b16 %v109
  %v1009 = vunpack.c.h.b16 %v109
  %v1010 = vunpack.c.l.b16 %v110
  %v1011 = vunpack.c.h.b16 %v110
  %v1012 = vunpack.c.l.b16 %v111
  %v1013 = vunpack.c.h.b16 %v111
  %v1014 = vunpack.c.l.b16 %v112
  %v1015 = vunpack.c.h.b16 %v112
  %v1016 = vunpack.c.l.b16 %v113
  %v1017 = vunpack.c.h.b16 %v113
  %v1018 = vunpack.c.l.b16 %v114
  %v1019 = vunpack.c.h.b16 %v114
  %v1020 = vunpack.c.l.b16 %v115
  %v1021 = vunpack.c.h.b16 %v115
  %v1022 = vunpack.c.l.b16 %v116
  %v1023 = vunpack.c.h.b16 %v116
  %v1024 = vunpack.c.l.b16 %v117
  %v1025 = vunpack.c.h.b16 %v117
  %v1026 = vunpack.c.l.b16 %v118
  %v1027 = vunpack.c.h.b16 %v118
  %v1028 = vunpack.c.l.b16 %v119
  %v1029 = vunpack.c.h.b16 %v119
  %v1030 = vunpack.c.l.b16 %v120
  %v1031 = vunpack.c.h.b16 %v120
  %v1032 = vunpack.c.l.b16 %v121
  %v1033 = vunpack.c.h.b16 %v121
  %v1034 = vunpack.c.l.b16 %v122
  %v1035 = vunpack.c.h.b16 %v122
  %v1036 = vunpack.c.l.b16 %v123
  %v1037 = vunpack.c.h.b16 %v123
  %v1038 = vunpack.c.l.b16 %v124
  %v1039 = vunpack.c.h.b16 %v124
  %v1040 = vunpack.c.l.b16 %v125
  %v1041 = vunpack.c.h.b16 %v125
  %v1042 = vunpack.c.l.b16 %v126
  %v1043 = vunpack.c.h.b16 %v126
  %v1044 = vunpack.c.l.b16 %v127
  %v1045 = vunpack.c.h.b16 %v127
  %v1046 = vunpack.c.l.b16 %v128
  %v1047 = vunpack.c.h.b16 %v128
  %v1048 = vunpack.c.l.b16 %v129
  %v1049 = vunpack.c.h.b16 %v129
  %v1050 = vunpack.c.l.b16 %v130
  %v1051 = vunpack.c.h.b16 %v130
  %v1052 = vunpack.c.l.b16 %v131
  %v1053 = vunpack.c.h.b16 %v131
  %v1054 = vunpack.c.l.b16 %v132
  %v1055 = vunpack.c.h.b16 %v132
  %v1056 = vunpack.c.l.b16 %v133
  %v1057 = vunpack.c.h.b16 %v133
  %v1058 = vunpack.c.l.b16 %v134
  %v1059 = vunpack.c.h.b16 %v134
  %v1060 = vunpack.c.l.b16 %v135
  %v1061 = vunpack.c.h.b16 %v135
  %v1062 = vunpack.c.l.b16 %v136
  %v1063 = vunpack.c.h.b16 %v136
  %v1064 = vunpack.c.l.b16 %v137
  %v1065 = vunpack.c.h.b16 %v137
  %v1066 = vunpack.c.l.b16 %v138
  %v1067 = vunpack.c.h.b16 %v138
  %v1068 = vunpack.c.l.b16 %v139
  %v1069 = vunpack.c.h.b16 %v139
  %v1070 = vunpack.c.l.b16 %v140
  %v1071 = vunpack.c.h.b16 %v140
  %v1072 = vunpack.c.l.b16 %v141
  %v1073 = vunpack.c.h.b16 %v141
  %v1074 = vunpack.c.l.b16 %v142
  %v1075 = vunpack.c.h.b16 %v142
  %v1076 = vunpack.c.l.b16 %v143
  %v1077 = vunpack.c.h.b16 %v143
  %v1078 = vunpack.c.l.b16 %v144
  %v1079 = vunpack.c.h.b16 %v144
  %v1080 = vunpack.c.l.b16 %v145
  %v1081 = vunpack.c.h.b16 %v145
  %v1082 = vunpack.c.l.b16 %v146
  %v1083 = vunpack.c.h.b16 %v146
  %v1084 = vunpack.c.l.b16 %v147
  %v1085 = vunpack.c.h.b16 %v147
  %v1086 = vunpack.c.l.b16 %v148
  %v1087 = vunpack.c.h.b16 %v148
  %v1088 = vunpack.c.l.b16 %v149
  %v1089 = vunpack.c.h.b16 %v149
  %v1090 = vunpack.c.l.b16 %v150
  %v1091 = vunpack.c.h.b16 %v150
  %v1092 = vunpack.c.l.b16 %v151
  %v1093 = vunpack.c.h.b16 %v151
  %v1094 = vunpack.c.l.b16 %v152
  %v1095 = vunpack.c.h.b16 %v152
  %v1096 = vunpack.c.l.b16 %v153
  %v1097 = vunpack.c.h.b16 %v153
  %v1098 = vunpack.c.l.b16 %v154
  %v1099 = vunpack.c.h.b16 %v154
  %v1100 = vunpack.c.l.b16 %v155
  %v1101 = vunpack.c.h.b16 %v155
  %v1102 = vunpack.c.l.b16 %v156
  %v1103 = vunpack.c.h.b16 %v156
  %v1104 = vunpack.c.l.b16 %v157
  %v1105 = vunpack.c.h.b16 %v157
  %v1106 = vunpack.c.l.b16 %v158
  %v1107 = vunpack.c.h.b16 %v158
  %v1108 = vunpack.c.l.b16 %v159
  %v1109 = vunpack.c.h.b16 %v159
  %v1110 = vunpack.c.l.b16 %v160
  %v1111 = vunpack.c.h.b16 %v160
  %v1112 = vunpack.c.l.b16 %v161
  %v1113 = vunpack.c.h.b16 %v161
  %v1114 = vunpack.c.l.b16 %v162
  %v1115 = vunpack.c.h.b16 %v162
  %v1116 = vunpack.c.l.b16 %v163
  %v1117 = vunpack.c.h.b16 %v163
  %v1118 = vunpack.c.l.b16 %v164
  %v1119 = vunpack.c.h.b16 %v164
  %v1120 = vunpack.c.l.b16 %v165
  %v1121 = vunpack.c.h.b16 %v165
  %v1122 = vunpack.c.l.b16 %v166
  %v1123 = vunpack.c.h.b16 %v166
  %v1124 = vunpack.c.l.b16 %v167
  %v1125 = vunpack.c.h.b16 %v167
  %v1126 = vunpack.c.l.b16 %v168
  %v1127 = vunpack.c.h.b16 %v168
  %v1128 = vunpack.c.l.b16 %v169
  %v1129 = vunpack.c.h.b16 %v169
  %v1130 = vunpack.c.l.b16 %v170
  %v1131 = vunpack.c.h.b16 %v170
  %v1132 = vunpack.c.l.b16 %v171
  %v1133 = vunpack.c.h.b16 %v171
  %v1134 = vunpack.c.l.b16 %v172
  %v1135 = vunpack.c.h.b16 %v172
  %v1136 = vunpack.c.l.b16 %v173
  %v1137 = vunpack.c.h.b16 %v173
  %v1138 = vunpack.c.l.b16 %v174
  %v1139 = vunpack.c.h.b16 %v174
  %v1140 = vunpack.c.l.b16 %v175
  %v1141 = vunpack.c.h.b16 %v175
  %v1142 = vunpack.c.l.b16 %v176
  %v1143 = vunpack.c.h.b16 %v176
  %v1144 = vunpack.c.l.b16 %v177
  %v1145 = vunpack.c.h.b16 %v177
  %v1146 = vunpack.c.l.b16 %v178
  %v1147 = vunpack.c.h.b16 %v178
  %v1148 = vunpack.c.l.b16 %v179
  %v1149 = vunpack.c.h.b16 %v179
  %v1150 = vunpack.c.l.b16 %v180
  %v1151 = vunpack.c.h.b16 %v180
  %v1152 = vunpack.c.l.b16 %v181
  %v1153 = vunpack.c.h.b16 %v181
  %v1154 = vunpack.c.l.b16 %v182
  %v1155 = vunpack.c.h.b16 %v182
  %v1156 = vunpack.c.l.b16 %v183
  %v1157 = vunpack.c.h.b16 %v183
  %v1158 = vunpack.c.l.b16 %v184
  %v1159 = vunpack.c.h.b16 %v184
  %v1160 = vunpack.c.l.b16 %v185
  %v1161 = vunpack.c.h.b16 %v185
  %v1162 = vunpack.c.l.b16 %v186
  %v1163 = vunpack.c.h.b16 %v186
  %v1164 = vunpack.c.l.b16 %v187
  %v1165 = vunpack.c.h.b16 %v187
  %v1166 = vunpack.c.l.b16 %v188
  %v1167 = vunpack.c.h.b16 %v188
  %v1168 = vunpack.c.l.b16 %v189
  %v1169 = vunpack.c.h.b16 %v189
  %v1170 = vunpack.c.l.b16 %v190
  %v1171 = vunpack.c.h.b16 %v190
  %v1172 = vunpack.c.l.b16 %v191
  %v1173 = vunpack.c.h.b16 %v191
  %v1174 = vunpack.c.l.b16 %v192
  %v1175 = vunpack.c.h.b16 %v192
  %v1176 = vunpack.c.l.b16 %v193
  %v1177 = vunpack.c.h.b16 %v193
  %v1178 = vunpack.c.l.b16 %v194
  %v1179 = vunpack.c.h.b16 %v194
  %v1180 = vunpack.c.l.b16 %v195
  %v1181 = vunpack.c.h.b16 %v195
  %v1182 = vunpack.c.l.b16 %v196
  %v1183 = vunpack.c.h.b16 %v196
  %v1184 = vunpack.c.l.b16 %v197
  %v1185 = vunpack.c.h.b16 %v197
  %v1186 = vunpack.c.l.b16 %v198
  %v1187 = vunpack.c.h.b16 %v198
  %v1188 = vunpack.c.l.b16 %v199
  %v1189 = vunpack.c.h.b16 %v199
  %v1190 = vunpack.c.l.b16 %v200
  %v1191 = vunpack.c.h.b16 %v200
  %v1192 = vunpack.c.l.b16 %v201
  %v1193 = vunpack.c.h.b16 %v201
  %v1194 = vunpack.c.l.b16 %v202
  %v1195 = vunpack.c.h.b16 %v202
  %v1196 = vunpack.c.l.b16 %v203
  %v1197 = vunpack.c.h.b16 %v203
  %v1198 = vunpack.c.l.b16 %v204
  %v1199 = vunpack.c.h.b16 %v204
  %v1200 = vunpack.c.l.b16 %v205
  %v1201 = vunpack.c.h.b16 %v205
  %v1202 = vunpack.c.l.b16 %v206
  %v1203 = vunpack.c.h.b16 %v206
  %v1204 = vunpack.c.l.b16 %v207
  %v1205 = vunpack.c.h.b16 %v207
  %v1206 = vunpack.c.l.b16 %v208
  %v1207 = vunpack.c.h.b16 %v208
  %v1208 = vunpack.c.l.b16 %v209
  %v1209 = vunpack.c.h.b16 %v209
  %v1210 = vunpack.c.l.b16 %v210
  %v1211 = vunpack.c.h.b16 %v210
  %v1212 = vunpack.c.l.b16 %v211
  %v1213 = vunpack.c.h.b16 %v211
  %v1214 = vunpack.c.l.b16 %v212
  %v1215 = vunpack.c.h.b16 %v212
  %v1216 = vunpack.c.l.b16 %v213
  %v1217 = vunpack.c.h.b16 %v213
  %v1218 = vunpack.c.l.b16 %v214
  %v1219 = vunpack.c.h.b16 %v214
  %v1220 = vunpack.c.l.b16 %v215
  %v1221 = vunpack.c.h.b16 %v215
  %v1222 = vunpack.c.l.b16 %v216
  %v1223 = vunpack.c.h.b16 %v216
  %v1224 = vunpack.c.l.b16 %v217
  %v1225 = vunpack.c.h.b16 %v217
  %v1226 = vunpack.c.l.b16 %v218
  %v1227 = vunpack.c.h.b16 %v218
  %v1228 = vunpack.c.l.b16 %v219
  %v1229 = vunpack.c.h.b16 %v219
  %v1230 = vunpack.c.l.b16 %v220
  %v1231 = vunpack.c.h.b16 %v220
  %v1232 = vunpack.c.l.b16 %v221
  %v1233 = vunpack.c.h.b16 %v221
  %v1234 = vunpack.c.l.b16 %v222
  %v1235 = vunpack.c.h.b16 %v222
  %v1236 = vunpack.c.l.b16 %v223
  %v1237 = vunpack.c.h.b16 %v223
  %v1238 = vunpack.c.l.b16 %v224
  %v1239 = vunpack.c.h.b16 %v224
  %v1240 = vunpack.c.l.b16 %v225
  %v1241 = vunpack.c.h.b16 %v225
  %v1242 = vunpack.c.l.b16 %v226
  %v1243 = vunpack.c.h.b16 %v226
  %v1244 = vunpack.c.l.b16 %v227
  %v1245 = vunpack.c.h.b16 %v227
  %v1246 = vunpack.c.l.b16 %v228
  %v1247 = vunpack.c.h.b16 %v228
  %v1248 = vunpack.c.l.b16 %v229
  %v1249 = vunpack.c.h.b16 %v229
  %v1250 = vunpack.c.l.b16 %v230
  %v1251 = vunpack.c.h.b16 %v230
  %v1252 = vunpack.c.l.b16 %v231
  %v1253 = vunpack.c.h.b16 %v231
  %v1254 = vunpack.c.l.b16 %v232
  %v1255 = vunpack.c.h.b16 %v232
  %v1256 = vunpack.c.l.b16 %v233
  %v1257 = vunpack.c.h.b16 %v233
  %v1258 = vunpack.c.l.b16 %v234
  %v1259 = vunpack.c.h.b16 %v234
  %v1260 = vunpack.c.l.b16 %v235
  %v1261 = vunpack.c.h.b16 %v235
  %v1262 = vunpack.c.l.b16 %v236
  %v1263 = vunpack.c.h.b16 %v236
  %v1264 = vunpack.c.l.b16 %v237
  %v1265 = vunpack.c.h.b16 %v237
  %v1266 = vunpack.c.l.b16 %v238
  %v1267 = vunpack.c.h.b16 %v238
  %v1268 = vunpack.c.l.b16 %v239
  %v1269 = vunpack.c.h.b16 %v239
  %v1270 = vunpack.c.l.b16 %v240
  %v1271 = vunpack.c.h.b16 %v240
  %v1272 = vunpack.c.l.b16 %v241
  %v1273 = vunpack.c.h.b16 %v241
  %v1274 = vunpack.c.l.b16 %v242
  %v1275 = vunpack.c.h.b16 %v242
  %v1276 = vunpack.c.l.b16 %v243
  %v1277 = vunpack.c.h.b16 %v243
  %v1278 = vunpack.c.l.b16 %v244
  %v1279 = vunpack.c.h.b16 %v244
  %v1280 = vunpack.c.l.b16 %v245
  %v1281 = vunpack.c.h.b16 %v245
  %v1282 = vunpack.c.l.b16 %v246
  %v1283 = vunpack.c.h.b16 %v246
  %v1284 = vunpack.c.l.b16 %v247
  %v1285 = vunpack.c.h.b16 %v247
  %v1286 = vunpack.c.l.b16 %v248
  %v1287 = vunpack.c.h.b16 %v248
  %v1288 = vunpack.c.l.b16 %v249
  %v1289 = vunpack.c.h.b16 %v249
  %v1290 = vunpack.c.l.b16 %v250
  %v1291 = vunpack.c.h.b16 %v250
  %v1292 = vunpack.c.l.b16 %v251
  %v1293 = vunpack.c.h.b16 %v251
  %v1294 = vunpack.c.l.b16 %v252
  %v1295 = vunpack.c.h.b16 %v252
  %v1296 = vunpack.c.l.b16 %v253
  %v1297 = vunpack.c.h.b16 %v253
  %v1298 = vunpack.c.l.b16 %v254
  %v1299 = vunpack.c.h.b16 %v254
  %v1300 = vunpack.c.l.b16 %v255
  %v1301 = vunpack.c.h.b16 %v255
  %v1302 = vunpack.c.l.b16 %v256
  %v1303 = vunpack.c.h.b16 %v256
  %v1304 = vunpack.c.l.b16 %v257
  %v1305 = vunpack.c.h.b16 %v257
  %v1306 = vunpack.c.l.b16 %v258
  %v1307 = vunpack.c.h.b16 %v258
  %v1308 = vunpack.c.l.b16 %v259
  %v1309 = vunpack.c.h.b16 %v259
  %v1310 = vunpack.c.l.b16 %v260
  %v1311 = vunpack.c.h.b16 %v260
  %v1312 = vunpack.c.l.b16 %v261
  %v1313 = vunpack.c.h.b16 %v261
  %v1314 = vunpack.c.l.b16 %v262
  %v1315 = vunpack.c.h.b16 %v262
  %v1316 = vunpack.c.l.b16 %v263
  %v1317 = vunpack.c.h.b16 %v263
  %v1318 = vunpack.c.l.b16 %v264
  %v1319 = vunpack.c.h.b16 %v264
  %v1320 = vunpack.c.l.b16 %v265
  %v1321 = vunpack.c.h.b16 %v265
  %v1322 = vunpack.c.l.b16 %v266
  %v1323 = vunpack.c.h.b16 %v266
  %v1324 = vunpack.c.l.b16 %v267
  %v1325 = vunpack.c.h.b16 %v267
  %v1326 = vunpack.c.l.b16 %v268
  %v1327 = vunpack.c.h.b16 %v268
  %v1328 = vunpack.c.l.b16 %v269
  %v1329 = vunpack.c.h.b16 %v269
  %v1330 = vunpack.c.l.b16 %v270
  %v1331 = vunpack.c.h.b16 %v270
  %v1332 = vunpack.c.l.b16 %v271
  %v1333 = vunpack.c.h.b16 %v271
  %v1334 = vunpack.c.l.b16 %v272
  %v1335 = vunpack.c.h.b16 %v272
  %v1336 = vunpack.c.l.b16 %v273
  %v1337 = vunpack.c.h.b16 %v273
  %v1338 = vunpack.c.l.b16 %v274
  %v1339 = vunpack.c.h.b16 %v274
  %v1340 = vunpack.c.l.b16 %v275
  %v1341 = vunpack.c.h.b16 %v275
  %v1342 = vunpack.c.l.b16 %v276
  %v1343 = vunpack.c.h.b16 %v276
  %v1344 = vunpack.c.l.b16 %v277
  %v1345 = vunpack.c.h.b16 %v277
  %v1346 = vunpack.c.l.b16 %v278
  %v1347 = vunpack.c.h.b16 %v278
  %v1348 = vunpack.c.l.b16 %v279
  %v1349 = vunpack.c.h.b16 %v279
  %v1350 = vunpack.c.l.b16 %v280
  %v1351 = vunpack.c.h.b16 %v280
  %v1352 = vunpack.c.l.b16 %v281
  %v1353 = vunpack.c.h.b16 %v281
  %v1354 = vunpack.c.l.b16 %v282
  %v1355 = vunpack.c.h.b16 %v282
  %v1356 = vunpack.c.l.b16 %v283
  %v1357 = vunpack.c.h.b16 %v283
  %v1358 = vunpack.c.l.b16 %v284
  %v1359 = vunpack.c.h.b16 %v284
  %v1360 = vunpack.c.l.b16 %v285
  %v1361 = vunpack.c.h.b16 %v285
  %v1362 = vunpack.c.l.b16 %v286
  %v1363 = vunpack.c.h.b16 %v286
  %v1364 = vunpack.c.l.b16 %v287
  %v1365 = vunpack.c.h.b16 %v287
  %v1366 = vunpack.c.l.b16 %v288
  %v1367 = vunpack.c.h.b16 %v288
  %v1368 = vunpack.c.l.b16 %v289
  %v1369 = vunpack.c.h.b16 %v289
  %v1370 = vunpack.c.l.b16 %v290
  %v1371 = vunpack.c.h.b16 %v290
  %v1372 = vunpack.c.l.b16 %v291
  %v1373 = vunpack.c.h.b16 %v291
  %v1374 = vunpack.c.l.b16 %v292
  %v1375 = vunpack.c.h.b16 %v292
  %v1376 = vunpack.c.l.b16 %v293
  %v1377 = vunpack.c.h.b16 %v293
  %v1378 = vunpack.c.l.b16 %v294
  %v1379 = vunpack.c.h.b16 %v294
  %v1380 = vunpack.c.l.b16 %v295
  %v1381 = vunpack.c.h.b16 %v295
  %v1382 = vunpack.c.l.b16 %v296
  %v1383 = vunpack.c.h.b16 %v296
  %v1384 = vunpack.c.l.b16 %v297
  %v1385 = vunpack.c.h.b16 %v297
  %v1386 = vunpack.c.l.b16 %v298
  %v1387 = vunpack.c.h.b16 %v298
  %v1388 = vunpack.c.l.b16 %v299
  %v1389 = vunpack.c.h.b16 %v299
  %v1390 = vunpack.c.l.b16 %v300
  %v1391 = vunpack.c.h.b16 %v300
  %v1392 = vunpack.c.l.b16 %v301
  %v1393 = vunpack.c.h.b16 %v301
  %v1394 = vunpack.c.l.b16 %v302
  %v1395 = vunpack.c.h.b16 %v302
  %v1396 = vunpack.c.l.b16 %v303
  %v1397 = vunpack.c.h.b16 %v303
  %v1398 = vunpack.c.l.b16 %v304
  %v1399 = vunpack.c.h.b16 %v304
  %v1400 = vunpack.c.l.b16 %v305
  %v1401 = vunpack.c.h.b16 %v305
  %v1402 = vunpack.c.l.b16 %v306
  %v1403 = vunpack.c.h.b16 %v306
  %v1404 = vunpack.c.l.b16 %v307
  %v1405 = vunpack.c.h.b16 %v307
  %v1406 = vunpack.c.l.b16 %v308
  %v1407 = vunpack.c.h.b16 %v308
  %v1408 = vunpack.c.l.b16 %v309
  %v1409 = vunpack.c.h.b16 %v309
  %v1410 = vunpack.c.l.b16 %v310
  %v1411 = vunpack.c.h.b16 %v310
  %v1412 = vunpack.c.l.b16 %v311
  %v1413 = vunpack.c.h.b16 %v311
  %v1414 = vunpack.c.l.b16 %v312
  %v1415 = vunpack.c.h.b16 %v312
  %v1416 = vunpack.c.l.b16 %v313
  %v1417 = vunpack.c.h.b16 %v313
  %v1418 = vunpack.c.l.b16 %v314
  %v1419 = vunpack.c.h.b16 %v314
  %v1420 = vunpack.c.l.b16 %v315
  %v1421 = vunpack.c.h.b16 %v315
  %v1422 = vunpack.c.l.b16 %v316
  %v1423 = vunpack.c.h.b16 %v316
  %v1424 = vunpack.c.l.b16 %v317
  %v1425 = vunpack.c.h.b16 %v317
  %v1426 = vunpack.c.l.b16 %v318
  %v1427 = vunpack.c.h.b16 %v318
  %v1428 = vunpack.c.l.b16 %v319
  %v1429 = vunpack.c.h.b16 %v319
  %v1430 = vunpack.c.l.b16 %v320
  %v1431 = vunpack.c.h.b16 %v320
  %v1432 = vunpack.c.l.b16 %v321
  %v1433 = vunpack.c.h.b16 %v321
  %v1434 = vunpack.c.l.b16 %v322
  %v1435 = vunpack.c.h.b16 %v322
  %v1436 = vunpack.c.l.b16 %v323
  %v1437 = vunpack.c.h.b16 %v323
  %v1438 = vunpack.c.l.b16 %v324
  %v1439 = vunpack.c.h.b16 %v324
  %v1440 = vunpack.c.l.b16 %v325
  %v1441 = vunpack.c.h.b16 %v325
  %v1442 = vunpack.c.l.b16 %v326
  %v1443 = vunpack.c.h.b16 %v326
  %v1444 = vunpack.c.l.b16 %v327
  %v1445 = vunpack.c.h.b16 %v327
  %v1446 = vunpack.c.l.b16 %v328
  %v1447 = vunpack.c.h.b16 %v328
  %v1448 = vunpack.c.l.b16 %v329
  %v1449 = vunpack.c.h.b16 %v329
  %v1450 = vunpack.c.l.b16 %v330
  %v1451 = vunpack.c.h.b16 %v330
  %v1452 = vunpack.c.l.b16 %v331
  %v1453 = vunpack.c.h.b16 %v331
  %v1454 = vunpack.c.l.b16 %v332
  %v1455 = vunpack.c.h.b16 %v332
  %v1456 = vunpack.c.l.b16 %v333
  %v1457 = vunpack.c.h.b16 %v333
  %v1458 = vunpack.c.l.b16 %v334
  %v1459 = vunpack.c.h.b16 %v334
  %v1460 = vunpack.c.l.b16 %v335
  %v1461 = vunpack.c.h.b16 %v335
  %v1462 = vunpack.c.l.b16 %v336
  %v1463 = vunpack.c.h.b16 %v336
  %v1464 = vunpack.c.l.b16 %v337
  %v1465 = vunpack.c.h.b16 %v337
  %v1466 = vunpack.c.l.b16 %v338
  %v1467 = vunpack.c.h.b16 %v338
  %v1468 = vunpack.c.l.b16 %v339
  %v1469 = vunpack.c.h.b16 %v339
  %v1470 = vunpack.c.l.b16 %v340
  %v1471 = vunpack.c.h.b16 %v340
  %v1472 = vunpack.c.l.b16 %v341
  %v1473 = vunpack.c.h.b16 %v341
  %v1474 = vunpack.c.l.b16 %v342
  %v1475 = vunpack.c.h.b16 %v342
  %v1476 = vunpack.c.l.b16 %v343
  %v1477 = vunpack.c.h.b16 %v343
  %v1478 = vunpack.c.l.b16 %v344
  %v1479 = vunpack.c.h.b16 %v344
  %v1480 = vunpack.c.l.b16 %v345
  %v1481 = vunpack.c.h.b16 %v345
  %v1482 = vunpack.c.l.b16 %v346
  %v1483 = vunpack.c.h.b16 %v346
  %v1484 = vunpack.c.l.b16 %v347
  %v1485 = vunpack.c.h.b16 %v347
  %v1486 = vunpack.c.l.b16 %v348
  %v1487 = vunpack.c.h.b16 %v348
  %v1488 = vunpack.c.l.b16 %v349
  %v1489 = vunpack.c.h.b16 %v349
  %v1490 = vunpack.c.l.b16 %v350
  %v1491 = vunpack.c.h.b16 %v350
  %v1492 = vunpack.c.l.b16 %v351
  %v1493 = vunpack.c.h.b16 %v351
  %v1494 = vunpack.c.l.b16 %v352
  %v1495 = vunpack.c.h.b16 %v352
  %v1496 = vunpack.c.l.b16 %v353
  %v1497 = vunpack.c.h.b16 %v353
  %v1498 = vpack.c.b16 %v852, %v850
  %v1499 = vpack.c.b16 %v853, %v851
  %v1500 = vpack.c.b16 %v856, %v854
  %v1501 = vpack.c.b16 %v857, %v855
  %v1502 = vpack.c.b16 %v860, %v858
  %v1503 = vpack.c.b16 %v861, %v859
  %v1504 = vpack.c.b16 %v864, %v862
  %v1505 = vpack.c.b16 %v865, %v863
  %v1506 = vpack.c.b16 %v868, %v866
  %v1507 = vpack.c.b16 %v869, %v867
  %v1508 = vpack.c.b16 %v872, %v870
  %v1509 = vpack.c.b16 %v873, %v871
  %v1510 = vpack.c.b16 %v876, %v874
  %v1511 = vpack.c.b16 %v877, %v875
  %v1512 = vpack.c.b16 %v880, %v878
  %v1513 = vpack.c.b16 %v881, %v879
  %v1514 = vpack.c.b16 %v884, %v882
  %v1515 = vpack.c.b16 %v885, %v883
  %v1516 = vpack.c.b16 %v888, %v886
  %v1517 = vpack.c.b16 %v889, %v887
  %v1518 = vpack.c.b16 %v892, %v890
  %v1519 = vpack.c.b16 %v893, %v891
  %v1520 = vpack.c.b16 %v896, %v894
  %v1521 = vpack.c.b16 %v897, %v895
  %v1522 = vpack.c.b16 %v900, %v898
  %v1523 = vpack.c.b16 %v901, %v899
  %v1524 = vpack.c.b16 %v904, %v902
  %v1525 = vpack.c.b16 %v905, %v903
  %v1526 = vpack.c.b16 %v908, %v906
  %v1527 = vpack.c.b16 %v909, %v907
  %v1528 = vpack.c.b16 %v912, %v910
  %v1529 = vpack.c.b16 %v913, %v911
  %v1530 = vpack.c.b16 %v916, %v914
  %v1531 = vpack.c.b16 %v917, %v915
  %v1532 = vpack.c.b16 %v920, %v918
  %v1533 = vpack.c.b16 %v921, %v919
  %v1534 = vpack.c.b16 %v924, %v922
  %v1535 = vpack.c.b16 %v925, %v923
  %v1536 = vpack.c.b16 %v928, %v926
  %v1537 = vpack.c.b16 %v929, %v927
  %v1538 = vpack.c.b16 %v932, %v930
  %v1539 = vpack.c.b16 %v933, %v931
  %v1540 = vpack.c.b16 %v936, %v934
  %v1541 = vpack.c.b16 %v937, %v935
  %v1542 = vpack.c.b16 %v940, %v938
  %v1543 = vpack.c.b16 %v941, %v939
  %v1544 = vpack.c.b16 %v944, %v942
  %v1545 = vpack.c.b16 %v945, %v943
  %v1546 = vpack.c.b16 %v948, %v946
  %v1547 = vpack.c.b16 %v949, %v947
  %v1548 = vpack.c.b16 %v952, %v950
  %v1549 = vpack.c.b16 %v953, %v951
  %v1550 = vpack.c.b16 %v956, %v954
  %v1551 = vpack.c.b16 %v957, %v955
  %v1552 = vpack.c.b16 %v960, %v958
  %v1553 = vpack.c.b16 %v961, %v959
  %v1554 = vpack.c.b16 %v964, %v962
  %v1555 = vpack.c.b16 %v965, %v963
  %v1556 = vpack.c.b16 %v968, %v966
  %v1557 = vpack.c.b16 %v969, %v967
  %v1558 = vpack.c.b16 %v972, %v970
  %v1559 = vpack.c.b16 %v973, %v971
  %v1560 = vpack.c.b16 %v976, %v974
  %v1561 = vpack.c.b16 %v977, %v975
  %v1562 = vpack.c.b16 %v980, %v978
  %v1563 = vpack.c.b16 %v981, %v979
  %v1564 = vpack.c.b16 %v984, %v982
  %v1565 = vpack.c.b16 %v985, %v983
  %v1566 = vpack.c.b16 %v988, %v986
  %v1567 = vpack.c.b16 %v989, %v987
  %v1568 = vpack.c.b16 %v992, %v990
  %v1569 = vpack.c.b16 %v993, %v991
  %v1570 = vpack.c.b16 %v996, %v994
  %v1571 = vpack.c.b16 %v997, %v995
  %v1572 = vpack.c.b16 %v1000, %v998
  %v1573 = vpack.c.b16 %v1001, %v999
  %v1574 = vpack.c.b16 %v1004, %v1002
  %v1575 = vpack.c.b16 %v1005, %v1003
  %v1576 = vpack.c.b16 %v1008, %v1006
  %v1577 = vpack.c.b16 %v1009, %v1007
  %v1578 = vpack.c.b16 %v1012, %v1010
  %v1579 = vpack.c.b16 %v1013, %v1011
  %v1580 = vpack.c.b16 %v1016, %v1014
  %v1581 = vpack.c.b16 %v1017, %v1015
  %v1582 = vpack.c.b16 %v1020, %v1018
  %v1583 = vpack.c.b16 %v1021, %v1019
  %v1584 = vpack.c.b16 %v1024, %v1022
  %v1585 = vpack.c.b16 %v1025, %v1023
  %v1586 = vpack.c.b16 %v1028, %v1026
  %v1587 = vpack.c.b16 %v1029, %v1027
  %v1588 = vpack.c.b16 %v1032, %v1030
  %v1589 = vpack.c.b16 %v1033, %v1031
  %v1590 = vpack.c.b16 %v1036, %v1034
  %v1591 = vpack.c.b16 %v1037, %v1035
  %v1592 = vpack.c.b16 %v1040, %v1038
  %v1593 = vpack.c.b16 %v1041, %v1039
  %v1594 = vpack.c.b16 %v1044, %v1042
  %v1595 = vpack.c.b16 %v1045, %v1043
  %v1596 = vpack.c.b16 %v1048, %v1046
  %v1597 = vpack.c.b16 %v1049, %v1047
  %v1598 = vpack.c.b16 %v1052, %v1050
  %v1599 = vpack.c.b16 %v1053, %v1051
  %v1600 = vpack.c.b16 %v1056, %v1054
  %v1601 = vpack.c.b16 %v1057, %v1055
  %v1602 = vpack.c.b16 %v1060, %v1058
  %v1603 = vpack.c.b16 %v1061, %v1059
  %v1604 = vpack.c.b16 %v1064, %v1062
  %v1605 = vpack.c.b16 %v1065, %v1063
  %v1606 = vpack.c.b16 %v1068, %v1066
  %v1607 = vpack.c.b16 %v1069, %v1067
  %v1608 = vpack.c.b16 %v1072, %v1070
  %v1609 = vpack.c.b16 %v1073, %v1071
  %v1610 = vpack.c.b16 %v1076, %v1074
  %v1611 = vpack.c.b16 %v1077, %v1075
  %v1612 = vpack.c.b16 %v1080, %v1078
  %v1613 = vpack.c.b16 %v1081, %v1079
  %v1614 = vpack.c.b16 %v1084, %v1082
  %v1615 = vpack.c.b16 %v1085, %v1083
  %v1616 = vpack.c.b16 %v1088, %v1086
  %v1617 = vpack.c.b16 %v1089, %v1087
  %v1618 = vpack.c.b16 %v1092, %v1090
  %v1619 = vpack.c.b16 %v1093, %v1091
  %v1620 = vpack.c.b16 %v1096, %v1094
  %v1621 = vpack.c.b16 %v1097, %v1095
  %v1622 = vpack.c.b16 %v1100, %v1098
  %v1623 = vpack.c.b16 %v1101, %v1099
  %v1624 = vpack.c.b16 %v1104, %v1102
  %v1625 = vpack.c.b16 %v1105, %v1103
  %v1626 = vpack.c.b16 %v1108, %v1106
  %v1627 = vpack.c.b16 %v1109, %v1107
  %v1628 = vpack.c.b16 %v1112, %v1110
  %v1629 = vpack.c.b16 %v1113, %v1111
  %v1630 = vpack.c.b16 %v1116, %v1114
  %v1631 = vpack.c.b16 %v1117, %v1115
  %v1632 = vpack.c.b16 %v1120, %v1118
  %v1633 = vpack.c.b16 %v1121, %v1119
  %v1634 = vpack.c.b16 %v1124, %v1122
  %v1635 = vpack.c.b16 %v1125, %v1123
  %v1636 = vpack.c.b16 %v1128, %v1126
  %v1637 = vpack.c.b16 %v1129, %v1127
  %v1638 = vpack.c.b16 %v1132, %v1130
  %v1639 = vpack.c.b16 %v1133, %v1131
  %v1640 = vpack.c.b16 %v1136, %v1134
  %v1641 = vpack.c.b16 %v1137, %v1135
  %v1642 = vpack.c.b16 %v1140, %v1138
  %v1643 = vpack.c.b16 %v1141, %v1139
  %v1644 = vpack.c.b16 %v1144, %v1142
  %v1645 = vpack.c.b16 %v1145, %v1143
  %v1646 = vpack.c.b16 %v1148, %v1146
  %v1647 = vpack.c.b16 %v1149, %v1147
  %v1648 = vpack.c.b16 %v1152, %v1150
  %v1649 = vpack.c.b16 %v1153, %v1151
  %v1650 = vpack.c.b16 %v1156, %v1154
  %v1651 = vpack.c.b16 %v1157, %v1155
  %v1652 = vpack.c.b16 %v1160, %v1158
  %v1653 = vpack.c.b16 %v1161, %v1159
  %v1654 = vpack.c.b16 %v1164, %v1162
  %v1655 = vpack.c.b16 %v1165, %v1163
  %v1656 = vpack.c.b16 %v1168, %v1166
  %v1657 = vpack.c.b16 %v1169, %v1167
  %v1658 = vpack.c.b16 %v1172, %v1170
  %v1659 = vpack.c.b16 %v1173, %v1171
  %v1660 = vpack.c.b16 %v1176, %v1174
  %v1661 = vpack.c.b16 %v1177, %v1175
  %v1662 = vpack.c.b16 %v1180, %v1178
  %v1663 = vpack.c.b16 %v1181, %v1179
  %v1664 = vpack.c.b16 %v1184, %v1182
  %v1665 = vpack.c.b16 %v1185, %v1183
  %v1666 = vpack.c.b16 %v1188, %v1186
  %v1667 = vpack.c.b16 %v1189, %v1187
  %v1668 = vpack.c.b16 %v1192, %v1190
  %v1669 = vpack.c.b16 %v1193, %v1191
  %v1670 = vpack.c.b16 %v1196, %v1194
  %v1671 = vpack.c.b16 %v1197, %v1195
  %v1672 = vpack.c.b16 %v1200, %v1198
  %v1673 = vpack.c.b16 %v1201, %v1199
  %v1674 = vpack.c.b16 %v1204, %v1202
  %v1675 = vpack.c.b16 %v1205, %v1203
  %v1676 = vpack.c.b16 %v1208, %v1206
  %v1677 = vpack.c.b16 %v1209, %v1207
  %v1678 = vpack.c.b16 %v1212, %v1210
  %v1679 = vpack.c.b16 %v1213, %v1211
  %v1680 = vpack.c.b16 %v1216, %v1214
  %v1681 = vpack.c.b16 %v1217, %v1215
  %v1682 = vpack.c.b16 %v1220, %v1218
  %v1683 = vpack.c.b16 %v1221, %v1219
  %v1684 = vpack.c.b16 %v1224, %v1222
  %v1685 = vpack.c.b16 %v1225, %v1223
  %v1686 = vpack.c.b16 %v1228, %v1226
  %v1687 = vpack.c.b16 %v1229, %v1227
  %v1688 = vpack.c.b16 %v1232, %v1230
  %v1689 = vpack.c.b16 %v1233, %v1231
  %v1690 = vpack.c.b16 %v1236, %v1234
  %v1691 = vpack.c.b16 %v1237, %v1235
  %v1692 = vpack.c.b16 %v1240, %v1238
  %v1693 = vpack.c.b16 %v1241, %v1239
  %v1694 = vpack.c.b16 %v1244, %v1242
  %v1695 = vpack.c.b16 %v1245, %v1243
  %v1696 = vpack.c.b16 %v1248, %v1246
  %v1697 = vpack.c.b16 %v1249, %v1247
  %v1698 = vpack.c.b16 %v1252, %v1250
  %v1699 = vpack.c.b16 %v1253, %v1251
  %v1700 = vpack.c.b16 %v1256, %v1254
  %v1701 = vpack.c.b16 %v1257, %v1255
  %v1702 = vpack.c.b16 %v1260, %v1258
  %v1703 = vpack.c.b16 %v1261, %v1259
  %v1704 = vpack.c.b16 %v1264, %v1262
  %v1705 = vpack.c.b16 %v1265, %v1263
  %v1706 = vpack.c.b16 %v1268, %v1266
  %v1707 = vpack.c.b16 %v1269, %v1267
  %v1708 = vpack.c.b16 %v1272, %v1270
  %v1709 = vpack.c.b16 %v1273, %v1271
  %v1710 = vpack.c.b16 %v1276, %v1274
  %v1711 = vpack.c.b16 %v1277, %v1275
  %v1712 = vpack.c.b16 %v1280, %v1278
  %v1713 = vpack.c.b16 %v1281, %v1279
  %v1714 = vpack.c.b16 %v1284, %v1282
  %v1715 = vpack.c.b16 %v1285, %v1283
  %v1716 = vpack.c.b16 %v1288, %v1286
  %v1717 = vpack.c.b16 %v1289, %v1287
  %v1718 = vpack.c.b16 %v1292, %v1290
  %v1719 = vpack.c.b16 %v1293, %v1291
  %v1720 = vpack.c.b16 %v1296, %v1294
  %v1721 = vpack.c.b16 %v1297, %v1295
  %v1722 = vpack.c.b16 %v1300, %v1298
  %v1723 = vpack.c.b16 %v1301, %v1299
  %v1724 = vpack.c.b16 %v1304, %v1302
  %v1725 = vpack.c.b16 %v1305, %v1303
  %v1726 = vpack.c.b16 %v1308, %v1306
  %v1727 = vpack.c.b16 %v1309, %v1307
  %v1728 = vpack.c.b16 %v1312, %v1310
  %v1729 = vpack.c.b16 %v1313, %v1311
  %v1730 = vpack.c.b16 %v1316, %v1314
  %v1731 = vpack.c.b16 %v1317, %v1315
  %v1732 = vpack.c.b16 %v1320, %v1318
  %v1733 = vpack.c.b16 %v1321, %v1319
  %v1734 = vpack.c.b16 %v1324, %v1322
  %v1735 = vpack.c.b16 %v1325, %v1323
  %v1736 = vpack.c.b16 %v1328, %v1326
  %v1737 = vpack.c.b16 %v1329, %v1327
  %v1738 = vpack.c.b16 %v1332, %v1330
  %v1739 = vpack.c.b16 %v1333, %v1331
  %v1740 = vpack.c.b16 %v1336, %v1334
  %v1741 = vpack.c.b16 %v1337, %v1335
  %v1742 = vpack.c.b16 %v1340, %v1338
  %v1743 = vpack.c.b16 %v1341, %v1339
  %v1744 = vpack.c.b16 %v1344, %v1342
  %v1745 = vpack.c.b16 %v1345, %v1343
  %v1746 = vpack.c.b16 %v1348, %v1346
  %v1747 = vpack.c.b16 %v1349, %v1347
  %v1748 = vpack.c.b16 %v1352, %v1350
  %v1749 = vpack.c.b16 %v1353, %v1351
  %v1750 = vpack.c.b16 %v1356, %v1354
  %v1751 = vpack.c.b16 %v1357, %v1355
  %v1752 = vpack.c.b16 %v1360, %v1358
  %v1753 = vpack.c.b16 %v1361, %v1359
  %v1754 = vpack.c.b16 %v1364, %v1362
  %v1755 = vpack.c.b16 %v1365, %v1363
  %v1756 = vpack.c.b16 %v1368, %v1366
  %v1757 = vpack.c.b16 %v1369, %v1367
  %v1758 = vpack.c.b16 %v1372, %v1370
  %v1759 = vpack.c.b16 %v1373, %v1371
  %v1760 = vpack.c.b16 %v1376, %v1374
  %v1761 = vpack.c.b16 %v1377, %v1375
  %v1762 = vpack.c.b16 %v1380, %v1378
  %v1763 = vpack.c.b16 %v1381, %v1379
  %v1764 = vpack.c.b16 %v1384, %v1382
  %v1765 = vpack.c.b16 %v1385, %v1383
  %v1766 = vpack.c.b16 %v1388, %v1386
  %v1767 = vpack.c.b16 %v1389, %v1387
  %v1768 = vpack.c.b16 %v1392, %v1390
  %v1769 = vpack.c.b16 %v1393, %v1391
  %v1770 = vpack.c.b16 %v1396, %v1394
  %v1771 = vpack.c.b16 %v1397, %v1395
  %v1772 = vpack.c.b16 %v1400, %v1398
  %v1773 = vpack.c.b16 %v1401, %v1399
  %v1774 = vpack.c.b16 %v1404, %v1402
  %v1775 = vpack.c.b16 %v1405, %v1403
  %v1776 = vpack.c.b16 %v1408, %v1406
  %v1777 = vpack.c.b16 %v1409, %v1407
  %v1778 = vpack.c.b16 %v1412, %v1410
  %v1779 = vpack.c.b16 %v1413, %v1411
  %v1780 = vpack.c.b16 %v1416, %v1414
  %v1781 = vpack.c.b16 %v1417, %v1415
  %v1782 = vpack.c.b16 %v1420, %v1418
  %v1783 = vpack.c.b16 %v1421, %v1419
  %v1784 = vpack.c.b16 %v1424, %v1422
  %v1785 = vpack.c.b16 %v1425, %v1423
  %v1786 = vpack.c.b16 %v1428, %v1426
  %v1787 = vpack.c.b16 %v1429, %v1427
  %v1788 = vpack.c.b16 %v1432, %v1430
  %v1789 = vpack.c.b16 %v1433, %v1431
  %v1790 = vpack.c.b16 %v1436, %v1434
  %v1791 = vpack.c.b16 %v1437, %v1435
  %v1792 = vpack.c.b16 %v1440, %v1438
  %v1793 = vpack.c.b16 %v1441, %v1439
  %v1794 = vpack.c.b16 %v1444, %v1442
  %v1795 = vpack.c.b16 %v1445, %v1443
  %v1796 = vpack.c.b16 %v1448, %v1446
  %v1797 = vpack.c.b16 %v1449, %v1447
  %v1798 = vpack.c.b16 %v1452, %v1450
  %v1799 = vpack.c.b16 %v1453, %v1451
  %v1800 = vpack.c.b16 %v1456, %v1454
  %v1801 = vpack.c.b16 %v1457, %v1455
  %v1802 = vpack.c.b16 %v1460, %v1458
  %v1803 = vpack.c.b16 %v1461, %v1459
  %v1804 = vpack.c.b16 %v1464, %v1462
  %v1805 = vpack.c.b16 %v1465, %v1463
  %v1806 = vpack.c.b16 %v1468, %v1466
  %v1807 = vpack.c.b16 %v1469, %v1467
  %v1808 = vpack.c.b16 %v1472, %v1470
  %v1809 = vpack.c.b16 %v1473, %v1471
  %v1810 = vpack.c.b16 %v1476, %v1474
  %v1811 = vpack.c.b16 %v1477, %v1475
  %v1812 = vpack.c.b16 %v1480, %v1478
  %v1813 = vpack.c.b16 %v1481, %v1479
  %v1814 = vpack.c.b16 %v1484, %v1482
  %v1815 = vpack.c.b16 %v1485, %v1483
  %v1816 = vpack.c.b16 %v1488, %v1486
  %v1817 = vpack.c.b16 %v1489, %v1487
  %v1818 = vpack.c.b16 %v1492, %v1490
  %v1819 = vpack.c.b16 %v1493, %v1491
  %v1820 = vpack.c.b16 %v1496, %v1494
  %v1821 = vpack.c.b16 %v1497, %v1495
  %vm2146 = vcmask 261120
  %v2148 = vsel %vm2146, %v496, 0
  %2150 = vmatprep.subr.bf16.mxu0 %v1499
  %2151 = vmatpush1.bf16.msra.mxu0 %v1498
  %2152 = vmatprep.subr.bf16.mxu0 %v1501
  %2153 = vmatpush1.bf16.msra.mxu0 %v1500
  %2154 = vmatprep.subr.bf16.mxu0 %v1503
  %2155 = vmatpush1.bf16.msra.mxu0 %v1502
  %2156 = vmatprep.subr.bf16.mxu0 %v1505
  %2157 = vmatpush1.bf16.msra.mxu0 %v1504
  %2158 = vmatprep.subr.bf16.mxu0 %v1507
  %2159 = vmatpush1.bf16.msra.mxu0 %v1506
  %2160 = vmatprep.subr.bf16.mxu0 %v1509
  %2161 = vmatpush1.bf16.msra.mxu0 %v1508
  %2162 = vmatprep.subr.bf16.mxu0 %v1511
  %2163 = vmatpush1.bf16.msra.mxu0 %v1510
  %2164 = vmatprep.subr.bf16.mxu0 %v1513
  %2165 = vmatpush1.bf16.msra.mxu0 %v1512
  %2166 = vmatprep.subr.bf16.mxu0 %v1515
  %2167 = vmatpush1.bf16.msra.mxu0 %v1514
  %2168 = vmatprep.subr.bf16.mxu0 %v1517
  %2169 = vmatpush1.bf16.msra.mxu0 %v1516
  %2170 = vmatprep.subr.bf16.mxu0 %v1519
  %2171 = vmatpush1.bf16.msra.mxu0 %v1518
  %2172 = vmatprep.subr.bf16.mxu0 %v1521
  %2173 = vmatpush1.bf16.msra.mxu0 %v1520
  %2174 = vmatprep.subr.bf16.mxu0 %v1523
  %2175 = vmatpush1.bf16.msra.mxu0 %v1522
  %2176 = vmatprep.subr.bf16.mxu0 %v1525
  %2177 = vmatpush1.bf16.msra.mxu0 %v1524
  %2178 = vmatprep.subr.bf16.mxu0 %v1527
  %2179 = vmatpush1.bf16.msra.mxu0 %v1526
  %2180 = vmatprep.subr.bf16.mxu0 %v1529
  %2181 = vmatpush1.bf16.msra.mxu0 %v1528
  %2182 = vmatprep.mubr.bf16.mxu0 %v406
  %2183 = vmatmul.mubr.bf16.gmra.mrb[0].mxu0 %v392
  %v2184 = vpop.f32.mrb[0].mxu0
  %v2185 = vadd.f32 %v359, %v2184
  %v2186 = vpop.f32.mrb[0].mxu0
  %v2187 = vadd.f32 %v363, %v2186
  %v2188 = vpop.f32.mrb[0].mxu0
  %v2189 = vpop.f32.mrb[0].mxu0
  %2190 = vdwg.mxu0
  %2191 = vmatprep.subr.bf16.mxu0 %v1531
  %2192 = vmatpush1.bf16.msra.mxu0 %v1530
  %2193 = vmatprep.subr.bf16.mxu0 %v1533
  %2194 = vmatpush1.bf16.msra.mxu0 %v1532
  %2195 = vmatprep.subr.bf16.mxu0 %v1535
  %2196 = vmatpush1.bf16.msra.mxu0 %v1534
  %2197 = vmatprep.subr.bf16.mxu0 %v1537
  %2198 = vmatpush1.bf16.msra.mxu0 %v1536
  %2199 = vmatprep.subr.bf16.mxu0 %v1539
  %2200 = vmatpush1.bf16.msra.mxu0 %v1538
  %2201 = vmatprep.subr.bf16.mxu0 %v1541
  %2202 = vmatpush1.bf16.msra.mxu0 %v1540
  %2203 = vmatprep.subr.bf16.mxu0 %v1543
  %2204 = vmatpush1.bf16.msra.mxu0 %v1542
  %2205 = vmatprep.subr.bf16.mxu0 %v1545
  %2206 = vmatpush1.bf16.msra.mxu0 %v1544
  %2207 = vmatprep.subr.bf16.mxu0 %v1547
  %2208 = vmatpush1.bf16.msra.mxu0 %v1546
  %2209 = vmatprep.subr.bf16.mxu0 %v1549
  %2210 = vmatpush1.bf16.msra.mxu0 %v1548
  %2211 = vmatprep.subr.bf16.mxu0 %v1551
  %2212 = vmatpush1.bf16.msra.mxu0 %v1550
  %2213 = vmatprep.subr.bf16.mxu0 %v1553
  %2214 = vmatpush1.bf16.msra.mxu0 %v1552
  %2215 = vmatprep.subr.bf16.mxu0 %v1555
  %2216 = vmatpush1.bf16.msra.mxu0 %v1554
  %2217 = vmatprep.subr.bf16.mxu0 %v1557
  %2218 = vmatpush1.bf16.msra.mxu0 %v1556
  %2219 = vmatprep.subr.bf16.mxu0 %v1559
  %2220 = vmatpush1.bf16.msra.mxu0 %v1558
  %2221 = vmatprep.subr.bf16.mxu0 %v1561
  %2222 = vmatpush1.bf16.msra.mxu0 %v1560
  %2223 = vmatprep.mubr.bf16.mxu0 %v416
  %2224 = vmatmul.mubr.bf16.gmra.mrb[0].mxu0 %v414
  %v2225 = vpop.f32.mrb[0].mxu0
  %v2226 = vadd.f32 %v2185, %v2225
  %v2227 = vpop.f32.mrb[0].mxu0
  %v2228 = vadd.f32 %v2187, %v2227
  %v2229 = vpop.f32.mrb[0].mxu0
  %v2230 = vpop.f32.mrb[0].mxu0
  %2231 = vdwg.mxu0
  %2232 = vmatprep.subr.bf16.mxu0 %v1563
  %2233 = vmatpush1.bf16.msra.mxu0 %v1562
  %2234 = vmatprep.subr.bf16.mxu0 %v1565
  %2235 = vmatpush1.bf16.msra.mxu0 %v1564
  %2236 = vmatprep.subr.bf16.mxu0 %v1567
  %2237 = vmatpush1.bf16.msra.mxu0 %v1566
  %2238 = vmatprep.subr.bf16.mxu0 %v1569
  %2239 = vmatpush1.bf16.msra.mxu0 %v1568
  %2240 = vmatprep.subr.bf16.mxu0 %v1571
  %2241 = vmatpush1.bf16.msra.mxu0 %v1570
  %2242 = vmatprep.subr.bf16.mxu0 %v1573
  %2243 = vmatpush1.bf16.msra.mxu0 %v1572
  %2244 = vmatprep.subr.bf16.mxu0 %v1575
  %2245 = vmatpush1.bf16.msra.mxu0 %v1574
  %2246 = vmatprep.subr.bf16.mxu0 %v1577
  %2247 = vmatpush1.bf16.msra.mxu0 %v1576
  %2248 = vmatprep.subr.bf16.mxu0 %v1579
  %2249 = vmatpush1.bf16.msra.mxu0 %v1578
  %2250 = vmatprep.subr.bf16.mxu0 %v1581
  %2251 = vmatpush1.bf16.msra.mxu0 %v1580
  %2252 = vmatprep.subr.bf16.mxu0 %v1583
  %2253 = vmatpush1.bf16.msra.mxu0 %v1582
  %2254 = vmatprep.subr.bf16.mxu0 %v1585
  %2255 = vmatpush1.bf16.msra.mxu0 %v1584
  %2256 = vmatprep.subr.bf16.mxu0 %v1587
  %2257 = vmatpush1.bf16.msra.mxu0 %v1586
  %2258 = vmatprep.subr.bf16.mxu0 %v1589
  %2259 = vmatpush1.bf16.msra.mxu0 %v1588
  %2260 = vmatprep.subr.bf16.mxu0 %v1591
  %2261 = vmatpush1.bf16.msra.mxu0 %v1590
  %2262 = vmatprep.subr.bf16.mxu0 %v1593
  %2263 = vmatpush1.bf16.msra.mxu0 %v1592
  %2264 = vmatprep.mubr.bf16.mxu0 %v413
  %2265 = vmatmul.mubr.bf16.gmra.mrb[0].mxu0 %v399
  %v2266 = vpop.f32.mrb[0].mxu0
  %v2267 = vadd.f32 %v2226, %v2266
  %v2268 = vpop.f32.mrb[0].mxu0
  %v2269 = vadd.f32 %v2228, %v2268
  %v2270 = vpop.f32.mrb[0].mxu0
  %v2271 = vpop.f32.mrb[0].mxu0
  %2272 = vdwg.mxu0
  %2273 = vmatprep.subr.bf16.mxu0 %v1595
  %2274 = vmatpush1.bf16.msra.mxu0 %v1594
  %2275 = vmatprep.subr.bf16.mxu0 %v1597
  %2276 = vmatpush1.bf16.msra.mxu0 %v1596
  %2277 = vmatprep.subr.bf16.mxu0 %v1599
  %2278 = vmatpush1.bf16.msra.mxu0 %v1598
  %2279 = vmatprep.subr.bf16.mxu0 %v1601
  %2280 = vmatpush1.bf16.msra.mxu0 %v1600
  %2281 = vmatprep.subr.bf16.mxu0 %v1603
  %2282 = vmatpush1.bf16.msra.mxu0 %v1602
  %2283 = vmatprep.subr.bf16.mxu0 %v1605
  %2284 = vmatpush1.bf16.msra.mxu0 %v1604
  %2285 = vmatprep.subr.bf16.mxu0 %v1607
  %2286 = vmatpush1.bf16.msra.mxu0 %v1606
  %2287 = vmatprep.subr.bf16.mxu0 %v1609
  %2288 = vmatpush1.bf16.msra.mxu0 %v1608
  %2289 = vmatprep.subr.bf16.mxu0 %v1611
  %2290 = vmatpush1.bf16.msra.mxu0 %v1610
  %2291 = vmatprep.subr.bf16.mxu0 %v1613
  %2292 = vmatpush1.bf16.msra.mxu0 %v1612
  %2293 = vmatprep.subr.bf16.mxu0 %v1615
  %2294 = vmatpush1.bf16.msra.mxu0 %v1614
  %2295 = vmatprep.subr.bf16.mxu0 %v1617
  %2296 = vmatpush1.bf16.msra.mxu0 %v1616
  %2297 = vmatprep.subr.bf16.mxu0 %v1619
  %2298 = vmatpush1.bf16.msra.mxu0 %v1618
  %2299 = vmatprep.subr.bf16.mxu0 %v1621
  %2300 = vmatpush1.bf16.msra.mxu0 %v1620
  %2301 = vmatprep.subr.bf16.mxu0 %v1623
  %2302 = vmatpush1.bf16.msra.mxu0 %v1622
  %2303 = vmatprep.subr.bf16.mxu0 %v1625
  %2304 = vmatpush1.bf16.msra.mxu0 %v1624
  %2305 = vmatprep.mubr.bf16.mxu0 %v417
  %2306 = vmatmul.mubr.bf16.gmra.mrb[0].mxu0 %v415
  %v2307 = vpop.f32.mrb[0].mxu0
  %v2308 = vadd.f32 %v2267, %v2307
  %v2309 = vpop.f32.mrb[0].mxu0
  %v2310 = vadd.f32 %v2269, %v2309
  %v2311 = vpop.f32.mrb[0].mxu0
  %v2312 = vpop.f32.mrb[0].mxu0
  %2313 = vdwg.mxu0
  %2314 = vmatprep.subr.bf16.mxu0 %v1627
  %2315 = vmatpush1.bf16.msra.mxu0 %v1626
  %2316 = vmatprep.subr.bf16.mxu0 %v1629
  %2317 = vmatpush1.bf16.msra.mxu0 %v1628
  %2318 = vmatprep.subr.bf16.mxu0 %v1631
  %2319 = vmatpush1.bf16.msra.mxu0 %v1630
  %2320 = vmatprep.subr.bf16.mxu0 %v1633
  %2321 = vmatpush1.bf16.msra.mxu0 %v1632
  %2322 = vmatprep.subr.bf16.mxu0 %v1635
  %2323 = vmatpush1.bf16.msra.mxu0 %v1634
  %2324 = vmatprep.subr.bf16.mxu0 %v1637
  %2325 = vmatpush1.bf16.msra.mxu0 %v1636
  %2326 = vmatprep.subr.bf16.mxu0 %v1639
  %2327 = vmatpush1.bf16.msra.mxu0 %v1638
  %2328 = vmatprep.subr.bf16.mxu0 %v1641
  %2329 = vmatpush1.bf16.msra.mxu0 %v1640
  %2330 = vmatprep.subr.bf16.mxu0 %v1643
  %2331 = vmatpush1.bf16.msra.mxu0 %v1642
  %2332 = vmatprep.subr.bf16.mxu0 %v1645
  %2333 = vmatpush1.bf16.msra.mxu0 %v1644
  %2334 = vmatprep.subr.bf16.mxu0 %v1647
  %2335 = vmatpush1.bf16.msra.mxu0 %v1646
  %2336 = vmatprep.subr.bf16.mxu0 %v1649
  %2337 = vmatpush1.bf16.msra.mxu0 %v1648
  %2338 = vmatprep.subr.bf16.mxu0 %v1651
  %2339 = vmatpush1.bf16.msra.mxu0 %v1650
  %2340 = vmatprep.subr.bf16.mxu0 %v1653
  %2341 = vmatpush1.bf16.msra.mxu0 %v1652
  %2342 = vmatprep.subr.bf16.mxu0 %v1655
  %2343 = vmatpush1.bf16.msra.mxu0 %v1654
  %2344 = vmatprep.subr.bf16.mxu0 %v1657
  %2345 = vmatpush1.bf16.msra.mxu0 %v1656
  %2346 = vmatprep.mubr.bf16.mxu0 %v455
  %2347 = vmatmul.mubr.bf16.gmra.mrb[0].mxu0 %v441
  %v2348 = vpop.f32.mrb[0].mxu0
  %v2349 = vadd.f32 %v2308, %v2348
  %v2350 = vpop.f32.mrb[0].mxu0
  %v2351 = vadd.f32 %v2310, %v2350
  %v2352 = vpop.f32.mrb[0].mxu0
  %v2353 = vpop.f32.mrb[0].mxu0
  %2354 = vdwg.mxu0
  %2355 = vmatprep.subr.bf16.mxu0 %v1659
  %2356 = vmatpush1.bf16.msra.mxu0 %v1658
  %2357 = vmatprep.subr.bf16.mxu0 %v1661
  %2358 = vmatpush1.bf16.msra.mxu0 %v1660
  %2359 = vmatprep.subr.bf16.mxu0 %v1663
  %2360 = vmatpush1.bf16.msra.mxu0 %v1662
  %2361 = vmatprep.subr.bf16.mxu0 %v1665
  %2362 = vmatpush1.bf16.msra.mxu0 %v1664
  %2363 = vmatprep.subr.bf16.mxu0 %v1667
  %2364 = vmatpush1.bf16.msra.mxu0 %v1666
  %2365 = vmatprep.subr.bf16.mxu0 %v1669
  %2366 = vmatpush1.bf16.msra.mxu0 %v1668
  %2367 = vmatprep.subr.bf16.mxu0 %v1671
  %2368 = vmatpush1.bf16.msra.mxu0 %v1670
  %2369 = vmatprep.subr.bf16.mxu0 %v1673
  %2370 = vmatpush1.bf16.msra.mxu0 %v1672
  %2371 = vmatprep.subr.bf16.mxu0 %v1675
  %2372 = vmatpush1.bf16.msra.mxu0 %v1674
  %2373 = vmatprep.subr.bf16.mxu0 %v1677
  %2374 = vmatpush1.bf16.msra.mxu0 %v1676
  %2375 = vmatprep.subr.bf16.mxu0 %v1679
  %2376 = vmatpush1.bf16.msra.mxu0 %v1678
  %2377 = vmatprep.subr.bf16.mxu0 %v1681
  %2378 = vmatpush1.bf16.msra.mxu0 %v1680
  %2379 = vmatprep.subr.bf16.mxu0 %v1683
  %2380 = vmatpush1.bf16.msra.mxu0 %v1682
  %2381 = vmatprep.subr.bf16.mxu0 %v1685
  %2382 = vmatpush1.bf16.msra.mxu0 %v1684
  %2383 = vmatprep.subr.bf16.mxu0 %v1687
  %2384 = vmatpush1.bf16.msra.mxu0 %v1686
  %2385 = vmatprep.subr.bf16.mxu0 %v1689
  %2386 = vmatpush1.bf16.msra.mxu0 %v1688
  %2387 = vmatprep.mubr.bf16.mxu0 %v465
  %2388 = vmatmul.mubr.bf16.gmra.mrb[0].mxu0 %v463
  %v2389 = vpop.f32.mrb[0].mxu0
  %v2390 = vadd.f32 %v2349, %v2389
  %v2391 = vpop.f32.mrb[0].mxu0
  %v2392 = vadd.f32 %v2351, %v2391
  %v2393 = vpop.f32.mrb[0].mxu0
  %v2394 = vpop.f32.mrb[0].mxu0
  %2395 = vdwg.mxu0
  %2396 = vmatprep.subr.bf16.mxu0 %v1691
  %2397 = vmatpush1.bf16.msra.mxu0 %v1690
  %2398 = vmatprep.subr.bf16.mxu0 %v1693
  %2399 = vmatpush1.bf16.msra.mxu0 %v1692
  %2400 = vmatprep.subr.bf16.mxu0 %v1695
  %2401 = vmatpush1.bf16.msra.mxu0 %v1694
  %2402 = vmatprep.subr.bf16.mxu0 %v1697
  %2403 = vmatpush1.bf16.msra.mxu0 %v1696
  %2404 = vmatprep.subr.bf16.mxu0 %v1699
  %2405 = vmatpush1.bf16.msra.mxu0 %v1698
  %2406 = vmatprep.subr.bf16.mxu0 %v1701
  %2407 = vmatpush1.bf16.msra.mxu0 %v1700
  %2408 = vmatprep.subr.bf16.mxu0 %v1703
  %2409 = vmatpush1.bf16.msra.mxu0 %v1702
  %2410 = vmatprep.subr.bf16.mxu0 %v1705
  %2411 = vmatpush1.bf16.msra.mxu0 %v1704
  %2412 = vmatprep.subr.bf16.mxu0 %v1707
  %2413 = vmatpush1.bf16.msra.mxu0 %v1706
  %2414 = vmatprep.subr.bf16.mxu0 %v1709
  %2415 = vmatpush1.bf16.msra.mxu0 %v1708
  %2416 = vmatprep.subr.bf16.mxu0 %v1711
  %2417 = vmatpush1.bf16.msra.mxu0 %v1710
  %2418 = vmatprep.subr.bf16.mxu0 %v1713
  %2419 = vmatpush1.bf16.msra.mxu0 %v1712
  %2420 = vmatprep.subr.bf16.mxu0 %v1715
  %2421 = vmatpush1.bf16.msra.mxu0 %v1714
  %2422 = vmatprep.subr.bf16.mxu0 %v1717
  %2423 = vmatpush1.bf16.msra.mxu0 %v1716
  %2424 = vmatprep.subr.bf16.mxu0 %v1719
  %2425 = vmatpush1.bf16.msra.mxu0 %v1718
  %2426 = vmatprep.subr.bf16.mxu0 %v1721
  %2427 = vmatpush1.bf16.msra.mxu0 %v1720
  %2428 = vmatprep.mubr.bf16.mxu0 %v462
  %2429 = vmatmul.mubr.bf16.gmra.mrb[0].mxu0 %v448
  %v2430 = vpop.f32.mrb[0].mxu0
  %v2431 = vadd.f32 %v2390, %v2430
  %v2432 = vpop.f32.mrb[0].mxu0
  %v2433 = vadd.f32 %v2392, %v2432
  %v2434 = vpop.f32.mrb[0].mxu0
  %v2435 = vpop.f32.mrb[0].mxu0
  %2436 = vdwg.mxu0
  %2437 = vmatprep.subr.bf16.mxu0 %v1723
  %2438 = vmatpush1.bf16.msra.mxu0 %v1722
  %2439 = vmatprep.subr.bf16.mxu0 %v1725
  %2440 = vmatpush1.bf16.msra.mxu0 %v1724
  %2441 = vmatprep.subr.bf16.mxu0 %v1727
  %2442 = vmatpush1.bf16.msra.mxu0 %v1726
  %2443 = vmatprep.subr.bf16.mxu0 %v1729
  %2444 = vmatpush1.bf16.msra.mxu0 %v1728
  %2445 = vmatprep.subr.bf16.mxu0 %v1731
  %2446 = vmatpush1.bf16.msra.mxu0 %v1730
  %2447 = vmatprep.subr.bf16.mxu0 %v1733
  %2448 = vmatpush1.bf16.msra.mxu0 %v1732
  %2449 = vmatprep.subr.bf16.mxu0 %v1735
  %2450 = vmatpush1.bf16.msra.mxu0 %v1734
  %2451 = vmatprep.subr.bf16.mxu0 %v1737
  %2452 = vmatpush1.bf16.msra.mxu0 %v1736
  %2453 = vmatprep.subr.bf16.mxu0 %v1739
  %2454 = vmatpush1.bf16.msra.mxu0 %v1738
  %2455 = vmatprep.subr.bf16.mxu0 %v1741
  %2456 = vmatpush1.bf16.msra.mxu0 %v1740
  %2457 = vmatprep.subr.bf16.mxu0 %v1743
  %2458 = vmatpush1.bf16.msra.mxu0 %v1742
  %2459 = vmatprep.subr.bf16.mxu0 %v1745
  %2460 = vmatpush1.bf16.msra.mxu0 %v1744
  %2461 = vmatprep.subr.bf16.mxu0 %v1747
  %2462 = vmatpush1.bf16.msra.mxu0 %v1746
  %2463 = vmatprep.subr.bf16.mxu0 %v1749
  %2464 = vmatpush1.bf16.msra.mxu0 %v1748
  %2465 = vmatprep.subr.bf16.mxu0 %v1751
  %2466 = vmatpush1.bf16.msra.mxu0 %v1750
  %2467 = vmatprep.subr.bf16.mxu0 %v1753
  %2468 = vmatpush1.bf16.msra.mxu0 %v1752
  %2469 = vmatprep.mubr.bf16.mxu0 %v466
  %2470 = vmatmul.mubr.bf16.gmra.mrb[0].mxu0 %v464
  %v2471 = vpop.f32.mrb[0].mxu0
  %v2472 = vadd.f32 %v2431, %v2471
  %v2473 = vpop.f32.mrb[0].mxu0
  %v2474 = vadd.f32 %v2433, %v2473
  %v2475 = vpop.f32.mrb[0].mxu0
  %v2476 = vpop.f32.mrb[0].mxu0
  %2477 = vdwg.mxu0
  %2478 = vmatprep.subr.bf16.mxu0 %v1755
  %2479 = vmatpush1.bf16.msra.mxu0 %v1754
  %2480 = vmatprep.subr.bf16.mxu0 %v1757
  %2481 = vmatpush1.bf16.msra.mxu0 %v1756
  %2482 = vmatprep.subr.bf16.mxu0 %v1759
  %2483 = vmatpush1.bf16.msra.mxu0 %v1758
  %2484 = vmatprep.subr.bf16.mxu0 %v1761
  %2485 = vmatpush1.bf16.msra.mxu0 %v1760
  %2486 = vmatprep.subr.bf16.mxu0 %v1763
  %2487 = vmatpush1.bf16.msra.mxu0 %v1762
  %2488 = vmatprep.subr.bf16.mxu0 %v1765
  %2489 = vmatpush1.bf16.msra.mxu0 %v1764
  %2490 = vmatprep.subr.bf16.mxu0 %v1767
  %2491 = vmatpush1.bf16.msra.mxu0 %v1766
  %2492 = vmatprep.subr.bf16.mxu0 %v1769
  %2493 = vmatpush1.bf16.msra.mxu0 %v1768
  %2494 = vmatprep.subr.bf16.mxu0 %v1771
  %2495 = vmatpush1.bf16.msra.mxu0 %v1770
  %2496 = vmatprep.subr.bf16.mxu0 %v1773
  %2497 = vmatpush1.bf16.msra.mxu0 %v1772
  %2498 = vmatprep.subr.bf16.mxu0 %v1775
  %2499 = vmatpush1.bf16.msra.mxu0 %v1774
  %2500 = vmatprep.subr.bf16.mxu0 %v1777
  %2501 = vmatpush1.bf16.msra.mxu0 %v1776
  %2502 = vmatprep.subr.bf16.mxu0 %v1779
  %2503 = vmatpush1.bf16.msra.mxu0 %v1778
  %2504 = vmatprep.subr.bf16.mxu0 %v1781
  %2505 = vmatpush1.bf16.msra.mxu0 %v1780
  %2506 = vmatprep.subr.bf16.mxu0 %v1783
  %2507 = vmatpush1.bf16.msra.mxu0 %v1782
  %2508 = vmatprep.subr.bf16.mxu0 %v1785
  %2509 = vmatpush1.bf16.msra.mxu0 %v1784
  %2510 = vmatprep.mubr.bf16.mxu0 %v503
  %2511 = vmatmul.mubr.bf16.gmra.mrb[0].mxu0 %v489
  %v2512 = vpop.f32.mrb[0].mxu0
  %v2513 = vadd.f32 %v2472, %v2512
  %v2514 = vpop.f32.mrb[0].mxu0
  %v2515 = vadd.f32 %v2474, %v2514
  %v2516 = vpop.f32.mrb[0].mxu0
  %v2517 = vpop.f32.mrb[0].mxu0
  %2518 = vdwg.mxu0
  %2519 = vmatprep.subr.bf16.mxu0 %v1787
  %2520 = vmatpush1.bf16.msra.mxu0 %v1786
  %2521 = vmatprep.subr.bf16.mxu0 %v1789
  %2522 = vmatpush1.bf16.msra.mxu0 %v1788
  %2523 = vmatprep.subr.bf16.mxu0 %v1791
  %2524 = vmatpush1.bf16.msra.mxu0 %v1790
  %2525 = vmatprep.subr.bf16.mxu0 %v1793
  %2526 = vmatpush1.bf16.msra.mxu0 %v1792
  %2527 = vmatprep.subr.bf16.mxu0 %v1795
  %2528 = vmatpush1.bf16.msra.mxu0 %v1794
  %2529 = vmatprep.subr.bf16.mxu0 %v1797
  %2530 = vmatpush1.bf16.msra.mxu0 %v1796
  %2531 = vmatprep.subr.bf16.mxu0 %v1799
  %2532 = vmatpush1.bf16.msra.mxu0 %v1798
  %2533 = vmatprep.subr.bf16.mxu0 %v1801
  %2534 = vmatpush1.bf16.msra.mxu0 %v1800
  %2535 = vmatprep.subr.bf16.mxu0 %v1803
  %2536 = vmatpush1.bf16.msra.mxu0 %v1802
  %2537 = vmatprep.subr.bf16.mxu0 %v1805
  %2538 = vmatpush1.bf16.msra.mxu0 %v1804
  %2539 = vmatprep.subr.bf16.mxu0 %v1807
  %2540 = vmatpush1.bf16.msra.mxu0 %v1806
  %2541 = vmatprep.subr.bf16.mxu0 %v1809
  %2542 = vmatpush1.bf16.msra.mxu0 %v1808
  %2543 = vmatprep.subr.bf16.mxu0 %v1811
  %2544 = vmatpush1.bf16.msra.mxu0 %v1810
  %2545 = vmatprep.subr.bf16.mxu0 %v1813
  %2546 = vmatpush1.bf16.msra.mxu0 %v1812
  %2547 = vmatprep.subr.bf16.mxu0 %v1815
  %2548 = vmatpush1.bf16.msra.mxu0 %v1814
  %2549 = vmatprep.subr.bf16.mxu0 %v1817
  %2550 = vmatpush1.bf16.msra.mxu0 %v1816
  %2551 = vmatprep.mubr.bf16.mxu0 %v505
  %2552 = vmatmul.mubr.bf16.gmra.mrb[0].mxu0 %v504
  %v2553 = vpop.f32.mrb[0].mxu0
  %v2554 = vadd.f32 %v2513, %v2553
  %v2555 = vpop.f32.mrb[0].mxu0
  %v2556 = vadd.f32 %v2515, %v2555
  %v2557 = vpop.f32.mrb[0].mxu0
  %v2558 = vpop.f32.mrb[0].mxu0
  %2559 = vdwg.mxu0
  %2560 = vmatprep.subr.bf16.mxu0 %v1819
  %2561 = vmatpush1.bf16.msra.mxu0 %v1818
  %2562 = vmatprep.subr.bf16.mxu0 %v1821
  %2563 = vmatpush1.bf16.msra.mxu0 %v1820
  %2564 = vmatprep.subr.bf16.mxu0 0
  %2565 = vmatpush1.bf16.msra.mxu0 0
  %2566 = vmatprep.subr.bf16.mxu0 0
  %2567 = vmatpush1.bf16.msra.mxu0 0
  %2568 = vmatprep.subr.bf16.mxu0 0
  %2569 = vmatpush1.bf16.msra.mxu0 0
  %2570 = vmatprep.subr.bf16.mxu0 0
  %2571 = vmatpush1.bf16.msra.mxu0 0
  %2572 = vmatprep.subr.bf16.mxu0 0
  %2573 = vmatpush1.bf16.msra.mxu0 0
  %2574 = vmatprep.subr.bf16.mxu0 0
  %2575 = vmatpush1.bf16.msra.mxu0 0
  %2576 = vmatprep.subr.bf16.mxu0 0
  %2577 = vmatpush1.bf16.msra.mxu0 0
  %2578 = vmatprep.subr.bf16.mxu0 0
  %2579 = vmatpush1.bf16.msra.mxu0 0
  %2580 = vmatprep.subr.bf16.mxu0 0
  %2581 = vmatpush1.bf16.msra.mxu0 0
  %2582 = vmatprep.subr.bf16.mxu0 0
  %2583 = vmatpush1.bf16.msra.mxu0 0
  %2584 = vmatprep.subr.bf16.mxu0 0
  %2585 = vmatpush1.bf16.msra.mxu0 0
  %2586 = vmatprep.subr.bf16.mxu0 0
  %2587 = vmatpush1.bf16.msra.mxu0 0
  %2588 = vmatprep.subr.bf16.mxu0 0
  %2589 = vmatpush1.bf16.msra.mxu0 0
  %2590 = vmatprep.subr.bf16.mxu0 0
  %2591 = vmatpush1.bf16.msra.mxu0 0
  %2592 = vmatprep.mubr.bf16.mxu0 0
  %2593 = vmatmul.mubr.bf16.gmra.mrb[0].mxu0 %v2148
  %v2594 = vpop.f32.mrb[0].mxu0
  %v2595 = vadd.f32 %v2554, %v2594
  %v2596 = vpop.f32.mrb[0].mxu0
  %v2597 = vadd.f32 %v2556, %v2596
  %v2598 = vpop.f32.mrb[0].mxu0
  %v2599 = vpop.f32.mrb[0].mxu0
  %2600 = vdwg.mxu0
  %v2601 = vmax.f32 %v2595, 0.0
  %v2602 = vmax.f32 %v2597, 0.0
  %v2603 = vpack.c.bf16 %v2601, %v2601
  %v2604 = vpack.c.bf16 %v2602, %v2602
  %v2605 = vld [vmem:[%s4] sm:$0xff]
  %v2606 = vld [vmem:[%s4 + $0x8] sm:$0xff]
  %v2607 = vld [vmem:[%s4 + $0x10] sm:$0xff]
  %v2608 = vld [vmem:[%s4 + $0x18] sm:$0xff]
  %v2609 = vld [vmem:[%s4 + $0x20] sm:$0xff]
  %v2610 = vld [vmem:[%s4 + $0x28] sm:$0xff]
  %v2611 = vld [vmem:[%s4 + $0x30] sm:$0xff]
  %v2612 = vld [vmem:[%s4 + $0x38] sm:$0xff]
  %v2613 = vld [vmem:[%s4 + $0x40] sm:$0xff]
  %v2614 = vld [vmem:[%s4 + $0x48] sm:$0xff]
  %v2615 = vld [vmem:[%s4 + $0x50] sm:$0xff]
  %v2616 = vld [vmem:[%s4 + $0x58] sm:$0xff]
  %v2617 = vld [vmem:[%s4 + $0x60] sm:$0xff]
  %v2618 = vld [vmem:[%s4 + $0x68] sm:$0xff]
  %v2619 = vld [vmem:[%s4 + $0x70] sm:$0xff]
  %v2620 = vld [vmem:[%s4 + $0x78] sm:$0xff]
  %v2621 = vld [vmem:[%s4 + $0x80] sm:$0xff]
  %v2622 = vld [vmem:[%s4 + $0x88] sm:$0xff]
  %v2623 = vld [vmem:[%s4 + $0x90] sm:$0xff]
  %v2624 = vld [vmem:[%s4 + $0x98] sm:$0xff]
  %v2625 = vld [vmem:[%s4 + $0xa0] sm:$0xff]
  %v2626 = vld [vmem:[%s4 + $0xa8] sm:$0xff]
  %v2627 = vld [vmem:[%s4 + $0xb0] sm:$0xff]
  %v2628 = vld [vmem:[%s4 + $0xb8] sm:$0xff]
  %v2629 = vld [vmem:[%s4 + $0xc0] sm:$0xff]
  %v2630 = vld [vmem:[%s4 + $0xc8] sm:$0xff]
  %v2631 = vld [vmem:[%s4 + $0xd0] sm:$0xff]
  %v2632 = vld [vmem:[%s4 + $0xd8] sm:$0xff]
  %v2633 = vld [vmem:[%s4 + $0xe0] sm:$0xff]
  %v2634 = vld [vmem:[%s4 + $0xe8] sm:$0xff]
  %v2635 = vld [vmem:[%s4 + $0xf0] sm:$0xff]
  %v2636 = vld [vmem:[%s4 + $0xf8] sm:$0xff]
  %v2637 = vld [vmem:[%s4 + $0x100] sm:$0xff]
  %v2638 = vld [vmem:[%s4 + $0x108] sm:$0xff]
  %v2639 = vld [vmem:[%s4 + $0x110] sm:$0xff]
  %v2640 = vld [vmem:[%s4 + $0x118] sm:$0xff]
  %v2641 = vld [vmem:[%s4 + $0x120] sm:$0xff]
  %v2642 = vld [vmem:[%s4 + $0x128] sm:$0xff]
  %v2643 = vld [vmem:[%s4 + $0x130] sm:$0xff]
  %v2644 = vld [vmem:[%s4 + $0x138] sm:$0xff]
  %v2645 = vld [vmem:[%s4 + $0x140] sm:$0xff]
  %v2646 = vld [vmem:[%s4 + $0x148] sm:$0xff]
  %v2647 = vld [vmem:[%s4 + $0x150] sm:$0xff]
  %v2648 = vld [vmem:[%s4 + $0x158] sm:$0xff]
  %v2649 = vld [vmem:[%s4 + $0x160] sm:$0xff]
  %v2650 = vld [vmem:[%s4 + $0x168] sm:$0xff]
  %v2651 = vld [vmem:[%s4 + $0x170] sm:$0xff]
  %v2652 = vld [vmem:[%s4 + $0x178] sm:$0xff]
  %v2653 = vld [vmem:[%s4 + $0x180] sm:$0xff]
  %v2654 = vld [vmem:[%s4 + $0x188] sm:$0xff]
  %v2655 = vld [vmem:[%s4 + $0x190] sm:$0xff]
  %v2656 = vld [vmem:[%s4 + $0x198] sm:$0xff]
  %v2657 = vld [vmem:[%s4 + $0x1a0] sm:$0xff]
  %v2658 = vld [vmem:[%s4 + $0x1a8] sm:$0xff]
  %v2659 = vld [vmem:[%s4 + $0x1b0] sm:$0xff]
  %v2660 = vld [vmem:[%s4 + $0x1b8] sm:$0xff]
  %v2661 = vld [vmem:[%s4 + $0x1c0] sm:$0xff]
  %v2662 = vld [vmem:[%s4 + $0x1c8] sm:$0xff]
  %v2663 = vld [vmem:[%s4 + $0x1d0] sm:$0xff]
  %v2664 = vld [vmem:[%s4 + $0x1d8] sm:$0xff]
  %v2665 = vld [vmem:[%s4 + $0x1e0] sm:$0xff]
  %v2666 = vld [vmem:[%s4 + $0x1e8] sm:$0xff]
  %v2667 = vld [vmem:[%s4 + $0x1f0] sm:$0xff]
  %v2668 = vld [vmem:[%s4 + $0x1f8] sm:$0xff]
  %v2669 = vld [vmem:[%s4 + $0x200] sm:$0xff]
  %v2670 = vld [vmem:[%s4 + $0x208] sm:$0xff]
  %v2671 = vld [vmem:[%s4 + $0x210] sm:$0xff]
  %v2672 = vld [vmem:[%s4 + $0x218] sm:$0xff]
  %v2673 = vld [vmem:[%s4 + $0x220] sm:$0xff]
  %v2674 = vld [vmem:[%s4 + $0x228] sm:$0xff]
  %v2675 = vld [vmem:[%s4 + $0x230] sm:$0xff]
  %v2676 = vld [vmem:[%s4 + $0x238] sm:$0xff]
  %v2677 = vld [vmem:[%s4 + $0x240] sm:$0xff]
  %v2678 = vld [vmem:[%s4 + $0x248] sm:$0xff]
  %v2679 = vld [vmem:[%s4 + $0x250] sm:$0xff]
  %v2680 = vld [vmem:[%s4 + $0x258] sm:$0xff]
  %v2681 = vld [vmem:[%s4 + $0x260] sm:$0xff]
  %v2682 = vld [vmem:[%s4 + $0x268] sm:$0xff]
  %v2683 = vld [vmem:[%s4 + $0x270] sm:$0xff]
  %v2684 = vld [vmem:[%s4 + $0x278] sm:$0xff]
  %v2685 = vld [vmem:[%s4 + $0x280] sm:$0xff]
  %v2686 = vld [vmem:[%s4 + $0x288] sm:$0xff]
  %v2687 = vld [vmem:[%s4 + $0x290] sm:$0xff]
  %v2688 = vld [vmem:[%s4 + $0x298] sm:$0xff]
  %v2689 = vld [vmem:[%s4 + $0x2a0] sm:$0xff]
  %v2690 = vld [vmem:[%s4 + $0x2a8] sm:$0xff]
  %v2691 = vld [vmem:[%s4 + $0x2b0] sm:$0xff]
  %v2692 = vld [vmem:[%s4 + $0x2b8] sm:$0xff]
  %v2693 = vld [vmem:[%s4 + $0x2c0] sm:$0xff]
  %v2694 = vld [vmem:[%s4 + $0x2c8] sm:$0xff]
  %v2695 = vld [vmem:[%s4 + $0x2d0] sm:$0xff]
  %v2696 = vld [vmem:[%s4 + $0x2d8] sm:$0xff]
  %v2697 = vld [vmem:[%s4 + $0x2e0] sm:$0xff]
  %v2698 = vld [vmem:[%s4 + $0x2e8] sm:$0xff]
  %v2699 = vld [vmem:[%s4 + $0x2f0] sm:$0xff]
  %v2700 = vld [vmem:[%s4 + $0x2f8] sm:$0xff]
  %v2701 = vld [vmem:[%s4 + $0x300] sm:$0xff]
  %v2702 = vld [vmem:[%s4 + $0x308] sm:$0xff]
  %v2703 = vld [vmem:[%s4 + $0x310] sm:$0xff]
  %v2704 = vld [vmem:[%s4 + $0x318] sm:$0xff]
  %v2705 = vld [vmem:[%s4 + $0x320] sm:$0xff]
  %v2706 = vld [vmem:[%s4 + $0x328] sm:$0xff]
  %v2707 = vld [vmem:[%s4 + $0x330] sm:$0xff]
  %v2708 = vld [vmem:[%s4 + $0x338] sm:$0xff]
  %v2709 = vld [vmem:[%s4 + $0x340] sm:$0xff]
  %v2710 = vld [vmem:[%s4 + $0x348] sm:$0xff]
  %v2711 = vld [vmem:[%s4 + $0x350] sm:$0xff]
  %v2712 = vld [vmem:[%s4 + $0x358] sm:$0xff]
  %v2713 = vld [vmem:[%s4 + $0x360] sm:$0xff]
  %v2714 = vld [vmem:[%s4 + $0x368] sm:$0xff]
  %v2715 = vld [vmem:[%s4 + $0x370] sm:$0xff]
  %v2716 = vld [vmem:[%s4 + $0x378] sm:$0xff]
  %v2717 = vld [vmem:[%s4 + $0x380] sm:$0xff]
  %v2718 = vld [vmem:[%s4 + $0x388] sm:$0xff]
  %v2719 = vld [vmem:[%s4 + $0x390] sm:$0xff]
  %v2720 = vld [vmem:[%s4 + $0x398] sm:$0xff]
  %v2721 = vld [vmem:[%s4 + $0x3a0] sm:$0xff]
  %v2722 = vld [vmem:[%s4 + $0x3a8] sm:$0xff]
  %v2723 = vld [vmem:[%s4 + $0x3b0] sm:$0xff]
  %v2724 = vld [vmem:[%s4 + $0x3b8] sm:$0xff]
  %v2725 = vld [vmem:[%s4 + $0x3c0] sm:$0xff]
  %v2726 = vld [vmem:[%s4 + $0x3c8] sm:$0xff]
  %v2727 = vld [vmem:[%s4 + $0x3d0] sm:$0xff]
  %v2728 = vld [vmem:[%s4 + $0x3d8] sm:$0xff]
  %v2729 = vld [vmem:[%s4 + $0x3e0] sm:$0xff]
  %v2730 = vld [vmem:[%s4 + $0x3e8] sm:$0xff]
  %v2731 = vld [vmem:[%s4 + $0x3f0] sm:$0xff]
  %v2732 = vld [vmem:[%s4 + $0x3f8] sm:$0xff]
  %v2733 = vld [vmem:[%s1] sm:$0x1]
  %v2734 = vld [vmem:[%s5] sm:$0xff]
  %v2735 = vld [vmem:[%s5 + $0x8] sm:$0xff]
  %v2736 = vld [vmem:[%s5 + $0x10] sm:$0xff]
  %v2737 = vld [vmem:[%s5 + $0x18] sm:$0xff]
  %v2742 = vunpack.c.l.b16 %v2734
  %v2743 = vunpack.c.h.b16 %v2734
  %v2744 = vunpack.c.l.b16 %v2735
  %v2745 = vunpack.c.h.b16 %v2735
  %v2746 = vunpack.c.l.b16 %v2736
  %v2747 = vunpack.c.h.b16 %v2736
  %v2748 = vunpack.c.l.b16 %v2737
  %v2749 = vunpack.c.h.b16 %v2737
  %v2750 = vpack.c.b16 %v2742, %v2742
  %v2751 = vpack.c.b16 %v2743, %v2743
  %v2752 = vpack.c.b16 %v2744, %v2744
  %v2753 = vpack.c.b16 %v2745, %v2745
  %v2754 = vpack.c.b16 %v2746, %v2746
  %v2755 = vpack.c.b16 %v2747, %v2747
  %v2756 = vpack.c.b16 %v2748, %v2748
  %v2757 = vpack.c.b16 %v2749, %v2749
  %vm2758 = vcmask 56320
  %v2760 = vsel %vm2758, %v2733, 0
  %vm2762 = vcmask 1042432
  %vm2763 = vcmask 1043456
  %v2764 = vsel %vm2762, 4294967295, 65535
  %v2765 = vsel %vm2763, %v2764, 0
  %v2767 = vand.u32 %v2750, %v2765
  %v2770 = vand.u32 %v2751, %v2765
  %v2773 = vand.u32 %v2752, %v2765
  %v2776 = vand.u32 %v2753, %v2765
  %v2779 = vand.u32 %v2754, %v2765
  %v2782 = vand.u32 %v2755, %v2765
  %v2785 = vand.u32 %v2756, %v2765
  %v2788 = vand.u32 %v2757, %v2765
  %2790 = vmatprep.subr.bf16.mxu0 %v2770
  %2791 = vmatpush1.bf16.msra.mxu0 %v2767
  %2792 = vmatprep.subr.bf16.mxu0 0
  %2793 = vmatpush1.bf16.msra.mxu0 0
  %2794 = vmatprep.subr.bf16.mxu0 0
  %2795 = vmatpush1.bf16.msra.mxu0 0
  %2796 = vmatprep.subr.bf16.mxu0 0
  %2797 = vmatpush1.bf16.msra.mxu0 0
  %2798 = vmatprep.subr.bf16.mxu0 0
  %2799 = vmatpush1.bf16.msra.mxu0 0
  %2800 = vmatprep.subr.bf16.mxu0 0
  %2801 = vmatpush1.bf16.msra.mxu0 0
  %2802 = vmatprep.subr.bf16.mxu0 0
  %2803 = vmatpush1.bf16.msra.mxu0 0
  %2804 = vmatprep.subr.bf16.mxu0 0
  %2805 = vmatpush1.bf16.msra.mxu0 0
  %2806 = vmatprep.subr.bf16.mxu0 0
  %2807 = vmatpush1.bf16.msra.mxu0 0
  %2808 = vmatprep.subr.bf16.mxu0 0
  %2809 = vmatpush1.bf16.msra.mxu0 0
  %2810 = vmatprep.subr.bf16.mxu0 0
  %2811 = vmatpush1.bf16.msra.mxu0 0
  %2812 = vmatprep.subr.bf16.mxu0 0
  %2813 = vmatpush1.bf16.msra.mxu0 0
  %2814 = vmatprep.subr.bf16.mxu0 0
  %2815 = vmatpush1.bf16.msra.mxu0 0
  %2816 = vmatprep.subr.bf16.mxu0 0
  %2817 = vmatpush1.bf16.msra.mxu0 0
  %2818 = vmatprep.subr.bf16.mxu0 0
  %2819 = vmatpush1.bf16.msra.mxu0 0
  %2820 = vmatprep.subr.bf16.mxu0 0
  %2821 = vmatpush1.bf16.msra.mxu0 0
  %2822 = vmatprep.mubr.bf16.mxu0 0
  %2823 = vmatmul.mubr.bf16.gmra.mrb[0].mxu0 %v2760
  %v2824 = vpop.f32.mrb[0].mxu0
  %v2825 = vadd.f32 0.0, %v2824
  %v2826 = vpop.f32.mrb[0].mxu0
  %v2827 = vadd.f32 0.0, %v2826
  %v2828 = vpop.f32.mrb[0].mxu0
  %v2829 = vpop.f32.mrb[0].mxu0
  %2830 = vdwg.mxu0
  %2831 = vmatprep.subr.bf16.mxu0 %v2776
  %2832 = vmatpush1.bf16.msra.mxu0 %v2773
  %2833 = vmatprep.subr.bf16.mxu0 0
  %2834 = vmatpush1.bf16.msra.mxu0 0
  %2835 = vmatprep.subr.bf16.mxu0 0
  %2836 = vmatpush1.bf16.msra.mxu0 0
  %2837 = vmatprep.subr.bf16.mxu0 0
  %2838 = vmatpush1.bf16.msra.mxu0 0
  %2839 = vmatprep.subr.bf16.mxu0 0
  %2840 = vmatpush1.bf16.msra.mxu0 0
  %2841 = vmatprep.subr.bf16.mxu0 0
  %2842 = vmatpush1.bf16.msra.mxu0 0
  %2843 = vmatprep.subr.bf16.mxu0 0
  %2844 = vmatpush1.bf16.msra.mxu0 0
  %2845 = vmatprep.subr.bf16.mxu0 0
  %2846 = vmatpush1.bf16.msra.mxu0 0
  %2847 = vmatprep.subr.bf16.mxu0 0
  %2848 = vmatpush1.bf16.msra.mxu0 0
  %2849 = vmatprep.subr.bf16.mxu0 0
  %2850 = vmatpush1.bf16.msra.mxu0 0
  %2851 = vmatprep.subr.bf16.mxu0 0
  %2852 = vmatpush1.bf16.msra.mxu0 0
  %2853 = vmatprep.subr.bf16.mxu0 0
  %2854 = vmatpush1.bf16.msra.mxu0 0
  %2855 = vmatprep.subr.bf16.mxu0 0
  %2856 = vmatpush1.bf16.msra.mxu0 0
  %2857 = vmatprep.subr.bf16.mxu0 0
  %2858 = vmatpush1.bf16.msra.mxu0 0
  %2859 = vmatprep.subr.bf16.mxu0 0
  %2860 = vmatpush1.bf16.msra.mxu0 0
  %2861 = vmatprep.subr.bf16.mxu0 0
  %2862 = vmatpush1.bf16.msra.mxu0 0
  %2863 = vmatprep.mubr.bf16.mxu0 0
  %2864 = vmatmul.mubr.bf16.gmra.mrb[0].mxu0 %v2760
  %v2865 = vpop.f32.mrb[0].mxu0
  %v2866 = vadd.f32 0.0, %v2865
  %v2867 = vpop.f32.mrb[0].mxu0
  %v2868 = vadd.f32 0.0, %v2867
  %v2869 = vpop.f32.mrb[0].mxu0
  %v2870 = vpop.f32.mrb[0].mxu0
  %2871 = vdwg.mxu0
  %2872 = vmatprep.subr.bf16.mxu0 %v2782
  %2873 = vmatpush1.bf16.msra.mxu0 %v2779
  %2874 = vmatprep.subr.bf16.mxu0 0
  %2875 = vmatpush1.bf16.msra.mxu0 0
  %2876 = vmatprep.subr.bf16.mxu0 0
  %2877 = vmatpush1.bf16.msra.mxu0 0
  %2878 = vmatprep.subr.bf16.mxu0 0
  %2879 = vmatpush1.bf16.msra.mxu0 0
  %2880 = vmatprep.subr.bf16.mxu0 0
  %2881 = vmatpush1.bf16.msra.mxu0 0
  %2882 = vmatprep.subr.bf16.mxu0 0
  %2883 = vmatpush1.bf16.msra.mxu0 0
  %2884 = vmatprep.subr.bf16.mxu0 0
  %2885 = vmatpush1.bf16.msra.mxu0 0
  %2886 = vmatprep.subr.bf16.mxu0 0
  %2887 = vmatpush1.bf16.msra.mxu0 0
  %2888 = vmatprep.subr.bf16.mxu0 0
  %2889 = vmatpush1.bf16.msra.mxu0 0
  %2890 = vmatprep.subr.bf16.mxu0 0
  %2891 = vmatpush1.bf16.msra.mxu0 0
  %2892 = vmatprep.subr.bf16.mxu0 0
  %2893 = vmatpush1.bf16.msra.mxu0 0
  %2894 = vmatprep.subr.bf16.mxu0 0
  %2895 = vmatpush1.bf16.msra.mxu0 0
  %2896 = vmatprep.subr.bf16.mxu0 0
  %2897 = vmatpush1.bf16.msra.mxu0 0
  %2898 = vmatprep.subr.bf16.mxu0 0
  %2899 = vmatpush1.bf16.msra.mxu0 0
  %2900 = vmatprep.subr.bf16.mxu0 0
  %2901 = vmatpush1.bf16.msra.mxu0 0
  %2902 = vmatprep.subr.bf16.mxu0 0
  %2903 = vmatpush1.bf16.msra.mxu0 0
  %2904 = vmatprep.mubr.bf16.mxu0 0
  %2905 = vmatmul.mubr.bf16.gmra.mrb[0].mxu0 %v2760
  %v2906 = vpop.f32.mrb[0].mxu0
  %v2907 = vadd.f32 0.0, %v2906
  %v2908 = vpop.f32.mrb[0].mxu0
  %v2909 = vadd.f32 0.0, %v2908
  %v2910 = vpop.f32.mrb[0].mxu0
  %v2911 = vpop.f32.mrb[0].mxu0
  %2912 = vdwg.mxu0
  %2913 = vmatprep.subr.bf16.mxu0 %v2788
  %2914 = vmatpush1.bf16.msra.mxu0 %v2785
  %2915 = vmatprep.subr.bf16.mxu0 0
  %2916 = vmatpush1.bf16.msra.mxu0 0
  %2917 = vmatprep.subr.bf16.mxu0 0
  %2918 = vmatpush1.bf16.msra.mxu0 0
  %2919 = vmatprep.subr.bf16.mxu0 0
  %2920 = vmatpush1.bf16.msra.mxu0 0
  %2921 = vmatprep.subr.bf16.mxu0 0
  %2922 = vmatpush1.bf16.msra.mxu0 0
  %2923 = vmatprep.subr.bf16.mxu0 0
  %2924 = vmatpush1.bf16.msra.mxu0 0
  %2925 = vmatprep.subr.bf16.mxu0 0
  %2926 = vmatpush1.bf16.msra.mxu0 0
  %2927 = vmatprep.subr.bf16.mxu0 0
  %2928 = vmatpush1.bf16.msra.mxu0 0
  %2929 = vmatprep.subr.bf16.mxu0 0
  %2930 = vmatpush1.bf16.msra.mxu0 0
  %2931 = vmatprep.subr.bf16.mxu0 0
  %2932 = vmatpush1.bf16.msra.mxu0 0
  %2933 = vmatprep.subr.bf16.mxu0 0
  %2934 = vmatpush1.bf16.msra.mxu0 0
  %2935 = vmatprep.subr.bf16.mxu0 0
  %2936 = vmatpush1.bf16.msra.mxu0 0
  %2937 = vmatprep.subr.bf16.mxu0 0
  %2938 = vmatpush1.bf16.msra.mxu0 0
  %2939 = vmatprep.subr.bf16.mxu0 0
  %2940 = vmatpush1.bf16.msra.mxu0 0
  %2941 = vmatprep.subr.bf16.mxu0 0
  %2942 = vmatpush1.bf16.msra.mxu0 0
  %2943 = vmatprep.subr.bf16.mxu0 0
  %2944 = vmatpush1.bf16.msra.mxu0 0
  %2945 = vmatprep.mubr.bf16.mxu0 0
  %2946 = vmatmul.mubr.bf16.gmra.mrb[0].mxu0 %v2760
  %v2947 = vpop.f32.mrb[0].mxu0
  %v2948 = vadd.f32 0.0, %v2947
  %v2949 = vpop.f32.mrb[0].mxu0
  %v2950 = vadd.f32 0.0, %v2949
  %v2951 = vpop.f32.mrb[0].mxu0
  %v2952 = vpop.f32.mrb[0].mxu0
  %2953 = vdwg.mxu0
  %v3082 = vunpack.c.l.b16 %v2605
  %v3083 = vunpack.c.h.b16 %v2605
  %v3084 = vunpack.c.l.b16 %v2606
  %v3085 = vunpack.c.h.b16 %v2606
  %v3086 = vunpack.c.l.b16 %v2607
  %v3087 = vunpack.c.h.b16 %v2607
  %v3088 = vunpack.c.l.b16 %v2608
  %v3089 = vunpack.c.h.b16 %v2608
  %v3090 = vunpack.c.l.b16 %v2609
  %v3091 = vunpack.c.h.b16 %v2609
  %v3092 = vunpack.c.l.b16 %v2610
  %v3093 = vunpack.c.h.b16 %v2610
  %v3094 = vunpack.c.l.b16 %v2611
  %v3095 = vunpack.c.h.b16 %v2611
  %v3096 = vunpack.c.l.b16 %v2612
  %v3097 = vunpack.c.h.b16 %v2612
  %v3098 = vunpack.c.l.b16 %v2613
  %v3099 = vunpack.c.h.b16 %v2613
  %v3100 = vunpack.c.l.b16 %v2614
  %v3101 = vunpack.c.h.b16 %v2614
  %v3102 = vunpack.c.l.b16 %v2615
  %v3103 = vunpack.c.h.b16 %v2615
  %v3104 = vunpack.c.l.b16 %v2616
  %v3105 = vunpack.c.h.b16 %v2616
  %v3106 = vunpack.c.l.b16 %v2617
  %v3107 = vunpack.c.h.b16 %v2617
  %v3108 = vunpack.c.l.b16 %v2618
  %v3109 = vunpack.c.h.b16 %v2618
  %v3110 = vunpack.c.l.b16 %v2619
  %v3111 = vunpack.c.h.b16 %v2619
  %v3112 = vunpack.c.l.b16 %v2620
  %v3113 = vunpack.c.h.b16 %v2620
  %v3114 = vunpack.c.l.b16 %v2621
  %v3115 = vunpack.c.h.b16 %v2621
  %v3116 = vunpack.c.l.b16 %v2622
  %v3117 = vunpack.c.h.b16 %v2622
  %v3118 = vunpack.c.l.b16 %v2623
  %v3119 = vunpack.c.h.b16 %v2623
  %v3120 = vunpack.c.l.b16 %v2624
  %v3121 = vunpack.c.h.b16 %v2624
  %v3122 = vunpack.c.l.b16 %v2625
  %v3123 = vunpack.c.h.b16 %v2625
  %v3124 = vunpack.c.l.b16 %v2626
  %v3125 = vunpack.c.h.b16 %v2626
  %v3126 = vunpack.c.l.b16 %v2627
  %v3127 = vunpack.c.h.b16 %v2627
  %v3128 = vunpack.c.l.b16 %v2628
  %v3129 = vunpack.c.h.b16 %v2628
  %v3130 = vunpack.c.l.b16 %v2629
  %v3131 = vunpack.c.h.b16 %v2629
  %v3132 = vunpack.c.l.b16 %v2630
  %v3133 = vunpack.c.h.b16 %v2630
  %v3134 = vunpack.c.l.b16 %v2631
  %v3135 = vunpack.c.h.b16 %v2631
  %v3136 = vunpack.c.l.b16 %v2632
  %v3137 = vunpack.c.h.b16 %v2632
  %v3138 = vunpack.c.l.b16 %v2633
  %v3139 = vunpack.c.h.b16 %v2633
  %v3140 = vunpack.c.l.b16 %v2634
  %v3141 = vunpack.c.h.b16 %v2634
  %v3142 = vunpack.c.l.b16 %v2635
  %v3143 = vunpack.c.h.b16 %v2635
  %v3144 = vunpack.c.l.b16 %v2636
  %v3145 = vunpack.c.h.b16 %v2636
  %v3146 = vunpack.c.l.b16 %v2637
  %v3147 = vunpack.c.h.b16 %v2637
  %v3148 = vunpack.c.l.b16 %v2638
  %v3149 = vunpack.c.h.b16 %v2638
  %v3150 = vunpack.c.l.b16 %v2639
  %v3151 = vunpack.c.h.b16 %v2639
  %v3152 = vunpack.c.l.b16 %v2640
  %v3153 = vunpack.c.h.b16 %v2640
  %v3154 = vunpack.c.l.b16 %v2641
  %v3155 = vunpack.c.h.b16 %v2641
  %v3156 = vunpack.c.l.b16 %v2642
  %v3157 = vunpack.c.h.b16 %v2642
  %v3158 = vunpack.c.l.b16 %v2643
  %v3159 = vunpack.c.h.b16 %v2643
  %v3160 = vunpack.c.l.b16 %v2644
  %v3161 = vunpack.c.h.b16 %v2644
  %v3162 = vunpack.c.l.b16 %v2645
  %v3163 = vunpack.c.h.b16 %v2645
  %v3164 = vunpack.c.l.b16 %v2646
  %v3165 = vunpack.c.h.b16 %v2646
  %v3166 = vunpack.c.l.b16 %v2647
  %v3167 = vunpack.c.h.b16 %v2647
  %v3168 = vunpack.c.l.b16 %v2648
  %v3169 = vunpack.c.h.b16 %v2648
  %v3170 = vunpack.c.l.b16 %v2649
  %v3171 = vunpack.c.h.b16 %v2649
  %v3172 = vunpack.c.l.b16 %v2650
  %v3173 = vunpack.c.h.b16 %v2650
  %v3174 = vunpack.c.l.b16 %v2651
  %v3175 = vunpack.c.h.b16 %v2651
  %v3176 = vunpack.c.l.b16 %v2652
  %v3177 = vunpack.c.h.b16 %v2652
  %v3178 = vunpack.c.l.b16 %v2653
  %v3179 = vunpack.c.h.b16 %v2653
  %v3180 = vunpack.c.l.b16 %v2654
  %v3181 = vunpack.c.h.b16 %v2654
  %v3182 = vunpack.c.l.b16 %v2655
  %v3183 = vunpack.c.h.b16 %v2655
  %v3184 = vunpack.c.l.b16 %v2656
  %v3185 = vunpack.c.h.b16 %v2656
  %v3186 = vunpack.c.l.b16 %v2657
  %v3187 = vunpack.c.h.b16 %v2657
  %v3188 = vunpack.c.l.b16 %v2658
  %v3189 = vunpack.c.h.b16 %v2658
  %v3190 = vunpack.c.l.b16 %v2659
  %v3191 = vunpack.c.h.b16 %v2659
  %v3192 = vunpack.c.l.b16 %v2660
  %v3193 = vunpack.c.h.b16 %v2660
  %v3194 = vunpack.c.l.b16 %v2661
  %v3195 = vunpack.c.h.b16 %v2661
  %v3196 = vunpack.c.l.b16 %v2662
  %v3197 = vunpack.c.h.b16 %v2662
  %v3198 = vunpack.c.l.b16 %v2663
  %v3199 = vunpack.c.h.b16 %v2663
  %v3200 = vunpack.c.l.b16 %v2664
  %v3201 = vunpack.c.h.b16 %v2664
  %v3202 = vunpack.c.l.b16 %v2665
  %v3203 = vunpack.c.h.b16 %v2665
  %v3204 = vunpack.c.l.b16 %v2666
  %v3205 = vunpack.c.h.b16 %v2666
  %v3206 = vunpack.c.l.b16 %v2667
  %v3207 = vunpack.c.h.b16 %v2667
  %v3208 = vunpack.c.l.b16 %v2668
  %v3209 = vunpack.c.h.b16 %v2668
  %v3210 = vunpack.c.l.b16 %v2669
  %v3211 = vunpack.c.h.b16 %v2669
  %v3212 = vunpack.c.l.b16 %v2670
  %v3213 = vunpack.c.h.b16 %v2670
  %v3214 = vunpack.c.l.b16 %v2671
  %v3215 = vunpack.c.h.b16 %v2671
  %v3216 = vunpack.c.l.b16 %v2672
  %v3217 = vunpack.c.h.b16 %v2672
  %v3218 = vunpack.c.l.b16 %v2673
  %v3219 = vunpack.c.h.b16 %v2673
  %v3220 = vunpack.c.l.b16 %v2674
  %v3221 = vunpack.c.h.b16 %v2674
  %v3222 = vunpack.c.l.b16 %v2675
  %v3223 = vunpack.c.h.b16 %v2675
  %v3224 = vunpack.c.l.b16 %v2676
  %v3225 = vunpack.c.h.b16 %v2676
  %v3226 = vunpack.c.l.b16 %v2677
  %v3227 = vunpack.c.h.b16 %v2677
  %v3228 = vunpack.c.l.b16 %v2678
  %v3229 = vunpack.c.h.b16 %v2678
  %v3230 = vunpack.c.l.b16 %v2679
  %v3231 = vunpack.c.h.b16 %v2679
  %v3232 = vunpack.c.l.b16 %v2680
  %v3233 = vunpack.c.h.b16 %v2680
  %v3234 = vunpack.c.l.b16 %v2681
  %v3235 = vunpack.c.h.b16 %v2681
  %v3236 = vunpack.c.l.b16 %v2682
  %v3237 = vunpack.c.h.b16 %v2682
  %v3238 = vunpack.c.l.b16 %v2683
  %v3239 = vunpack.c.h.b16 %v2683
  %v3240 = vunpack.c.l.b16 %v2684
  %v3241 = vunpack.c.h.b16 %v2684
  %v3242 = vunpack.c.l.b16 %v2685
  %v3243 = vunpack.c.h.b16 %v2685
  %v3244 = vunpack.c.l.b16 %v2686
  %v3245 = vunpack.c.h.b16 %v2686
  %v3246 = vunpack.c.l.b16 %v2687
  %v3247 = vunpack.c.h.b16 %v2687
  %v3248 = vunpack.c.l.b16 %v2688
  %v3249 = vunpack.c.h.b16 %v2688
  %v3250 = vunpack.c.l.b16 %v2689
  %v3251 = vunpack.c.h.b16 %v2689
  %v3252 = vunpack.c.l.b16 %v2690
  %v3253 = vunpack.c.h.b16 %v2690
  %v3254 = vunpack.c.l.b16 %v2691
  %v3255 = vunpack.c.h.b16 %v2691
  %v3256 = vunpack.c.l.b16 %v2692
  %v3257 = vunpack.c.h.b16 %v2692
  %v3258 = vunpack.c.l.b16 %v2693
  %v3259 = vunpack.c.h.b16 %v2693
  %v3260 = vunpack.c.l.b16 %v2694
  %v3261 = vunpack.c.h.b16 %v2694
  %v3262 = vunpack.c.l.b16 %v2695
  %v3263 = vunpack.c.h.b16 %v2695
  %v3264 = vunpack.c.l.b16 %v2696
  %v3265 = vunpack.c.h.b16 %v2696
  %v3266 = vunpack.c.l.b16 %v2697
  %v3267 = vunpack.c.h.b16 %v2697
  %v3268 = vunpack.c.l.b16 %v2698
  %v3269 = vunpack.c.h.b16 %v2698
  %v3270 = vunpack.c.l.b16 %v2699
  %v3271 = vunpack.c.h.b16 %v2699
  %v3272 = vunpack.c.l.b16 %v2700
  %v3273 = vunpack.c.h.b16 %v2700
  %v3274 = vunpack.c.l.b16 %v2701
  %v3275 = vunpack.c.h.b16 %v2701
  %v3276 = vunpack.c.l.b16 %v2702
  %v3277 = vunpack.c.h.b16 %v2702
  %v3278 = vunpack.c.l.b16 %v2703
  %v3279 = vunpack.c.h.b16 %v2703
  %v3280 = vunpack.c.l.b16 %v2704
  %v3281 = vunpack.c.h.b16 %v2704
  %v3282 = vunpack.c.l.b16 %v2705
  %v3283 = vunpack.c.h.b16 %v2705
  %v3284 = vunpack.c.l.b16 %v2706
  %v3285 = vunpack.c.h.b16 %v2706
  %v3286 = vunpack.c.l.b16 %v2707
  %v3287 = vunpack.c.h.b16 %v2707
  %v3288 = vunpack.c.l.b16 %v2708
  %v3289 = vunpack.c.h.b16 %v2708
  %v3290 = vunpack.c.l.b16 %v2709
  %v3291 = vunpack.c.h.b16 %v2709
  %v3292 = vunpack.c.l.b16 %v2710
  %v3293 = vunpack.c.h.b16 %v2710
  %v3294 = vunpack.c.l.b16 %v2711
  %v3295 = vunpack.c.h.b16 %v2711
  %v3296 = vunpack.c.l.b16 %v2712
  %v3297 = vunpack.c.h.b16 %v2712
  %v3298 = vunpack.c.l.b16 %v2713
  %v3299 = vunpack.c.h.b16 %v2713
  %v3300 = vunpack.c.l.b16 %v2714
  %v3301 = vunpack.c.h.b16 %v2714
  %v3302 = vunpack.c.l.b16 %v2715
  %v3303 = vunpack.c.h.b16 %v2715
  %v3304 = vunpack.c.l.b16 %v2716
  %v3305 = vunpack.c.h.b16 %v2716
  %v3306 = vunpack.c.l.b16 %v2717
  %v3307 = vunpack.c.h.b16 %v2717
  %v3308 = vunpack.c.l.b16 %v2718
  %v3309 = vunpack.c.h.b16 %v2718
  %v3310 = vunpack.c.l.b16 %v2719
  %v3311 = vunpack.c.h.b16 %v2719
  %v3312 = vunpack.c.l.b16 %v2720
  %v3313 = vunpack.c.h.b16 %v2720
  %v3314 = vunpack.c.l.b16 %v2721
  %v3315 = vunpack.c.h.b16 %v2721
  %v3316 = vunpack.c.l.b16 %v2722
  %v3317 = vunpack.c.h.b16 %v2722
  %v3318 = vunpack.c.l.b16 %v2723
  %v3319 = vunpack.c.h.b16 %v2723
  %v3320 = vunpack.c.l.b16 %v2724
  %v3321 = vunpack.c.h.b16 %v2724
  %v3322 = vunpack.c.l.b16 %v2725
  %v3323 = vunpack.c.h.b16 %v2725
  %v3324 = vunpack.c.l.b16 %v2726
  %v3325 = vunpack.c.h.b16 %v2726
  %v3326 = vunpack.c.l.b16 %v2727
  %v3327 = vunpack.c.h.b16 %v2727
  %v3328 = vunpack.c.l.b16 %v2728
  %v3329 = vunpack.c.h.b16 %v2728
  %v3330 = vunpack.c.l.b16 %v2729
  %v3331 = vunpack.c.h.b16 %v2729
  %v3332 = vunpack.c.l.b16 %v2730
  %v3333 = vunpack.c.h.b16 %v2730
  %v3334 = vunpack.c.l.b16 %v2731
  %v3335 = vunpack.c.h.b16 %v2731
  %v3336 = vunpack.c.l.b16 %v2732
  %v3337 = vunpack.c.h.b16 %v2732
  %v3338 = vpack.c.b16 %v3090, %v3082
  %v3339 = vpack.c.b16 %v3091, %v3083
  %v3340 = vpack.c.b16 %v3092, %v3084
  %v3341 = vpack.c.b16 %v3093, %v3085
  %v3342 = vpack.c.b16 %v3094, %v3086
  %v3343 = vpack.c.b16 %v3095, %v3087
  %v3344 = vpack.c.b16 %v3096, %v3088
  %v3345 = vpack.c.b16 %v3097, %v3089
  %v3346 = vpack.c.b16 %v3106, %v3098
  %v3347 = vpack.c.b16 %v3107, %v3099
  %v3348 = vpack.c.b16 %v3108, %v3100
  %v3349 = vpack.c.b16 %v3109, %v3101
  %v3350 = vpack.c.b16 %v3110, %v3102
  %v3351 = vpack.c.b16 %v3111, %v3103
  %v3352 = vpack.c.b16 %v3112, %v3104
  %v3353 = vpack.c.b16 %v3113, %v3105
  %v3354 = vpack.c.b16 %v3122, %v3114
  %v3355 = vpack.c.b16 %v3123, %v3115
  %v3356 = vpack.c.b16 %v3124, %v3116
  %v3357 = vpack.c.b16 %v3125, %v3117
  %v3358 = vpack.c.b16 %v3126, %v3118
  %v3359 = vpack.c.b16 %v3127, %v3119
  %v3360 = vpack.c.b16 %v3128, %v3120
  %v3361 = vpack.c.b16 %v3129, %v3121
  %v3362 = vpack.c.b16 %v3138, %v3130
  %v3363 = vpack.c.b16 %v3139, %v3131
  %v3364 = vpack.c.b16 %v3140, %v3132
  %v3365 = vpack.c.b16 %v3141, %v3133
  %v3366 = vpack.c.b16 %v3142, %v3134
  %v3367 = vpack.c.b16 %v3143, %v3135
  %v3368 = vpack.c.b16 %v3144, %v3136
  %v3369 = vpack.c.b16 %v3145, %v3137
  %v3370 = vpack.c.b16 %v3154, %v3146
  %v3371 = vpack.c.b16 %v3155, %v3147
  %v3372 = vpack.c.b16 %v3156, %v3148
  %v3373 = vpack.c.b16 %v3157, %v3149
  %v3374 = vpack.c.b16 %v3158, %v3150
  %v3375 = vpack.c.b16 %v3159, %v3151
  %v3376 = vpack.c.b16 %v3160, %v3152
  %v3377 = vpack.c.b16 %v3161, %v3153
  %v3378 = vpack.c.b16 %v3170, %v3162
  %v3379 = vpack.c.b16 %v3171, %v3163
  %v3380 = vpack.c.b16 %v3172, %v3164
  %v3381 = vpack.c.b16 %v3173, %v3165
  %v3382 = vpack.c.b16 %v3174, %v3166
  %v3383 = vpack.c.b16 %v3175, %v3167
  %v3384 = vpack.c.b16 %v3176, %v3168
  %v3385 = vpack.c.b16 %v3177, %v3169
  %v3386 = vpack.c.b16 %v3186, %v3178
  %v3387 = vpack.c.b16 %v3187, %v3179
  %v3388 = vpack.c.b16 %v3188, %v3180
  %v3389 = vpack.c.b16 %v3189, %v3181
  %v3390 = vpack.c.b16 %v3190, %v3182
  %v3391 = vpack.c.b16 %v3191, %v3183
  %v3392 = vpack.c.b16 %v3192, %v3184
  %v3393 = vpack.c.b16 %v3193, %v3185
  %v3394 = vpack.c.b16 %v3202, %v3194
  %v3395 = vpack.c.b16 %v3203, %v3195
  %v3396 = vpack.c.b16 %v3204, %v3196
  %v3397 = vpack.c.b16 %v3205, %v3197
  %v3398 = vpack.c.b16 %v3206, %v3198
  %v3399 = vpack.c.b16 %v3207, %v3199
  %v3400 = vpack.c.b16 %v3208, %v3200
  %v3401 = vpack.c.b16 %v3209, %v3201
  %v3402 = vpack.c.b16 %v3218, %v3210
  %v3403 = vpack.c.b16 %v3219, %v3211
  %v3404 = vpack.c.b16 %v3220, %v3212
  %v3405 = vpack.c.b16 %v3221, %v3213
  %v3406 = vpack.c.b16 %v3222, %v3214
  %v3407 = vpack.c.b16 %v3223, %v3215
  %v3408 = vpack.c.b16 %v3224, %v3216
  %v3409 = vpack.c.b16 %v3225, %v3217
  %v3410 = vpack.c.b16 %v3234, %v3226
  %v3411 = vpack.c.b16 %v3235, %v3227
  %v3412 = vpack.c.b16 %v3236, %v3228
  %v3413 = vpack.c.b16 %v3237, %v3229
  %v3414 = vpack.c.b16 %v3238, %v3230
  %v3415 = vpack.c.b16 %v3239, %v3231
  %v3416 = vpack.c.b16 %v3240, %v3232
  %v3417 = vpack.c.b16 %v3241, %v3233
  %v3418 = vpack.c.b16 %v3250, %v3242
  %v3419 = vpack.c.b16 %v3251, %v3243
  %v3420 = vpack.c.b16 %v3252, %v3244
  %v3421 = vpack.c.b16 %v3253, %v3245
  %v3422 = vpack.c.b16 %v3254, %v3246
  %v3423 = vpack.c.b16 %v3255, %v3247
  %v3424 = vpack.c.b16 %v3256, %v3248
  %v3425 = vpack.c.b16 %v3257, %v3249
  %v3426 = vpack.c.b16 %v3266, %v3258
  %v3427 = vpack.c.b16 %v3267, %v3259
  %v3428 = vpack.c.b16 %v3268, %v3260
  %v3429 = vpack.c.b16 %v3269, %v3261
  %v3430 = vpack.c.b16 %v3270, %v3262
  %v3431 = vpack.c.b16 %v3271, %v3263
  %v3432 = vpack.c.b16 %v3272, %v3264
  %v3433 = vpack.c.b16 %v3273, %v3265
  %v3434 = vpack.c.b16 %v3282, %v3274
  %v3435 = vpack.c.b16 %v3283, %v3275
  %v3436 = vpack.c.b16 %v3284, %v3276
  %v3437 = vpack.c.b16 %v3285, %v3277
  %v3438 = vpack.c.b16 %v3286, %v3278
  %v3439 = vpack.c.b16 %v3287, %v3279
  %v3440 = vpack.c.b16 %v3288, %v3280
  %v3441 = vpack.c.b16 %v3289, %v3281
  %v3442 = vpack.c.b16 %v3298, %v3290
  %v3443 = vpack.c.b16 %v3299, %v3291
  %v3444 = vpack.c.b16 %v3300, %v3292
  %v3445 = vpack.c.b16 %v3301, %v3293
  %v3446 = vpack.c.b16 %v3302, %v3294
  %v3447 = vpack.c.b16 %v3303, %v3295
  %v3448 = vpack.c.b16 %v3304, %v3296
  %v3449 = vpack.c.b16 %v3305, %v3297
  %v3450 = vpack.c.b16 %v3314, %v3306
  %v3451 = vpack.c.b16 %v3315, %v3307
  %v3452 = vpack.c.b16 %v3316, %v3308
  %v3453 = vpack.c.b16 %v3317, %v3309
  %v3454 = vpack.c.b16 %v3318, %v3310
  %v3455 = vpack.c.b16 %v3319, %v3311
  %v3456 = vpack.c.b16 %v3320, %v3312
  %v3457 = vpack.c.b16 %v3321, %v3313
  %v3458 = vpack.c.b16 %v3330, %v3322
  %v3459 = vpack.c.b16 %v3331, %v3323
  %v3460 = vpack.c.b16 %v3332, %v3324
  %v3461 = vpack.c.b16 %v3333, %v3325
  %v3462 = vpack.c.b16 %v3334, %v3326
  %v3463 = vpack.c.b16 %v3335, %v3327
  %v3464 = vpack.c.b16 %v3336, %v3328
  %v3465 = vpack.c.b16 %v3337, %v3329
  %3594 = vmatprep.subr.bf16.mxu0 %v3339
  %3595 = vmatpush1.bf16.msra.mxu0 %v3338
  %3596 = vmatprep.subr.bf16.mxu0 %v3347
  %3597 = vmatpush1.bf16.msra.mxu0 %v3346
  %3598 = vmatprep.subr.bf16.mxu0 %v3355
  %3599 = vmatpush1.bf16.msra.mxu0 %v3354
  %3600 = vmatprep.subr.bf16.mxu0 %v3363
  %3601 = vmatpush1.bf16.msra.mxu0 %v3362
  %3602 = vmatprep.subr.bf16.mxu0 %v3371
  %3603 = vmatpush1.bf16.msra.mxu0 %v3370
  %3604 = vmatprep.subr.bf16.mxu0 %v3379
  %3605 = vmatpush1.bf16.msra.mxu0 %v3378
  %3606 = vmatprep.subr.bf16.mxu0 %v3387
  %3607 = vmatpush1.bf16.msra.mxu0 %v3386
  %3608 = vmatprep.subr.bf16.mxu0 %v3395
  %3609 = vmatpush1.bf16.msra.mxu0 %v3394
  %3610 = vmatprep.subr.bf16.mxu0 %v3403
  %3611 = vmatpush1.bf16.msra.mxu0 %v3402
  %3612 = vmatprep.subr.bf16.mxu0 %v3411
  %3613 = vmatpush1.bf16.msra.mxu0 %v3410
  %3614 = vmatprep.subr.bf16.mxu0 %v3419
  %3615 = vmatpush1.bf16.msra.mxu0 %v3418
  %3616 = vmatprep.subr.bf16.mxu0 %v3427
  %3617 = vmatpush1.bf16.msra.mxu0 %v3426
  %3618 = vmatprep.subr.bf16.mxu0 %v3435
  %3619 = vmatpush1.bf16.msra.mxu0 %v3434
  %3620 = vmatprep.subr.bf16.mxu0 %v3443
  %3621 = vmatpush1.bf16.msra.mxu0 %v3442
  %3622 = vmatprep.subr.bf16.mxu0 %v3451
  %3623 = vmatpush1.bf16.msra.mxu0 %v3450
  %3624 = vmatprep.subr.bf16.mxu0 %v3459
  %3625 = vmatpush1.bf16.msra.mxu0 %v3458
  %3626 = vmatprep.mubr.bf16.mxu0 %v2604
  %3627 = vmatmul.mubr.bf16.gmra.mrb[0].mxu0 %v2603
  %v3628 = vpop.f32.mrb[0].mxu0
  %v3629 = vadd.f32 %v2825, %v3628
  %v3630 = vpop.f32.mrb[0].mxu0
  %v3631 = vadd.f32 %v2827, %v3630
  %v3632 = vpop.f32.mrb[0].mxu0
  %v3633 = vpop.f32.mrb[0].mxu0
  %3634 = vdwg.mxu0
  %3635 = vmatprep.subr.bf16.mxu0 %v3341
  %3636 = vmatpush1.bf16.msra.mxu0 %v3340
  %3637 = vmatprep.subr.bf16.mxu0 %v3349
  %3638 = vmatpush1.bf16.msra.mxu0 %v3348
  %3639 = vmatprep.subr.bf16.mxu0 %v3357
  %3640 = vmatpush1.bf16.msra.mxu0 %v3356
  %3641 = vmatprep.subr.bf16.mxu0 %v3365
  %3642 = vmatpush1.bf16.msra.mxu0 %v3364
  %3643 = vmatprep.subr.bf16.mxu0 %v3373
  %3644 = vmatpush1.bf16.msra.mxu0 %v3372
  %3645 = vmatprep.subr.bf16.mxu0 %v3381
  %3646 = vmatpush1.bf16.msra.mxu0 %v3380
  %3647 = vmatprep.subr.bf16.mxu0 %v3389
  %3648 = vmatpush1.bf16.msra.mxu0 %v3388
  %3649 = vmatprep.subr.bf16.mxu0 %v3397
  %3650 = vmatpush1.bf16.msra.mxu0 %v3396
  %3651 = vmatprep.subr.bf16.mxu0 %v3405
  %3652 = vmatpush1.bf16.msra.mxu0 %v3404
  %3653 = vmatprep.subr.bf16.mxu0 %v3413
  %3654 = vmatpush1.bf16.msra.mxu0 %v3412
  %3655 = vmatprep.subr.bf16.mxu0 %v3421
  %3656 = vmatpush1.bf16.msra.mxu0 %v3420
  %3657 = vmatprep.subr.bf16.mxu0 %v3429
  %3658 = vmatpush1.bf16.msra.mxu0 %v3428
  %3659 = vmatprep.subr.bf16.mxu0 %v3437
  %3660 = vmatpush1.bf16.msra.mxu0 %v3436
  %3661 = vmatprep.subr.bf16.mxu0 %v3445
  %3662 = vmatpush1.bf16.msra.mxu0 %v3444
  %3663 = vmatprep.subr.bf16.mxu0 %v3453
  %3664 = vmatpush1.bf16.msra.mxu0 %v3452
  %3665 = vmatprep.subr.bf16.mxu0 %v3461
  %3666 = vmatpush1.bf16.msra.mxu0 %v3460
  %3667 = vmatprep.mubr.bf16.mxu0 %v2604
  %3668 = vmatmul.mubr.bf16.gmra.mrb[0].mxu0 %v2603
  %v3669 = vpop.f32.mrb[0].mxu0
  %v3670 = vadd.f32 %v2866, %v3669
  %v3671 = vpop.f32.mrb[0].mxu0
  %v3672 = vadd.f32 %v2868, %v3671
  %v3673 = vpop.f32.mrb[0].mxu0
  %v3674 = vpop.f32.mrb[0].mxu0
  %3675 = vdwg.mxu0
  %3676 = vmatprep.subr.bf16.mxu0 %v3343
  %3677 = vmatpush1.bf16.msra.mxu0 %v3342
  %3678 = vmatprep.subr.bf16.mxu0 %v3351
  %3679 = vmatpush1.bf16.msra.mxu0 %v3350
  %3680 = vmatprep.subr.bf16.mxu0 %v3359
  %3681 = vmatpush1.bf16.msra.mxu0 %v3358
  %3682 = vmatprep.subr.bf16.mxu0 %v3367
  %3683 = vmatpush1.bf16.msra.mxu0 %v3366
  %3684 = vmatprep.subr.bf16.mxu0 %v3375
  %3685 = vmatpush1.bf16.msra.mxu0 %v3374
  %3686 = vmatprep.subr.bf16.mxu0 %v3383
  %3687 = vmatpush1.bf16.msra.mxu0 %v3382
  %3688 = vmatprep.subr.bf16.mxu0 %v3391
  %3689 = vmatpush1.bf16.msra.mxu0 %v3390
  %3690 = vmatprep.subr.bf16.mxu0 %v3399
  %3691 = vmatpush1.bf16.msra.mxu0 %v3398
  %3692 = vmatprep.subr.bf16.mxu0 %v3407
  %3693 = vmatpush1.bf16.msra.mxu0 %v3406
  %3694 = vmatprep.subr.bf16.mxu0 %v3415
  %3695 = vmatpush1.bf16.msra.mxu0 %v3414
  %3696 = vmatprep.subr.bf16.mxu0 %v3423
  %3697 = vmatpush1.bf16.msra.mxu0 %v3422
  %3698 = vmatprep.subr.bf16.mxu0 %v3431
  %3699 = vmatpush1.bf16.msra.mxu0 %v3430
  %3700 = vmatprep.subr.bf16.mxu0 %v3439
  %3701 = vmatpush1.bf16.msra.mxu0 %v3438
  %3702 = vmatprep.subr.bf16.mxu0 %v3447
  %3703 = vmatpush1.bf16.msra.mxu0 %v3446
  %3704 = vmatprep.subr.bf16.mxu0 %v3455
  %3705 = vmatpush1.bf16.msra.mxu0 %v3454
  %3706 = vmatprep.subr.bf16.mxu0 %v3463
  %3707 = vmatpush1.bf16.msra.mxu0 %v3462
  %3708 = vmatprep.mubr.bf16.mxu0 %v2604
  %3709 = vmatmul.mubr.bf16.gmra.mrb[0].mxu0 %v2603
  %v3710 = vpop.f32.mrb[0].mxu0
  %v3711 = vadd.f32 %v2907, %v3710
  %v3712 = vpop.f32.mrb[0].mxu0
  %v3713 = vadd.f32 %v2909, %v3712
  %v3714 = vpop.f32.mrb[0].mxu0
  %v3715 = vpop.f32.mrb[0].mxu0
  %3716 = vdwg.mxu0
  %3717 = vmatprep.subr.bf16.mxu0 %v3345
  %3718 = vmatpush1.bf16.msra.mxu0 %v3344
  %3719 = vmatprep.subr.bf16.mxu0 %v3353
  %3720 = vmatpush1.bf16.msra.mxu0 %v3352
  %3721 = vmatprep.subr.bf16.mxu0 %v3361
  %3722 = vmatpush1.bf16.msra.mxu0 %v3360
  %3723 = vmatprep.subr.bf16.mxu0 %v3369
  %3724 = vmatpush1.bf16.msra.mxu0 %v3368
  %3725 = vmatprep.subr.bf16.mxu0 %v3377
  %3726 = vmatpush1.bf16.msra.mxu0 %v3376
  %3727 = vmatprep.subr.bf16.mxu0 %v3385
  %3728 = vmatpush1.bf16.msra.mxu0 %v3384
  %3729 = vmatprep.subr.bf16.mxu0 %v3393
  %3730 = vmatpush1.bf16.msra.mxu0 %v3392
  %3731 = vmatprep.subr.bf16.mxu0 %v3401
  %3732 = vmatpush1.bf16.msra.mxu0 %v3400
  %3733 = vmatprep.subr.bf16.mxu0 %v3409
  %3734 = vmatpush1.bf16.msra.mxu0 %v3408
  %3735 = vmatprep.subr.bf16.mxu0 %v3417
  %3736 = vmatpush1.bf16.msra.mxu0 %v3416
  %3737 = vmatprep.subr.bf16.mxu0 %v3425
  %3738 = vmatpush1.bf16.msra.mxu0 %v3424
  %3739 = vmatprep.subr.bf16.mxu0 %v3433
  %3740 = vmatpush1.bf16.msra.mxu0 %v3432
  %3741 = vmatprep.subr.bf16.mxu0 %v3441
  %3742 = vmatpush1.bf16.msra.mxu0 %v3440
  %3743 = vmatprep.subr.bf16.mxu0 %v3449
  %3744 = vmatpush1.bf16.msra.mxu0 %v3448
  %3745 = vmatprep.subr.bf16.mxu0 %v3457
  %3746 = vmatpush1.bf16.msra.mxu0 %v3456
  %3747 = vmatprep.subr.bf16.mxu0 %v3465
  %3748 = vmatpush1.bf16.msra.mxu0 %v3464
  %3749 = vmatprep.mubr.bf16.mxu0 %v2604
  %3750 = vmatmul.mubr.bf16.gmra.mrb[0].mxu0 %v2603
  %v3751 = vpop.f32.mrb[0].mxu0
  %v3752 = vadd.f32 %v2948, %v3751
  %v3753 = vpop.f32.mrb[0].mxu0
  %v3754 = vadd.f32 %v2950, %v3753
  %v3755 = vpop.f32.mrb[0].mxu0
  %v3756 = vpop.f32.mrb[0].mxu0
  %3757 = vdwg.mxu0
  %v3758 = vld [vmem:[%s6] sm:$0xff]
  %v3760 = vlaneseq
  %v3761 = vshrl.u32 %v3760, 7
  %v3762 = vsub.s32 0, %v3761
  %v3763 = vrot.slane %v3758, %v3762
  %v3764 = vlaneseq
  %v3765 = vshrl.u32 %v3764, 7
  %v3766 = vsub.s32 1, %v3765
  %v3767 = vrot.slane %v3758, %v3766
  %v3768 = vlaneseq
  %v3769 = vshrl.u32 %v3768, 7
  %v3770 = vsub.s32 2, %v3769
  %v3771 = vrot.slane %v3758, %v3770
  %v3772 = vlaneseq
  %v3773 = vshrl.u32 %v3772, 7
  %v3774 = vsub.s32 3, %v3773
  %v3775 = vrot.slane %v3758, %v3774
  %v3776 = vlaneseq
  %v3777 = vshrl.u32 %v3776, 7
  %v3778 = vsub.s32 4, %v3777
  %v3779 = vrot.slane %v3758, %v3778
  %v3780 = vlaneseq
  %v3781 = vshrl.u32 %v3780, 7
  %v3782 = vsub.s32 5, %v3781
  %v3783 = vrot.slane %v3758, %v3782
  %v3784 = vlaneseq
  %v3785 = vshrl.u32 %v3784, 7
  %v3786 = vsub.s32 6, %v3785
  %v3787 = vrot.slane %v3758, %v3786
  %v3788 = vlaneseq
  %v3789 = vshrl.u32 %v3788, 7
  %v3790 = vsub.s32 7, %v3789
  %v3791 = vrot.slane %v3758, %v3790
  %v3800 = vadd.f32 %v3629, %v3763
  %v3801 = vadd.f32 %v3631, %v3767
  %v3802 = vadd.f32 %v3670, %v3771
  %v3803 = vadd.f32 %v3672, %v3775
  %v3804 = vadd.f32 %v3711, %v3779
  %v3805 = vadd.f32 %v3713, %v3783
  %v3806 = vadd.f32 %v3752, %v3787
  %v3807 = vadd.f32 %v3754, %v3791
  %v3816 = vcombine.low %v3800, %v3801
  %v3817 = vcombine.low %v3802, %v3803
  %v3819 = vunpack.c.l.s4 1983009808
  %v3820 = vunpack.c.0.s8 %v3819
  %v3821 = vlaneseq
  %v3822 = vshrl.u32 %v3821, 7
  %v3823 = vsub.s32 %v3820, %v3822
  %v3824 = vrot.slane %v3816, %v3823
  %v3826 = vunpack.c.l.s4 1983009808
  %v3827 = vunpack.c.0.s8 %v3826
  %v3828 = vlaneseq
  %v3829 = vshrl.u32 %v3828, 7
  %v3830 = vsub.s32 %v3827, %v3829
  %v3831 = vrot.slane %v3817, %v3830
  %v3832 = vcombine.low %v3824, %v3831
  %v3833 = vcombine.low %v3804, %v3805
  %v3834 = vcombine.low %v3806, %v3807
  %v3836 = vunpack.c.l.s4 1983009808
  %v3837 = vunpack.c.0.s8 %v3836
  %v3838 = vlaneseq
  %v3839 = vshrl.u32 %v3838, 7
  %v3840 = vsub.s32 %v3837, %v3839
  %v3841 = vrot.slane %v3833, %v3840
  %v3843 = vunpack.c.l.s4 1983009808
  %v3844 = vunpack.c.0.s8 %v3843
  %v3845 = vlaneseq
  %v3846 = vshrl.u32 %v3845, 7
  %v3847 = vsub.s32 %v3844, %v3846
  %v3848 = vrot.slane %v3834, %v3847
  %v3849 = vcombine.low %v3841, %v3848
  %3852 = vst [vmem:[%s7] sm:$0xff] %v3832
  %3853 = vst [vmem:[%s7 + $0x8] sm:$0xff] %v3849
  // Predicated region
  $region30: #{unreal_forward.7} parent=0 // pred_check
    _
  $region31: #{unreal_forward.7} parent=0 // pred_check_branch
    %3855 = sbr.rel (0) target = $region33
  $region32: #{unreal_forward.7} parent=0 // pred_region
    _
  $region33: #{unreal_forward.7} parent=0 // pred_fallthru
    _
  // Predicated region
  $region34: #{unreal_forward.7} parent=0 // pred_check
    _
  $region35: #{unreal_forward.7} parent=0 // pred_check_branch
    %3857 = sbr.rel (0) target = $region37
  $region36: #{unreal_forward.7} parent=0 // pred_region
    _
  $region37: #{unreal_forward.7} parent=0 // pred_fallthru
    _

// kernel: unreal_forward.9
$region0: #{unreal_forward.9}
  #allocation0 [shape = 'u32[]', space=smem, size = 0x4, offset = 0x4, fixed_abs, tag = 'smem constant byte address 0x4 - core index']
  #allocation1 [shape = 'u32[144,128]{1,0:T(1,128)}', space=vmem, size = 0x12000, scoped, tag = 'internal scratch']
  %s0 = inlined_call_operand.vmem [shape: f32[2,256], index: 0, kind: input, shape index: {}]
  %s1 = inlined_call_operand.vmem [shape: f32[256,7], index: 1, kind: input, shape index: {}]
  %s2 = inlined_call_operand.vmem [shape: f32[1,7], index: 2, kind: input, shape index: {}]
  %s3 = inlined_call_operand.vmem [shape: f32[2,7], index: 3, kind: output, shape index: {}]
  %s4 = sld [smem:[#allocation0]]
  $region22: #{unreal_forward.9} parent=0
    _
  %s6 = ssub.s32 1, %s4
  %s7 = scalar_select 0, %s6, %s4
  // Predicated region
  $region2: #{unreal_forward.9} parent=0 // pred_check
    _
  $region3: #{unreal_forward.9} parent=0 // pred_check_branch
    %9 = sbr.rel (0) target = $region5
  $region4: #{unreal_forward.9} parent=0 // pred_region
    _
  $region5: #{unreal_forward.9} parent=0 // pred_fallthru
    _
  // Predicated region
  $region6: #{unreal_forward.9} parent=0 // pred_check
    _
  $region7: #{unreal_forward.9} parent=0 // pred_check_branch
    %11 = sbr.rel (0) target = $region9
  $region8: #{unreal_forward.9} parent=0 // pred_region
    _
  $region9: #{unreal_forward.9} parent=0 // pred_fallthru
    _
  // Predicated region
  $region10: #{unreal_forward.9} parent=0 // pred_check
    _
  $region11: #{unreal_forward.9} parent=0 // pred_check_branch
    %13 = sbr.rel (0) target = $region13
  $region12: #{unreal_forward.9} parent=0 // pred_region
    _
  $region13: #{unreal_forward.9} parent=0 // pred_fallthru
    _
  %v14 = vld [vmem:[%s0] sm:$0xf]
  %v15 = vld [vmem:[%s1] sm:$0xff]
  %v16 = vld [vmem:[%s1 + $0x8] sm:$0xff]
  %v17 = vld [vmem:[%s1 + $0x10] sm:$0xff]
  %v18 = vld [vmem:[%s1 + $0x18] sm:$0xff]
  %v19 = vld [vmem:[%s1 + $0x20] sm:$0xff]
  %v20 = vld [vmem:[%s1 + $0x28] sm:$0xff]
  %v21 = vld [vmem:[%s1 + $0x30] sm:$0xff]
  %v22 = vld [vmem:[%s1 + $0x38] sm:$0xff]
  %v23 = vld [vmem:[%s1 + $0x40] sm:$0xff]
  %v24 = vld [vmem:[%s1 + $0x48] sm:$0xff]
  %v25 = vld [vmem:[%s1 + $0x50] sm:$0xff]
  %v26 = vld [vmem:[%s1 + $0x58] sm:$0xff]
  %v27 = vld [vmem:[%s1 + $0x60] sm:$0xff]
  %v28 = vld [vmem:[%s1 + $0x68] sm:$0xff]
  %v29 = vld [vmem:[%s1 + $0x70] sm:$0xff]
  %v30 = vld [vmem:[%s1 + $0x78] sm:$0xff]
  %v31 = vld [vmem:[%s1 + $0x80] sm:$0xff]
  %v32 = vld [vmem:[%s1 + $0x88] sm:$0xff]
  %v33 = vld [vmem:[%s1 + $0x90] sm:$0xff]
  %v34 = vld [vmem:[%s1 + $0x98] sm:$0xff]
  %v35 = vld [vmem:[%s1 + $0xa0] sm:$0xff]
  %v36 = vld [vmem:[%s1 + $0xa8] sm:$0xff]
  %v37 = vld [vmem:[%s1 + $0xb0] sm:$0xff]
  %v38 = vld [vmem:[%s1 + $0xb8] sm:$0xff]
  %v39 = vld [vmem:[%s1 + $0xc0] sm:$0xff]
  %v40 = vld [vmem:[%s1 + $0xc8] sm:$0xff]
  %v41 = vld [vmem:[%s1 + $0xd0] sm:$0xff]
  %v42 = vld [vmem:[%s1 + $0xd8] sm:$0xff]
  %v43 = vld [vmem:[%s1 + $0xe0] sm:$0xff]
  %v44 = vld [vmem:[%s1 + $0xe8] sm:$0xff]
  %v45 = vld [vmem:[%s1 + $0xf0] sm:$0xff]
  %v46 = vld [vmem:[%s1 + $0xf8] sm:$0xff]
  %v47 = vld [vmem:[%s2] sm:$0x1]
  %v49 = vlaneseq
  %v50 = vshrl.u32 %v49, 7
  %v51 = vsub.s32 0, %v50
  %v52 = vrot.slane %v47, %v51
  %v56 = vunpack.c.l.s4 1983009808
  %v57 = vunpack.c.0.s8 %v56
  %v58 = vlaneseq
  %v59 = vshrl.u32 %v58, 7
  %v60 = vsub.s32 %v57, %v59
  %v61 = vrot.slane %v14, %v60
  %v62 = vcombine.high %v61, %v61
  %65 = vmatprep.subr.mxu0 0.0
  %66 = vmatpush1.msra.mxu0 %v15
  %67 = vmatprep.subr.mxu0 0.0
  %68 = vmatpush1.msra.mxu0 %v16
  %69 = vmatprep.subr.mxu0 0.0
  %70 = vmatpush1.msra.mxu0 %v17
  %71 = vmatprep.subr.mxu0 0.0
  %72 = vmatpush1.msra.mxu0 %v18
  %73 = vmatprep.subr.mxu0 0.0
  %74 = vmatpush1.msra.mxu0 %v19
  %75 = vmatprep.subr.mxu0 0.0
  %76 = vmatpush1.msra.mxu0 %v20
  %77 = vmatprep.subr.mxu0 0.0
  %78 = vmatpush1.msra.mxu0 %v21
  %79 = vmatprep.subr.mxu0 0.0
  %80 = vmatpush1.msra.mxu0 %v22
  %81 = vmatprep.subr.mxu0 0.0
  %82 = vmatpush1.msra.mxu0 %v23
  %83 = vmatprep.subr.mxu0 0.0
  %84 = vmatpush1.msra.mxu0 %v24
  %85 = vmatprep.subr.mxu0 0.0
  %86 = vmatpush1.msra.mxu0 %v25
  %87 = vmatprep.subr.mxu0 0.0
  %88 = vmatpush1.msra.mxu0 %v26
  %89 = vmatprep.subr.mxu0 0.0
  %90 = vmatpush1.msra.mxu0 %v27
  %91 = vmatprep.subr.mxu0 0.0
  %92 = vmatpush1.msra.mxu0 %v28
  %93 = vmatprep.subr.mxu0 0.0
  %94 = vmatpush1.msra.mxu0 %v29
  %95 = vmatprep.subr.mxu0 0.0
  %96 = vmatpush1.msra.mxu0 %v30
  %97 = vmatprep.subr.mxu0 0.0
  %98 = vmatpush1.msra.mxu0 %v31
  %99 = vmatprep.subr.mxu0 0.0
  %100 = vmatpush1.msra.mxu0 %v32
  %101 = vmatprep.subr.mxu0 0.0
  %102 = vmatpush1.msra.mxu0 %v33
  %103 = vmatprep.subr.mxu0 0.0
  %104 = vmatpush1.msra.mxu0 %v34
  %105 = vmatprep.subr.mxu0 0.0
  %106 = vmatpush1.msra.mxu0 %v35
  %107 = vmatprep.subr.mxu0 0.0
  %108 = vmatpush1.msra.mxu0 %v36
  %109 = vmatprep.subr.mxu0 0.0
  %110 = vmatpush1.msra.mxu0 %v37
  %111 = vmatprep.subr.mxu0 0.0
  %112 = vmatpush1.msra.mxu0 %v38
  %113 = vmatprep.subr.mxu0 0.0
  %114 = vmatpush1.msra.mxu0 %v39
  %115 = vmatprep.subr.mxu0 0.0
  %116 = vmatpush1.msra.mxu0 %v40
  %117 = vmatprep.subr.mxu0 0.0
  %118 = vmatpush1.msra.mxu0 %v41
  %119 = vmatprep.subr.mxu0 0.0
  %120 = vmatpush1.msra.mxu0 %v42
  %121 = vmatprep.subr.mxu0 0.0
  %122 = vmatpush1.msra.mxu0 %v43
  %123 = vmatprep.subr.mxu0 0.0
  %124 = vmatpush1.msra.mxu0 %v44
  %125 = vmatprep.subr.mxu0 0.0
  %126 = vmatpush1.msra.mxu0 %v45
  %127 = vmatprep.subr.mxu0 0.0
  %128 = vmatpush1.msra.mxu0 %v46
  %129 = vmatprep.mubr.f32.mxu0 %v62
  %130 = vmatmul.mubr.f32.gmra.mrb[0].mxu0 %v61
  %v131 = vpop.f32.mrb[0].mxu0
  %v132 = vadd.f32 %v52, %v131
  %v133 = vpop.f32.mrb[0].mxu0
  %134 = vdwg.mxu0
  %vm135 = vcmask 50176
  %136 = vst.msk [vmem:[%s3] sm:$0x3] %vm135, %v132
  // Predicated region
  $region14: #{unreal_forward.9} parent=0 // pred_check
    _
  $region15: #{unreal_forward.9} parent=0 // pred_check_branch
    %138 = sbr.rel (0) target = $region17
  $region16: #{unreal_forward.9} parent=0 // pred_region
    _
  $region17: #{unreal_forward.9} parent=0 // pred_fallthru
    _
  // Predicated region
  $region18: #{unreal_forward.9} parent=0 // pred_check
    _
  $region19: #{unreal_forward.9} parent=0 // pred_check_branch
    %140 = sbr.rel (0) target = $region21
  $region20: #{unreal_forward.9} parent=0 // pred_region
    _
  $region21: #{unreal_forward.9} parent=0 // pred_fallthru
    _

// kernel: unreal_forward.8
$region0: #{unreal_forward.8}
  #allocation0 [shape = 'u32[]', space=smem, size = 0x4, offset = 0x4, fixed_abs, tag = 'smem constant byte address 0x4 - core index']
  #allocation1 [shape = 'u32[144,128]{1,0:T(1,128)}', space=vmem, size = 0x12000, scoped, tag = 'internal scratch']
  #allocation2 [shape = 'f32[1,256]{1,0:T(1,128)}', space=vmem, size = 0x400, scoped, tag = 'scratch operand']
  #allocation3 [shape = 'f32[1,256]{1,0:T(1,128)}', space=vmem, size = 0x400, scoped, tag = 'scratch operand']
  %s0 = inlined_call_operand.vmem [shape: f32[2,1024], index: 0, kind: input, shape index: {}]
  %s1 = inlined_call_operand.vmem [shape: f32[1,256], index: 1, kind: input, shape index: {}]
  %s2 = inlined_call_operand.vmem [shape: f32[1,256], index: 2, kind: input, shape index: {}]
  %s3 = inlined_call_operand.vmem [shape: f32[256,1024], index: 3, kind: input, shape index: {}]
  %s4 = inlined_call_operand.vmem [shape: f32[2,256], index: 4, kind: output, shape index: {0}]
  %s5 = inlined_call_operand.hbm [shape: f32[1,256], index: 5, kind: output, shape index: {1}]
  %s6 = inlined_call_operand.hbm [shape: f32[1,256], index: 6, kind: output, shape index: {2}]
  %7 = xla_tuple %s4, %s5, %s6
  %s8 = sld [smem:[#allocation0]]
  $region49: #{unreal_forward.8} parent=0
    _
  %s10 = ssub.s32 1, %s8
  %s11 = scalar_select 0, %s10, %s8
  $region1: #{unreal_forward.8} parent=0
    #allocation4 [shape = 'u8[1024]{0}', space=vmem, size = 0x400, scoped, tag = 'output window, operand 1, single buffered']
    #allocation5 [shape = 's32[1]{0}', space=sflag, size = 0x4, scoped, tag = 'scoped memory for unreal_forward.8']
    #allocation6 [shape = 'u8[1024]{0}', space=vmem, size = 0x400, scoped, tag = 'output window, operand 2, single buffered']
    #allocation7 [shape = 's32[1]{0}', space=sflag, size = 0x4, scoped, tag = 'scoped memory for unreal_forward.8']
    %12 = vsyncpa [#allocation5], 0
    %13 = vsyncpa [#allocation7], 0
    // Predicated region
    $region2: #{unreal_forward.8} parent=1 // pred_check
      _
    $region3: #{unreal_forward.8} parent=1 // pred_check_branch
      %15 = sbr.rel (0) target = $region5
    $region4: #{unreal_forward.8} parent=1 // pred_region
      _
    $region5: #{unreal_forward.8} parent=1 // pred_fallthru
      _
    // Predicated region
    $region6: #{unreal_forward.8} parent=1 // pred_check
      _
    $region7: #{unreal_forward.8} parent=1 // pred_check_branch
      %17 = sbr.rel (0) target = $region9
    $region8: #{unreal_forward.8} parent=1 // pred_region
      _
    $region9: #{unreal_forward.8} parent=1 // pred_fallthru
      _
    // Predicated region
    $region10: #{unreal_forward.8} parent=1 // pred_check
      _
    $region11: #{unreal_forward.8} parent=1 // pred_check_branch
      %19 = sbr.rel (0) target = $region13
    $region12: #{unreal_forward.8} parent=1 // pred_region
      _
    $region13: #{unreal_forward.8} parent=1 // pred_fallthru
      _
    // Predicated region
    $region14: #{unreal_forward.8} parent=1 // pred_check
      _
    $region15: #{unreal_forward.8} parent=1 // pred_check_branch
      %21 = sbr.rel (0) target = $region17
    $region16: #{unreal_forward.8} parent=1 // pred_region
      _
    $region17: #{unreal_forward.8} parent=1 // pred_fallthru
      _
    %v22 = vld [vmem:[%s1] sm:$0x3]
    %v23 = vlaneseq
    %vm24 = vcmp.ge.s32.totalorder %v23, 0
    %vm25 = vcmp.lt.s32.totalorder %v23, 256
    %vm26 = vmand %vm24, %vm25
    %27 = vst.msk [vmem:[#allocation2] sm:$0x3] %vm26, %v22
    %v28 = vld [vmem:[%s2] sm:$0x3]
    %29 = vst.msk [vmem:[#allocation3] sm:$0x3] %vm26, %v28
    loop: start=0, step=1, limit=2
    $region18: #{unreal_forward.8} parent=1 // loop_pre_header
      _
    $region19: #{unreal_forward.8} parent=1 // loop_header
      %s31 = sphi 0, %s35
      %p32 = scmp.ge.s32.totalorder %s31, 2
    $region20: #{unreal_forward.8} parent=1 // loop_header_branch
      %34 = sbr.rel (%p32) target = $region24
    $region21: #{unreal_forward.8} parent=1 // loop_body
      %s36 = sshra.s32 %s31, 1
      %s37 = sand.u32 %s31, 1
      %s38 = sshra.s32 %s31, 1
      %s39 = sand.u32 %s31, 1
      %s40 = smul.u32 %s36, 8
      %s41 = smul.u32 %s40, 2
      %s42 = sadd.s32 %s41, %s39
      %s43 = scalar_lea.vmem %s0, %s42
      %v44 = vld [vmem:[%s43] ss:$2 sm:$0xff]
      %v45 = vld [vmem:[#allocation2] sm:$0x3]
      %v46 = vld [vmem:[%s3] sm:$0xff]
      %v47 = vld [vmem:[%s3 + $0x8] sm:$0xff]
      %v48 = vld [vmem:[%s3 + $0x10] sm:$0xff]
      %v49 = vld [vmem:[%s3 + $0x18] sm:$0xff]
      %v50 = vld [vmem:[%s3 + $0x20] sm:$0xff]
      %v51 = vld [vmem:[%s3 + $0x28] sm:$0xff]
      %v52 = vld [vmem:[%s3 + $0x30] sm:$0xff]
      %v53 = vld [vmem:[%s3 + $0x38] sm:$0xff]
      %v54 = vld [vmem:[%s3 + $0x40] sm:$0xff]
      %v55 = vld [vmem:[%s3 + $0x48] sm:$0xff]
      %v56 = vld [vmem:[%s3 + $0x50] sm:$0xff]
      %v57 = vld [vmem:[%s3 + $0x58] sm:$0xff]
      %v58 = vld [vmem:[%s3 + $0x60] sm:$0xff]
      %v59 = vld [vmem:[%s3 + $0x68] sm:$0xff]
      %v60 = vld [vmem:[%s3 + $0x70] sm:$0xff]
      %v61 = vld [vmem:[%s3 + $0x78] sm:$0xff]
      %v62 = vld [vmem:[%s3 + $0x80] sm:$0xff]
      %v63 = vld [vmem:[%s3 + $0x88] sm:$0xff]
      %v64 = vld [vmem:[%s3 + $0x90] sm:$0xff]
      %v65 = vld [vmem:[%s3 + $0x98] sm:$0xff]
      %v66 = vld [vmem:[%s3 + $0xa0] sm:$0xff]
      %v67 = vld [vmem:[%s3 + $0xa8] sm:$0xff]
      %v68 = vld [vmem:[%s3 + $0xb0] sm:$0xff]
      %v69 = vld [vmem:[%s3 + $0xb8] sm:$0xff]
      %v70 = vld [vmem:[%s3 + $0xc0] sm:$0xff]
      %v71 = vld [vmem:[%s3 + $0xc8] sm:$0xff]
      %v72 = vld [vmem:[%s3 + $0xd0] sm:$0xff]
      %v73 = vld [vmem:[%s3 + $0xd8] sm:$0xff]
      %v74 = vld [vmem:[%s3 + $0xe0] sm:$0xff]
      %v75 = vld [vmem:[%s3 + $0xe8] sm:$0xff]
      %v76 = vld [vmem:[%s3 + $0xf0] sm:$0xff]
      %v77 = vld [vmem:[%s3 + $0xf8] sm:$0xff]
      %v78 = vld [vmem:[%s3 + $0x100] sm:$0xff]
      %v79 = vld [vmem:[%s3 + $0x108] sm:$0xff]
      %v80 = vld [vmem:[%s3 + $0x110] sm:$0xff]
      %v81 = vld [vmem:[%s3 + $0x118] sm:$0xff]
      %v82 = vld [vmem:[%s3 + $0x120] sm:$0xff]
      %v83 = vld [vmem:[%s3 + $0x128] sm:$0xff]
      %v84 = vld [vmem:[%s3 + $0x130] sm:$0xff]
      %v85 = vld [vmem:[%s3 + $0x138] sm:$0xff]
      %v86 = vld [vmem:[%s3 + $0x140] sm:$0xff]
      %v87 = vld [vmem:[%s3 + $0x148] sm:$0xff]
      %v88 = vld [vmem:[%s3 + $0x150] sm:$0xff]
      %v89 = vld [vmem:[%s3 + $0x158] sm:$0xff]
      %v90 = vld [vmem:[%s3 + $0x160] sm:$0xff]
      %v91 = vld [vmem:[%s3 + $0x168] sm:$0xff]
      %v92 = vld [vmem:[%s3 + $0x170] sm:$0xff]
      %v93 = vld [vmem:[%s3 + $0x178] sm:$0xff]
      %v94 = vld [vmem:[%s3 + $0x180] sm:$0xff]
      %v95 = vld [vmem:[%s3 + $0x188] sm:$0xff]
      %v96 = vld [vmem:[%s3 + $0x190] sm:$0xff]
      %v97 = vld [vmem:[%s3 + $0x198] sm:$0xff]
      %v98 = vld [vmem:[%s3 + $0x1a0] sm:$0xff]
      %v99 = vld [vmem:[%s3 + $0x1a8] sm:$0xff]
      %v100 = vld [vmem:[%s3 + $0x1b0] sm:$0xff]
      %v101 = vld [vmem:[%s3 + $0x1b8] sm:$0xff]
      %v102 = vld [vmem:[%s3 + $0x1c0] sm:$0xff]
      %v103 = vld [vmem:[%s3 + $0x1c8] sm:$0xff]
      %v104 = vld [vmem:[%s3 + $0x1d0] sm:$0xff]
      %v105 = vld [vmem:[%s3 + $0x1d8] sm:$0xff]
      %v106 = vld [vmem:[%s3 + $0x1e0] sm:$0xff]
      %v107 = vld [vmem:[%s3 + $0x1e8] sm:$0xff]
      %v108 = vld [vmem:[%s3 + $0x1f0] sm:$0xff]
      %v109 = vld [vmem:[%s3 + $0x1f8] sm:$0xff]
      %v110 = vld [vmem:[%s3 + $0x200] sm:$0xff]
      %v111 = vld [vmem:[%s3 + $0x208] sm:$0xff]
      %v112 = vld [vmem:[%s3 + $0x210] sm:$0xff]
      %v113 = vld [vmem:[%s3 + $0x218] sm:$0xff]
      %v114 = vld [vmem:[%s3 + $0x220] sm:$0xff]
      %v115 = vld [vmem:[%s3 + $0x228] sm:$0xff]
      %v116 = vld [vmem:[%s3 + $0x230] sm:$0xff]
      %v117 = vld [vmem:[%s3 + $0x238] sm:$0xff]
      %v118 = vld [vmem:[%s3 + $0x240] sm:$0xff]
      %v119 = vld [vmem:[%s3 + $0x248] sm:$0xff]
      %v120 = vld [vmem:[%s3 + $0x250] sm:$0xff]
      %v121 = vld [vmem:[%s3 + $0x258] sm:$0xff]
      %v122 = vld [vmem:[%s3 + $0x260] sm:$0xff]
      %v123 = vld [vmem:[%s3 + $0x268] sm:$0xff]
      %v124 = vld [vmem:[%s3 + $0x270] sm:$0xff]
      %v125 = vld [vmem:[%s3 + $0x278] sm:$0xff]
      %v126 = vld [vmem:[%s3 + $0x280] sm:$0xff]
      %v127 = vld [vmem:[%s3 + $0x288] sm:$0xff]
      %v128 = vld [vmem:[%s3 + $0x290] sm:$0xff]
      %v129 = vld [vmem:[%s3 + $0x298] sm:$0xff]
      %v130 = vld [vmem:[%s3 + $0x2a0] sm:$0xff]
      %v131 = vld [vmem:[%s3 + $0x2a8] sm:$0xff]
      %v132 = vld [vmem:[%s3 + $0x2b0] sm:$0xff]
      %v133 = vld [vmem:[%s3 + $0x2b8] sm:$0xff]
      %v134 = vld [vmem:[%s3 + $0x2c0] sm:$0xff]
      %v135 = vld [vmem:[%s3 + $0x2c8] sm:$0xff]
      %v136 = vld [vmem:[%s3 + $0x2d0] sm:$0xff]
      %v137 = vld [vmem:[%s3 + $0x2d8] sm:$0xff]
      %v138 = vld [vmem:[%s3 + $0x2e0] sm:$0xff]
      %v139 = vld [vmem:[%s3 + $0x2e8] sm:$0xff]
      %v140 = vld [vmem:[%s3 + $0x2f0] sm:$0xff]
      %v141 = vld [vmem:[%s3 + $0x2f8] sm:$0xff]
      %v142 = vld [vmem:[%s3 + $0x300] sm:$0xff]
      %v143 = vld [vmem:[%s3 + $0x308] sm:$0xff]
      %v144 = vld [vmem:[%s3 + $0x310] sm:$0xff]
      %v145 = vld [vmem:[%s3 + $0x318] sm:$0xff]
      %v146 = vld [vmem:[%s3 + $0x320] sm:$0xff]
      %v147 = vld [vmem:[%s3 + $0x328] sm:$0xff]
      %v148 = vld [vmem:[%s3 + $0x330] sm:$0xff]
      %v149 = vld [vmem:[%s3 + $0x338] sm:$0xff]
      %v150 = vld [vmem:[%s3 + $0x340] sm:$0xff]
      %v151 = vld [vmem:[%s3 + $0x348] sm:$0xff]
      %v152 = vld [vmem:[%s3 + $0x350] sm:$0xff]
      %v153 = vld [vmem:[%s3 + $0x358] sm:$0xff]
      %v154 = vld [vmem:[%s3 + $0x360] sm:$0xff]
      %v155 = vld [vmem:[%s3 + $0x368] sm:$0xff]
      %v156 = vld [vmem:[%s3 + $0x370] sm:$0xff]
      %v157 = vld [vmem:[%s3 + $0x378] sm:$0xff]
      %v158 = vld [vmem:[%s3 + $0x380] sm:$0xff]
      %v159 = vld [vmem:[%s3 + $0x388] sm:$0xff]
      %v160 = vld [vmem:[%s3 + $0x390] sm:$0xff]
      %v161 = vld [vmem:[%s3 + $0x398] sm:$0xff]
      %v162 = vld [vmem:[%s3 + $0x3a0] sm:$0xff]
      %v163 = vld [vmem:[%s3 + $0x3a8] sm:$0xff]
      %v164 = vld [vmem:[%s3 + $0x3b0] sm:$0xff]
      %v165 = vld [vmem:[%s3 + $0x3b8] sm:$0xff]
      %v166 = vld [vmem:[%s3 + $0x3c0] sm:$0xff]
      %v167 = vld [vmem:[%s3 + $0x3c8] sm:$0xff]
      %v168 = vld [vmem:[%s3 + $0x3d0] sm:$0xff]
      %v169 = vld [vmem:[%s3 + $0x3d8] sm:$0xff]
      %v170 = vld [vmem:[%s3 + $0x3e0] sm:$0xff]
      %v171 = vld [vmem:[%s3 + $0x3e8] sm:$0xff]
      %v172 = vld [vmem:[%s3 + $0x3f0] sm:$0xff]
      %v173 = vld [vmem:[%s3 + $0x3f8] sm:$0xff]
      %v174 = vld [vmem:[%s3 + $0x400] sm:$0xff]
      %v175 = vld [vmem:[%s3 + $0x408] sm:$0xff]
      %v176 = vld [vmem:[%s3 + $0x410] sm:$0xff]
      %v177 = vld [vmem:[%s3 + $0x418] sm:$0xff]
      %v178 = vld [vmem:[%s3 + $0x420] sm:$0xff]
      %v179 = vld [vmem:[%s3 + $0x428] sm:$0xff]
      %v180 = vld [vmem:[%s3 + $0x430] sm:$0xff]
      %v181 = vld [vmem:[%s3 + $0x438] sm:$0xff]
      %v182 = vld [vmem:[%s3 + $0x440] sm:$0xff]
      %v183 = vld [vmem:[%s3 + $0x448] sm:$0xff]
      %v184 = vld [vmem:[%s3 + $0x450] sm:$0xff]
      %v185 = vld [vmem:[%s3 + $0x458] sm:$0xff]
      %v186 = vld [vmem:[%s3 + $0x460] sm:$0xff]
      %v187 = vld [vmem:[%s3 + $0x468] sm:$0xff]
      %v188 = vld [vmem:[%s3 + $0x470] sm:$0xff]
      %v189 = vld [vmem:[%s3 + $0x478] sm:$0xff]
      %v190 = vld [vmem:[%s3 + $0x480] sm:$0xff]
      %v191 = vld [vmem:[%s3 + $0x488] sm:$0xff]
      %v192 = vld [vmem:[%s3 + $0x490] sm:$0xff]
      %v193 = vld [vmem:[%s3 + $0x498] sm:$0xff]
      %v194 = vld [vmem:[%s3 + $0x4a0] sm:$0xff]
      %v195 = vld [vmem:[%s3 + $0x4a8] sm:$0xff]
      %v196 = vld [vmem:[%s3 + $0x4b0] sm:$0xff]
      %v197 = vld [vmem:[%s3 + $0x4b8] sm:$0xff]
      %v198 = vld [vmem:[%s3 + $0x4c0] sm:$0xff]
      %v199 = vld [vmem:[%s3 + $0x4c8] sm:$0xff]
      %v200 = vld [vmem:[%s3 + $0x4d0] sm:$0xff]
      %v201 = vld [vmem:[%s3 + $0x4d8] sm:$0xff]
      %v202 = vld [vmem:[%s3 + $0x4e0] sm:$0xff]
      %v203 = vld [vmem:[%s3 + $0x4e8] sm:$0xff]
      %v204 = vld [vmem:[%s3 + $0x4f0] sm:$0xff]
      %v205 = vld [vmem:[%s3 + $0x4f8] sm:$0xff]
      %v206 = vld [vmem:[%s3 + $0x500] sm:$0xff]
      %v207 = vld [vmem:[%s3 + $0x508] sm:$0xff]
      %v208 = vld [vmem:[%s3 + $0x510] sm:$0xff]
      %v209 = vld [vmem:[%s3 + $0x518] sm:$0xff]
      %v210 = vld [vmem:[%s3 + $0x520] sm:$0xff]
      %v211 = vld [vmem:[%s3 + $0x528] sm:$0xff]
      %v212 = vld [vmem:[%s3 + $0x530] sm:$0xff]
      %v213 = vld [vmem:[%s3 + $0x538] sm:$0xff]
      %v214 = vld [vmem:[%s3 + $0x540] sm:$0xff]
      %v215 = vld [vmem:[%s3 + $0x548] sm:$0xff]
      %v216 = vld [vmem:[%s3 + $0x550] sm:$0xff]
      %v217 = vld [vmem:[%s3 + $0x558] sm:$0xff]
      %v218 = vld [vmem:[%s3 + $0x560] sm:$0xff]
      %v219 = vld [vmem:[%s3 + $0x568] sm:$0xff]
      %v220 = vld [vmem:[%s3 + $0x570] sm:$0xff]
      %v221 = vld [vmem:[%s3 + $0x578] sm:$0xff]
      %v222 = vld [vmem:[%s3 + $0x580] sm:$0xff]
      %v223 = vld [vmem:[%s3 + $0x588] sm:$0xff]
      %v224 = vld [vmem:[%s3 + $0x590] sm:$0xff]
      %v225 = vld [vmem:[%s3 + $0x598] sm:$0xff]
      %v226 = vld [vmem:[%s3 + $0x5a0] sm:$0xff]
      %v227 = vld [vmem:[%s3 + $0x5a8] sm:$0xff]
      %v228 = vld [vmem:[%s3 + $0x5b0] sm:$0xff]
      %v229 = vld [vmem:[%s3 + $0x5b8] sm:$0xff]
      %v230 = vld [vmem:[%s3 + $0x5c0] sm:$0xff]
      %v231 = vld [vmem:[%s3 + $0x5c8] sm:$0xff]
      %v232 = vld [vmem:[%s3 + $0x5d0] sm:$0xff]
      %v233 = vld [vmem:[%s3 + $0x5d8] sm:$0xff]
      %v234 = vld [vmem:[%s3 + $0x5e0] sm:$0xff]
      %v235 = vld [vmem:[%s3 + $0x5e8] sm:$0xff]
      %v236 = vld [vmem:[%s3 + $0x5f0] sm:$0xff]
      %v237 = vld [vmem:[%s3 + $0x5f8] sm:$0xff]
      %v238 = vld [vmem:[%s3 + $0x600] sm:$0xff]
      %v239 = vld [vmem:[%s3 + $0x608] sm:$0xff]
      %v240 = vld [vmem:[%s3 + $0x610] sm:$0xff]
      %v241 = vld [vmem:[%s3 + $0x618] sm:$0xff]
      %v242 = vld [vmem:[%s3 + $0x620] sm:$0xff]
      %v243 = vld [vmem:[%s3 + $0x628] sm:$0xff]
      %v244 = vld [vmem:[%s3 + $0x630] sm:$0xff]
      %v245 = vld [vmem:[%s3 + $0x638] sm:$0xff]
      %v246 = vld [vmem:[%s3 + $0x640] sm:$0xff]
      %v247 = vld [vmem:[%s3 + $0x648] sm:$0xff]
      %v248 = vld [vmem:[%s3 + $0x650] sm:$0xff]
      %v249 = vld [vmem:[%s3 + $0x658] sm:$0xff]
      %v250 = vld [vmem:[%s3 + $0x660] sm:$0xff]
      %v251 = vld [vmem:[%s3 + $0x668] sm:$0xff]
      %v252 = vld [vmem:[%s3 + $0x670] sm:$0xff]
      %v253 = vld [vmem:[%s3 + $0x678] sm:$0xff]
      %v254 = vld [vmem:[%s3 + $0x680] sm:$0xff]
      %v255 = vld [vmem:[%s3 + $0x688] sm:$0xff]
      %v256 = vld [vmem:[%s3 + $0x690] sm:$0xff]
      %v257 = vld [vmem:[%s3 + $0x698] sm:$0xff]
      %v258 = vld [vmem:[%s3 + $0x6a0] sm:$0xff]
      %v259 = vld [vmem:[%s3 + $0x6a8] sm:$0xff]
      %v260 = vld [vmem:[%s3 + $0x6b0] sm:$0xff]
      %v261 = vld [vmem:[%s3 + $0x6b8] sm:$0xff]
      %v262 = vld [vmem:[%s3 + $0x6c0] sm:$0xff]
      %v263 = vld [vmem:[%s3 + $0x6c8] sm:$0xff]
      %v264 = vld [vmem:[%s3 + $0x6d0] sm:$0xff]
      %v265 = vld [vmem:[%s3 + $0x6d8] sm:$0xff]
      %v266 = vld [vmem:[%s3 + $0x6e0] sm:$0xff]
      %v267 = vld [vmem:[%s3 + $0x6e8] sm:$0xff]
      %v268 = vld [vmem:[%s3 + $0x6f0] sm:$0xff]
      %v269 = vld [vmem:[%s3 + $0x6f8] sm:$0xff]
      %v270 = vld [vmem:[%s3 + $0x700] sm:$0xff]
      %v271 = vld [vmem:[%s3 + $0x708] sm:$0xff]
      %v272 = vld [vmem:[%s3 + $0x710] sm:$0xff]
      %v273 = vld [vmem:[%s3 + $0x718] sm:$0xff]
      %v274 = vld [vmem:[%s3 + $0x720] sm:$0xff]
      %v275 = vld [vmem:[%s3 + $0x728] sm:$0xff]
      %v276 = vld [vmem:[%s3 + $0x730] sm:$0xff]
      %v277 = vld [vmem:[%s3 + $0x738] sm:$0xff]
      %v278 = vld [vmem:[%s3 + $0x740] sm:$0xff]
      %v279 = vld [vmem:[%s3 + $0x748] sm:$0xff]
      %v280 = vld [vmem:[%s3 + $0x750] sm:$0xff]
      %v281 = vld [vmem:[%s3 + $0x758] sm:$0xff]
      %v282 = vld [vmem:[%s3 + $0x760] sm:$0xff]
      %v283 = vld [vmem:[%s3 + $0x768] sm:$0xff]
      %v284 = vld [vmem:[%s3 + $0x770] sm:$0xff]
      %v285 = vld [vmem:[%s3 + $0x778] sm:$0xff]
      %v286 = vld [vmem:[%s3 + $0x780] sm:$0xff]
      %v287 = vld [vmem:[%s3 + $0x788] sm:$0xff]
      %v288 = vld [vmem:[%s3 + $0x790] sm:$0xff]
      %v289 = vld [vmem:[%s3 + $0x798] sm:$0xff]
      %v290 = vld [vmem:[%s3 + $0x7a0] sm:$0xff]
      %v291 = vld [vmem:[%s3 + $0x7a8] sm:$0xff]
      %v292 = vld [vmem:[%s3 + $0x7b0] sm:$0xff]
      %v293 = vld [vmem:[%s3 + $0x7b8] sm:$0xff]
      %v294 = vld [vmem:[%s3 + $0x7c0] sm:$0xff]
      %v295 = vld [vmem:[%s3 + $0x7c8] sm:$0xff]
      %v296 = vld [vmem:[%s3 + $0x7d0] sm:$0xff]
      %v297 = vld [vmem:[%s3 + $0x7d8] sm:$0xff]
      %v298 = vld [vmem:[%s3 + $0x7e0] sm:$0xff]
      %v299 = vld [vmem:[%s3 + $0x7e8] sm:$0xff]
      %v300 = vld [vmem:[%s3 + $0x7f0] sm:$0xff]
      %v301 = vld [vmem:[%s3 + $0x7f8] sm:$0xff]
      %v303 = vlaneseq
      %v304 = vshrl.u32 %v303, 7
      %v305 = vsub.s32 0, %v304
      %v306 = vrot.slane %v45, %v305
      %v307 = vlaneseq
      %v308 = vshrl.u32 %v307, 7
      %v309 = vsub.s32 1, %v308
      %v310 = vrot.slane %v45, %v309
      %313 = vmatprep.subr.mxu0 %v47
      %314 = vmatpush1.msra.mxu0 %v46
      %315 = vmatprep.subr.mxu0 %v55
      %316 = vmatpush1.msra.mxu0 %v54
      %317 = vmatprep.subr.mxu0 %v63
      %318 = vmatpush1.msra.mxu0 %v62
      %319 = vmatprep.subr.mxu0 %v71
      %320 = vmatpush1.msra.mxu0 %v70
      %321 = vmatprep.subr.mxu0 %v79
      %322 = vmatpush1.msra.mxu0 %v78
      %323 = vmatprep.subr.mxu0 %v87
      %324 = vmatpush1.msra.mxu0 %v86
      %325 = vmatprep.subr.mxu0 %v95
      %326 = vmatpush1.msra.mxu0 %v94
      %327 = vmatprep.subr.mxu0 %v103
      %328 = vmatpush1.msra.mxu0 %v102
      %329 = vmatprep.subr.mxu0 %v111
      %330 = vmatpush1.msra.mxu0 %v110
      %331 = vmatprep.subr.mxu0 %v119
      %332 = vmatpush1.msra.mxu0 %v118
      %333 = vmatprep.subr.mxu0 %v127
      %334 = vmatpush1.msra.mxu0 %v126
      %335 = vmatprep.subr.mxu0 %v135
      %336 = vmatpush1.msra.mxu0 %v134
      %337 = vmatprep.subr.mxu0 %v143
      %338 = vmatpush1.msra.mxu0 %v142
      %339 = vmatprep.subr.mxu0 %v151
      %340 = vmatpush1.msra.mxu0 %v150
      %341 = vmatprep.subr.mxu0 %v159
      %342 = vmatpush1.msra.mxu0 %v158
      %343 = vmatprep.subr.mxu0 %v167
      %344 = vmatpush1.msra.mxu0 %v166
      %345 = vmatprep.subr.mxu0 %v175
      %346 = vmatpush1.msra.mxu0 %v174
      %347 = vmatprep.subr.mxu0 %v183
      %348 = vmatpush1.msra.mxu0 %v182
      %349 = vmatprep.subr.mxu0 %v191
      %350 = vmatpush1.msra.mxu0 %v190
      %351 = vmatprep.subr.mxu0 %v199
      %352 = vmatpush1.msra.mxu0 %v198
      %353 = vmatprep.subr.mxu0 %v207
      %354 = vmatpush1.msra.mxu0 %v206
      %355 = vmatprep.subr.mxu0 %v215
      %356 = vmatpush1.msra.mxu0 %v214
      %357 = vmatprep.subr.mxu0 %v223
      %358 = vmatpush1.msra.mxu0 %v222
      %359 = vmatprep.subr.mxu0 %v231
      %360 = vmatpush1.msra.mxu0 %v230
      %361 = vmatprep.subr.mxu0 %v239
      %362 = vmatpush1.msra.mxu0 %v238
      %363 = vmatprep.subr.mxu0 %v247
      %364 = vmatpush1.msra.mxu0 %v246
      %365 = vmatprep.subr.mxu0 %v255
      %366 = vmatpush1.msra.mxu0 %v254
      %367 = vmatprep.subr.mxu0 %v263
      %368 = vmatpush1.msra.mxu0 %v262
      %369 = vmatprep.subr.mxu0 %v271
      %370 = vmatpush1.msra.mxu0 %v270
      %371 = vmatprep.subr.mxu0 %v279
      %372 = vmatpush1.msra.mxu0 %v278
      %373 = vmatprep.subr.mxu0 %v287
      %374 = vmatpush1.msra.mxu0 %v286
      %375 = vmatprep.subr.mxu0 %v295
      %376 = vmatpush1.msra.mxu0 %v294
      %377 = vmatprep.mubr.f32.mxu0 %v310
      %378 = vmatmul.mubr.f32.gmra.mrb[0].mxu0 %v306
      %v379 = vpop.f32.mrb[0].mxu0
      %v380 = vadd.f32 0.0, %v379
      %v381 = vpop.f32.mrb[0].mxu0
      %v382 = vadd.f32 0.0, %v381
      %383 = vdwg.mxu0
      %384 = vmatprep.subr.mxu0 %v49
      %385 = vmatpush1.msra.mxu0 %v48
      %386 = vmatprep.subr.mxu0 %v57
      %387 = vmatpush1.msra.mxu0 %v56
      %388 = vmatprep.subr.mxu0 %v65
      %389 = vmatpush1.msra.mxu0 %v64
      %390 = vmatprep.subr.mxu0 %v73
      %391 = vmatpush1.msra.mxu0 %v72
      %392 = vmatprep.subr.mxu0 %v81
      %393 = vmatpush1.msra.mxu0 %v80
      %394 = vmatprep.subr.mxu0 %v89
      %395 = vmatpush1.msra.mxu0 %v88
      %396 = vmatprep.subr.mxu0 %v97
      %397 = vmatpush1.msra.mxu0 %v96
      %398 = vmatprep.subr.mxu0 %v105
      %399 = vmatpush1.msra.mxu0 %v104
      %400 = vmatprep.subr.mxu0 %v113
      %401 = vmatpush1.msra.mxu0 %v112
      %402 = vmatprep.subr.mxu0 %v121
      %403 = vmatpush1.msra.mxu0 %v120
      %404 = vmatprep.subr.mxu0 %v129
      %405 = vmatpush1.msra.mxu0 %v128
      %406 = vmatprep.subr.mxu0 %v137
      %407 = vmatpush1.msra.mxu0 %v136
      %408 = vmatprep.subr.mxu0 %v145
      %409 = vmatpush1.msra.mxu0 %v144
      %410 = vmatprep.subr.mxu0 %v153
      %411 = vmatpush1.msra.mxu0 %v152
      %412 = vmatprep.subr.mxu0 %v161
      %413 = vmatpush1.msra.mxu0 %v160
      %414 = vmatprep.subr.mxu0 %v169
      %415 = vmatpush1.msra.mxu0 %v168
      %416 = vmatprep.subr.mxu0 %v177
      %417 = vmatpush1.msra.mxu0 %v176
      %418 = vmatprep.subr.mxu0 %v185
      %419 = vmatpush1.msra.mxu0 %v184
      %420 = vmatprep.subr.mxu0 %v193
      %421 = vmatpush1.msra.mxu0 %v192
      %422 = vmatprep.subr.mxu0 %v201
      %423 = vmatpush1.msra.mxu0 %v200
      %424 = vmatprep.subr.mxu0 %v209
      %425 = vmatpush1.msra.mxu0 %v208
      %426 = vmatprep.subr.mxu0 %v217
      %427 = vmatpush1.msra.mxu0 %v216
      %428 = vmatprep.subr.mxu0 %v225
      %429 = vmatpush1.msra.mxu0 %v224
      %430 = vmatprep.subr.mxu0 %v233
      %431 = vmatpush1.msra.mxu0 %v232
      %432 = vmatprep.subr.mxu0 %v241
      %433 = vmatpush1.msra.mxu0 %v240
      %434 = vmatprep.subr.mxu0 %v249
      %435 = vmatpush1.msra.mxu0 %v248
      %436 = vmatprep.subr.mxu0 %v257
      %437 = vmatpush1.msra.mxu0 %v256
      %438 = vmatprep.subr.mxu0 %v265
      %439 = vmatpush1.msra.mxu0 %v264
      %440 = vmatprep.subr.mxu0 %v273
      %441 = vmatpush1.msra.mxu0 %v272
      %442 = vmatprep.subr.mxu0 %v281
      %443 = vmatpush1.msra.mxu0 %v280
      %444 = vmatprep.subr.mxu0 %v289
      %445 = vmatpush1.msra.mxu0 %v288
      %446 = vmatprep.subr.mxu0 %v297
      %447 = vmatpush1.msra.mxu0 %v296
      %448 = vmatprep.mubr.f32.mxu0 %v310
      %449 = vmatmul.mubr.f32.gmra.mrb[0].mxu0 %v306
      %v450 = vpop.f32.mrb[0].mxu0
      %v451 = vadd.f32 0.0, %v450
      %v452 = vpop.f32.mrb[0].mxu0
      %v453 = vadd.f32 0.0, %v452
      %454 = vdwg.mxu0
      %455 = vmatprep.subr.mxu0 %v51
      %456 = vmatpush1.msra.mxu0 %v50
      %457 = vmatprep.subr.mxu0 %v59
      %458 = vmatpush1.msra.mxu0 %v58
      %459 = vmatprep.subr.mxu0 %v67
      %460 = vmatpush1.msra.mxu0 %v66
      %461 = vmatprep.subr.mxu0 %v75
      %462 = vmatpush1.msra.mxu0 %v74
      %463 = vmatprep.subr.mxu0 %v83
      %464 = vmatpush1.msra.mxu0 %v82
      %465 = vmatprep.subr.mxu0 %v91
      %466 = vmatpush1.msra.mxu0 %v90
      %467 = vmatprep.subr.mxu0 %v99
      %468 = vmatpush1.msra.mxu0 %v98
      %469 = vmatprep.subr.mxu0 %v107
      %470 = vmatpush1.msra.mxu0 %v106
      %471 = vmatprep.subr.mxu0 %v115
      %472 = vmatpush1.msra.mxu0 %v114
      %473 = vmatprep.subr.mxu0 %v123
      %474 = vmatpush1.msra.mxu0 %v122
      %475 = vmatprep.subr.mxu0 %v131
      %476 = vmatpush1.msra.mxu0 %v130
      %477 = vmatprep.subr.mxu0 %v139
      %478 = vmatpush1.msra.mxu0 %v138
      %479 = vmatprep.subr.mxu0 %v147
      %480 = vmatpush1.msra.mxu0 %v146
      %481 = vmatprep.subr.mxu0 %v155
      %482 = vmatpush1.msra.mxu0 %v154
      %483 = vmatprep.subr.mxu0 %v163
      %484 = vmatpush1.msra.mxu0 %v162
      %485 = vmatprep.subr.mxu0 %v171
      %486 = vmatpush1.msra.mxu0 %v170
      %487 = vmatprep.subr.mxu0 %v179
      %488 = vmatpush1.msra.mxu0 %v178
      %489 = vmatprep.subr.mxu0 %v187
      %490 = vmatpush1.msra.mxu0 %v186
      %491 = vmatprep.subr.mxu0 %v195
      %492 = vmatpush1.msra.mxu0 %v194
      %493 = vmatprep.subr.mxu0 %v203
      %494 = vmatpush1.msra.mxu0 %v202
      %495 = vmatprep.subr.mxu0 %v211
      %496 = vmatpush1.msra.mxu0 %v210
      %497 = vmatprep.subr.mxu0 %v219
      %498 = vmatpush1.msra.mxu0 %v218
      %499 = vmatprep.subr.mxu0 %v227
      %500 = vmatpush1.msra.mxu0 %v226
      %501 = vmatprep.subr.mxu0 %v235
      %502 = vmatpush1.msra.mxu0 %v234
      %503 = vmatprep.subr.mxu0 %v243
      %504 = vmatpush1.msra.mxu0 %v242
      %505 = vmatprep.subr.mxu0 %v251
      %506 = vmatpush1.msra.mxu0 %v250
      %507 = vmatprep.subr.mxu0 %v259
      %508 = vmatpush1.msra.mxu0 %v258
      %509 = vmatprep.subr.mxu0 %v267
      %510 = vmatpush1.msra.mxu0 %v266
      %511 = vmatprep.subr.mxu0 %v275
      %512 = vmatpush1.msra.mxu0 %v274
      %513 = vmatprep.subr.mxu0 %v283
      %514 = vmatpush1.msra.mxu0 %v282
      %515 = vmatprep.subr.mxu0 %v291
      %516 = vmatpush1.msra.mxu0 %v290
      %517 = vmatprep.subr.mxu0 %v299
      %518 = vmatpush1.msra.mxu0 %v298
      %519 = vmatprep.mubr.f32.mxu0 %v310
      %520 = vmatmul.mubr.f32.gmra.mrb[0].mxu0 %v306
      %v521 = vpop.f32.mrb[0].mxu0
      %v522 = vadd.f32 0.0, %v521
      %v523 = vpop.f32.mrb[0].mxu0
      %v524 = vadd.f32 0.0, %v523
      %525 = vdwg.mxu0
      %526 = vmatprep.subr.mxu0 %v53
      %527 = vmatpush1.msra.mxu0 %v52
      %528 = vmatprep.subr.mxu0 %v61
      %529 = vmatpush1.msra.mxu0 %v60
      %530 = vmatprep.subr.mxu0 %v69
      %531 = vmatpush1.msra.mxu0 %v68
      %532 = vmatprep.subr.mxu0 %v77
      %533 = vmatpush1.msra.mxu0 %v76
      %534 = vmatprep.subr.mxu0 %v85
      %535 = vmatpush1.msra.mxu0 %v84
      %536 = vmatprep.subr.mxu0 %v93
      %537 = vmatpush1.msra.mxu0 %v92
      %538 = vmatprep.subr.mxu0 %v101
      %539 = vmatpush1.msra.mxu0 %v100
      %540 = vmatprep.subr.mxu0 %v109
      %541 = vmatpush1.msra.mxu0 %v108
      %542 = vmatprep.subr.mxu0 %v117
      %543 = vmatpush1.msra.mxu0 %v116
      %544 = vmatprep.subr.mxu0 %v125
      %545 = vmatpush1.msra.mxu0 %v124
      %546 = vmatprep.subr.mxu0 %v133
      %547 = vmatpush1.msra.mxu0 %v132
      %548 = vmatprep.subr.mxu0 %v141
      %549 = vmatpush1.msra.mxu0 %v140
      %550 = vmatprep.subr.mxu0 %v149
      %551 = vmatpush1.msra.mxu0 %v148
      %552 = vmatprep.subr.mxu0 %v157
      %553 = vmatpush1.msra.mxu0 %v156
      %554 = vmatprep.subr.mxu0 %v165
      %555 = vmatpush1.msra.mxu0 %v164
      %556 = vmatprep.subr.mxu0 %v173
      %557 = vmatpush1.msra.mxu0 %v172
      %558 = vmatprep.subr.mxu0 %v181
      %559 = vmatpush1.msra.mxu0 %v180
      %560 = vmatprep.subr.mxu0 %v189
      %561 = vmatpush1.msra.mxu0 %v188
      %562 = vmatprep.subr.mxu0 %v197
      %563 = vmatpush1.msra.mxu0 %v196
      %564 = vmatprep.subr.mxu0 %v205
      %565 = vmatpush1.msra.mxu0 %v204
      %566 = vmatprep.subr.mxu0 %v213
      %567 = vmatpush1.msra.mxu0 %v212
      %568 = vmatprep.subr.mxu0 %v221
      %569 = vmatpush1.msra.mxu0 %v220
      %570 = vmatprep.subr.mxu0 %v229
      %571 = vmatpush1.msra.mxu0 %v228
      %572 = vmatprep.subr.mxu0 %v237
      %573 = vmatpush1.msra.mxu0 %v236
      %574 = vmatprep.subr.mxu0 %v245
      %575 = vmatpush1.msra.mxu0 %v244
      %576 = vmatprep.subr.mxu0 %v253
      %577 = vmatpush1.msra.mxu0 %v252
      %578 = vmatprep.subr.mxu0 %v261
      %579 = vmatpush1.msra.mxu0 %v260
      %580 = vmatprep.subr.mxu0 %v269
      %581 = vmatpush1.msra.mxu0 %v268
      %582 = vmatprep.subr.mxu0 %v277
      %583 = vmatpush1.msra.mxu0 %v276
      %584 = vmatprep.subr.mxu0 %v285
      %585 = vmatpush1.msra.mxu0 %v284
      %586 = vmatprep.subr.mxu0 %v293
      %587 = vmatpush1.msra.mxu0 %v292
      %588 = vmatprep.subr.mxu0 %v301
      %589 = vmatpush1.msra.mxu0 %v300
      %590 = vmatprep.mubr.f32.mxu0 %v310
      %591 = vmatmul.mubr.f32.gmra.mrb[0].mxu0 %v306
      %v592 = vpop.f32.mrb[0].mxu0
      %v593 = vadd.f32 0.0, %v592
      %v594 = vpop.f32.mrb[0].mxu0
      %v595 = vadd.f32 0.0, %v594
      %596 = vdwg.mxu0
      %v605 = vcombine.low %v380, %v382
      %v606 = vcombine.low %v451, %v453
      %v607 = vcombine.low %v522, %v524
      %v608 = vcombine.low %v593, %v595
      %v610 = vunpack.c.l.s4 1966171168
      %v611 = vunpack.c.0.s8 %v610
      %v612 = vlaneseq
      %v613 = vshrl.u32 %v612, 7
      %v614 = vsub.s32 %v611, %v613
      %v615 = vrot.slane %v605, %v614
      %v617 = vunpack.c.l.s4 1966171168
      %v618 = vunpack.c.0.s8 %v617
      %v619 = vlaneseq
      %v620 = vshrl.u32 %v619, 7
      %v621 = vsub.s32 %v618, %v620
      %v622 = vrot.slane %v606, %v621
      %v624 = vunpack.c.l.s4 1966171168
      %v625 = vunpack.c.0.s8 %v624
      %v626 = vlaneseq
      %v627 = vshrl.u32 %v626, 7
      %v628 = vsub.s32 %v625, %v627
      %v629 = vrot.slane %v607, %v628
      %v631 = vunpack.c.l.s4 1966171168
      %v632 = vunpack.c.0.s8 %v631
      %v633 = vlaneseq
      %v634 = vshrl.u32 %v633, 7
      %v635 = vsub.s32 %v632, %v634
      %v636 = vrot.slane %v608, %v635
      %v637 = vcombine.low %v615, %v622
      %v638 = vcombine.low %v629, %v636
      %v640 = vunpack.c.l.s4 1966171168
      %v641 = vunpack.c.0.s8 %v640
      %v642 = vlaneseq
      %v643 = vshrl.u32 %v642, 7
      %v644 = vsub.s32 %v641, %v643
      %v645 = vrot.slane %v637, %v644
      %v647 = vunpack.c.l.s4 1966171168
      %v648 = vunpack.c.0.s8 %v647
      %v649 = vlaneseq
      %v650 = vshrl.u32 %v649, 7
      %v651 = vsub.s32 %v648, %v650
      %v652 = vrot.slane %v638, %v651
      %v653 = vcombine.low %v645, %v652
      %v655 = vadd.f32 %v44, %v653
      %v656 = vxor.u32 %v655, 2147483648
      %v657 = vmul.f32 %v656, 1.442695
      %v658 = vpow.pop %v657
      %v659 = vadd.f32 %v658, 1.0
      %v660 = vrcp.pop %v659
      %v661 = vmul.f32 1.0, %v660
      %v663 = vrot.slane %v655, 2
      %v665 = vxor.u32 %v663, 2147483648
      %v666 = vmul.f32 %v665, 1.442695
      %v667 = vpow.pop %v666
      %v668 = vadd.f32 %v667, 1.0
      %v669 = vrcp.pop %v668
      %v670 = vmul.f32 1.0, %v669
      %v671 = vrot.slane %v655, 4
      %v673 = vtanh.pop %v671
      %v674 = vrot.slane %v655, 6
      %v676 = vxor.u32 %v674, 2147483648
      %v677 = vmul.f32 %v676, 1.442695
      %v678 = vpow.pop %v677
      %v679 = vadd.f32 %v678, 1.0
      %v680 = vrcp.pop %v679
      %v681 = vmul.f32 1.0, %v680
      %v682 = vld [vmem:[#allocation3] sm:$0x3]
      %v683 = vmul.f32 %v670, %v682
      %v684 = vmul.f32 %v661, %v673
      %v685 = vadd.f32 %v683, %v684
      %v686 = vtanh.pop %v685
      %v687 = vmul.f32 %v681, %v686
      %688 = vst.msk [vmem:[#allocation3] sm:$0x3] %vm26, %v685
      %689 = vst.msk [vmem:[#allocation2] sm:$0x3] %vm26, %v687
      %s690 = smul.u32 %s36, 2
      %s691 = smul.u32 %s690, 2
      %s692 = sadd.s32 %s691, %s39
      %s693 = scalar_lea.vmem %s4, %s692
      %694 = vst.msk [vmem:[%s693] ss:$2 sm:$0x3] %vm26, %v687
    $region22: #{unreal_forward.8} parent=1 // loop_footer
      %s35 = sadd.s32 1, %s31
    $region23: #{unreal_forward.8} parent=1 // loop_footer_branch
      %30 = sbr.rel target = $region19
    $region24: #{unreal_forward.8} parent=1 // loop_exit
      _
    %v695 = vld [vmem:[#allocation2] sm:$0x3]
    %696 = vst.msk [vmem:[#allocation4] sm:$0x3] %vm26, %v695
    %v697 = vld [vmem:[#allocation3] sm:$0x3]
    %698 = vst.msk [vmem:[#allocation6] sm:$0x3] %vm26, %v697
    // Predicated region
    $region25: #{unreal_forward.8} parent=1 // pred_check
      _
    $region26: #{unreal_forward.8} parent=1 // pred_check_branch
      %700 = sbr.rel (0) target = $region28
    $region27: #{unreal_forward.8} parent=1 // pred_region
      _
    $region28: #{unreal_forward.8} parent=1 // pred_fallthru
      _
    // Predicated region
    $region29: #{unreal_forward.8} parent=1 // pred_check
      _
    $region30: #{unreal_forward.8} parent=1 // pred_check_branch
      %702 = sbr.rel (0) target = $region32
    $region31: #{unreal_forward.8} parent=1 // pred_region
      %s704 = ssub.s32 32, 32
      %705 = vsyncadd [#allocation5], %s704
      %s707 = sshll.u32 [#allocation4], 4
      %s708 = int_to_ptr.vmem [resolvable:$true] %s707
      %710 = dma.vmem_to_hbm [thread:$0]  %s708, 32, %s5, [#allocation5]
    $region32: #{unreal_forward.8} parent=1 // pred_fallthru
      _
    // Predicated region
    $region33: #{unreal_forward.8} parent=1 // pred_check
      _
    $region34: #{unreal_forward.8} parent=1 // pred_check_branch
      %712 = sbr.rel (0) target = $region36
    $region35: #{unreal_forward.8} parent=1 // pred_region
      %s714 = ssub.s32 32, 32
      %715 = vsyncadd [#allocation7], %s714
      %s717 = sshll.u32 [#allocation6], 4
      %s718 = int_to_ptr.vmem [resolvable:$true] %s717
      %720 = dma.vmem_to_hbm [thread:$0]  %s718, 32, %s6, [#allocation7]
    $region36: #{unreal_forward.8} parent=1 // pred_fallthru
      _
    // Predicated region
    $region37: #{unreal_forward.8} parent=1 // pred_check
      _
    $region38: #{unreal_forward.8} parent=1 // pred_check_branch
      %722 = sbr.rel (0) target = $region40
    $region39: #{unreal_forward.8} parent=1 // pred_region
      _
    $region40: #{unreal_forward.8} parent=1 // pred_fallthru
      _
    // Predicated region
    $region41: #{unreal_forward.8} parent=1 // pred_check
      _
    $region42: #{unreal_forward.8} parent=1 // pred_check_branch
      %724 = sbr.rel (0) target = $region44
    $region43: #{unreal_forward.8} parent=1 // pred_region
      %725 = dma.done [#allocation5], 32
    $region44: #{unreal_forward.8} parent=1 // pred_fallthru
      _
    // Predicated region
    $region45: #{unreal_forward.8} parent=1 // pred_check
      _
    $region46: #{unreal_forward.8} parent=1 // pred_check_branch
      %727 = sbr.rel (0) target = $region48
    $region47: #{unreal_forward.8} parent=1 // pred_region
      %728 = dma.done [#allocation7], 32
    $region48: #{unreal_forward.8} parent=1 // pred_fallthru
      _
    %729 = vsyncpa [#allocation5], 1
    %730 = vsyncpa [#allocation7], 1

</llo_original>
